<compile_context>
chip_gen: v7x
topology: tpu7x:2x2x1
jax: 0.10.0
libtpu: 0.0.40
codegen_flags: <defaults>
</compile_context>

<pallas_src>
import functools
import math

import jax
import jax.numpy as jnp
from jax.experimental import pallas as pl
from jax.experimental.pallas import tpu as pltpu

# Set to False for bit-closer f32 MXU matmuls (bf16 is the v6e/v7x fast path).
MXU_BF16 = True

_LN_EPS = 1e-8  # matches torch.nn.LayerNorm(..., eps=1e-08) in the reference

# packed weight-matrix rows: wmat is (num_blocks, 8, D, D)
_WQ, _WK, _WQS, _WKS, _WV, _WO, _C1W, _C2W = range(8)
# packed vector rows: wvec is (num_blocks, 12, D)
(_BQ, _BK, _BQS, _BKS, _BV, _BO,
 _ALN_G, _ALN_B, _FLN_G, _FLN_B, _C1B, _C2B) = range(12)


def _mxu(x):
    return x.astype(jnp.bfloat16) if MXU_BF16 else x


def _layernorm(x, g, b, eps=_LN_EPS):
    mu = jnp.mean(x, axis=-1, keepdims=True)
    var = jnp.mean((x - mu) ** 2, axis=-1, keepdims=True)
    return (x - mu) * jax.lax.rsqrt(var + eps) * g + b


def _row(ref, i):
    return ref[i:i + 1, :]          # static (1, D) row slice of a packed ref


# ------------------- fused all-blocks + logits transformer kernel -------------------
# grid = (B // TB, num_blocks); seqs / seqs_side are VMEM scratches that stay
# resident across the (arbitrary) layer axis; only (B, L) logits go back to HBM.

def _sasrec_kernel(n_heads,
                   seqs0_ref, side0_ref, tl_ref, wmat_ref, wvec_ref,
                   pos_ref, neg_ref, lng_ref, lnb_ref,
                   pos_out, neg_out,
                   seqs_scr, side_scr):
    layer = pl.program_id(1)
    nlayers = pl.num_programs(1)

    @pl.when(layer == 0)
    def _():                         # load this batch tile into the resident scratches
        seqs_scr[...] = seqs0_ref[...]
        side_scr[...] = side0_ref[...]

    TB, L, D = seqs_scr.shape
    M = TB * L
    H = n_heads
    Dh = D // H
    inv_scale = 1.0 / math.sqrt(Dh)

    # hoist all weight / bias reads once per layer
    wq, wk = wmat_ref[_WQ], wmat_ref[_WK]
    wqs, wks = wmat_ref[_WQS], wmat_ref[_WKS]
    wv, wo = wmat_ref[_WV], wmat_ref[_WO]
    c1w, c2w = wmat_ref[_C1W], wmat_ref[_C2W]
    bq, bk = _row(wvec_ref, _BQ), _row(wvec_ref, _BK)
    bqs, bks = _row(wvec_ref, _BQS), _row(wvec_ref, _BKS)
    bv, bo = _row(wvec_ref, _BV), _row(wvec_ref, _BO)
    aln_g, aln_b = _row(wvec_ref, _ALN_G), _row(wvec_ref, _ALN_B)
    fln_g, fln_b = _row(wvec_ref, _FLN_G), _row(wvec_ref, _FLN_B)
    c1b, c2b = _row(wvec_ref, _C1B), _row(wvec_ref, _C2B)

    x = seqs_scr[...].reshape(M, D)          # (M, D) f32
    xs = side_scr[...].reshape(M, D)

    # attention_layernorms and attention_layernorms_side are the SAME module
    q_in = _layernorm(x, aln_g, aln_b)       # Q (pre-projection)
    qs_in = _layernorm(xs, aln_g, aln_b)     # Q_side

    # cast the four projection inputs to bf16 once (f32 accumulation on MXU)
    x_b, xs_b = _mxu(x), _mxu(xs)
    q_b, qs_b = _mxu(q_in), _mxu(qs_in)

    row = jax.lax.broadcasted_iota(jnp.int32, (L, L), 0)
    col = jax.lax.broadcasted_iota(jnp.int32, (L, L), 1)
    upper = (col > row)[None, :, :]          # == ~tril  (the `mask` argument)

    # Per-head projections via weight-COLUMN slices: activations are never
    # lane-sliced and every projection matmul keeps contraction K = D.
    ctx_heads = []
    for h in range(H):                       # static unroll over heads
        sl = slice(h * Dh, (h + 1) * Dh)

        def hproj(v, w, b):
            return jnp.dot(v, w[:, sl],
                           preferred_element_type=jnp.float32) + b[:, sl]

        # fold 1/sqrt(Dh) into Q / Q_side (after the bias, as in the reference)
        Qh = (hproj(q_b, wq, bq) * inv_scale).reshape(TB, L, Dh)
        Qsh = (hproj(qs_b, wqs, bqs) * inv_scale).reshape(TB, L, Dh)
        Kh = hproj(x_b, wk, bk).reshape(TB, L, Dh)
        Ksh = hproj(xs_b, wks, bks).reshape(TB, L, Dh)
        Vh = hproj(x_b, wv, bv).reshape(TB, L, Dh)

        e = jnp.einsum('bqd,bkd->bqk', _mxu(Qh), _mxu(Kh),
                       preferred_element_type=jnp.float32)
        es = jnp.einsum('bqd,bkd->bqk', _mxu(Qsh), _mxu(Ksh),
                        preferred_element_type=jnp.float32)
        # energy.masked_fill(mask, 0) + energy_side.masked_fill(mask == 0, 0)
        comb = jnp.where(upper, es, e)
        mmax = jnp.max(comb, axis=-1, keepdims=True)
        p = jnp.exp(comb - mmax)
        attn = p * pl.reciprocal(jnp.sum(p, axis=-1, keepdims=True), approx=True)
        ctx = jnp.einsum('bqk,bkd->bqd', _mxu(attn), _mxu(Vh),
                         preferred_element_type=jnp.float32)      # (TB, L, Dh)
        ctx_heads.append(ctx.reshape(M, Dh))

    # single full-D output projection over all heads (one K = D matmul)
    ctx_all = ctx_heads[0] if H == 1 else jnp.concatenate(ctx_heads, axis=-1)
    mha = jnp.dot(_mxu(ctx_all), wo, preferred_element_type=jnp.float32) + bo

    s_new = q_in + mha
    sd_new = qs_in + mha

    # forward_layernorms and forward_layernorms_side are the SAME module
    s_new = _layernorm(s_new, fln_g, fln_b)
    sd_new = _layernorm(sd_new, fln_g, fln_b)

    # PointWiseFeedForward (shared between seq and side); Conv1d(ks=1) == Linear
    def pwff(v):
        h1 = jnp.maximum(
            jnp.dot(_mxu(v), c1w, preferred_element_type=jnp.float32) + c1b, 0.0)
        return jnp.dot(_mxu(h1), c2w, preferred_element_type=jnp.float32) + c2b + v

    tl = tl_ref[...]                          # (TB, L, 1): plain lane broadcast
    seqs_new = pwff(s_new).reshape(TB, L, D) * tl
    side_new = pwff(sd_new).reshape(TB, L, D) * tl
    seqs_scr[...] = seqs_new
    side_scr[...] = side_new

    # fused last_layernorm + pos/neg logits on the final layer
    @pl.when(layer == nlayers - 1)
    def _():
        ln = _layernorm(seqs_new, lng_ref[...][None], lnb_ref[...][None])
        pos_out[...] = jnp.sum(ln * pos_ref[...], axis=-1)        # (TB, L)
        neg_out[...] = jnp.sum(ln * neg_ref[...], axis=-1)


# ----------------------------- tile / VMEM policy -----------------------------

# Budget against v7x's 64 MiB per TensorCore (the tightest generation).
_VMEM_BUDGET = 48 * 1024 * 1024


def _est_vmem_bytes(tb, L, D, H):
    act = tb * L * D * 4
    est = 2 * act                                          # resident seqs/side scratches
    est += 2 * 4 * act                                     # seqs0/side0/pos/neg (x2 buffers)
    est += 2 * tb * max(L, 8) * 128 * 4                    # (tb, L, 1) mask, lane padded
    est += 2 * (8 * D * D * 2 + 12 * D * 4 + 2 * D * 4)    # packed weights (x2 buffers)
    est += 2 * 2 * max(tb, 8) * 128 * 4                    # (tb, L) logits outputs, padded
    est += 14 * act                                        # f32/bf16 in-kernel temporaries
    est += 3 * H * tb * max(L, 8) * 128 * 4                # score / prob tensors
    return est


def _pick_tb(B, L, D, H):
    # (tb, L) logits block must be legal: tb == B or tb a multiple of 8
    cands = [t for t in range(1, B + 1) if B % t == 0 and (t == B or t % 8 == 0)]
    fit = [t for t in cands if _est_vmem_bytes(t, L, D, H) <= _VMEM_BUDGET]
    if not fit:
        fit = [min(cands)]
    best = max(fit)
    # keep >= 2 batch tiles (v7x has 2 TensorCores) when it does not starve the
    # MXU row dimension (tb * L >= 256)
    two = [t for t in fit if B // t >= 2 and t * L >= 256]
    return max(two) if two else best


def run_sasrec(seqs, seqs_side, tl3, wmat, wvec, pos_embs, neg_embs,
               last_g, last_b, n_heads, tb=None):
    B, L, D = seqs.shape
    num_blocks = wmat.shape[0]
    assert num_blocks >= 1 and D % n_heads == 0
    tb = _pick_tb(B, L, D, n_heads) if tb is None else tb
    assert B % tb == 0
    grid = (B // tb, num_blocks)             # layer axis last ("arbitrary")

    act = lambda: pl.BlockSpec((tb, L, D), lambda bt, l: (bt, 0, 0))
    vec = lambda: pl.BlockSpec((1, D), lambda bt, l: (0, 0))
    out = lambda: pl.BlockSpec((tb, L), lambda bt, l: (bt, 0))

    est = _est_vmem_bytes(tb, L, D, n_heads)
    vmem_limit = int(min(64 * 1024 * 1024, max(32 * 1024 * 1024, 1.5 * est)))

    return pl.pallas_call(
        functools.partial(_sasrec_kernel, n_heads),
        out_shape=(jax.ShapeDtypeStruct((B, L), jnp.float32),
                   jax.ShapeDtypeStruct((B, L), jnp.float32)),
        grid=grid,
        in_specs=[act(), act(),
                  pl.BlockSpec((tb, L, 1), lambda bt, l: (bt, 0, 0)),
                  pl.BlockSpec((None, 8, D, D), lambda bt, l: (l, 0, 0, 0)),
                  pl.BlockSpec((None, 12, D), lambda bt, l: (l, 0, 0)),
                  act(), act(), vec(), vec()],
        out_specs=(out(), out()),
        scratch_shapes=[pltpu.VMEM((tb, L, D), jnp.float32),
                        pltpu.VMEM((tb, L, D), jnp.float32)],
        compiler_params=pltpu.CompilerParams(
            dimension_semantics=("parallel", "arbitrary"),
            vmem_limit_bytes=vmem_limit),
    )(seqs, seqs_side, tl3, wmat, wvec, pos_embs, neg_embs, last_g, last_b)


# ----------------------------- parameter setup -----------------------------

def init_params(key, item_num, side1num, side2num, side3num,
                maxlen, hidden, num_blocks):
    n_keys = 5 + 16 * num_blocks
    keys = iter(jax.random.split(key, max(n_keys, 2)))

    def nrm(shape, scale=0.02):
        return scale * jax.random.normal(next(keys), shape, jnp.float32)

    def emb(n):
        e = nrm((n + 1, hidden))
        return e.at[0].set(0.0)              # padding_idx = 0

    p = {
        'item_emb': emb(item_num),
        'side1_emb': emb(side1num),
        'side2_emb': emb(side2num),
        'side3_emb': emb(side3num),
        'pos_emb': nrm((maxlen, hidden)),
        'last_ln_g': jnp.ones((1, hidden), jnp.float32),
        'last_ln_b': jnp.zeros((1, hidden), jnp.float32),
    }

    ones = jnp.ones((hidden,), jnp.float32)
    zeros = jnp.zeros((hidden,), jnp.float32)
    wmats, wvecs = [], []
    for _ in range(num_blocks):
        # torch Linear / Conv1d(ks=1) weights are (out, in); pre-transpose to (in, out)
        ws = [nrm((hidden, hidden)).T for _ in range(8)]   # wq wk wqs wks wv wo c1w c2w
        bs = [nrm((hidden,)) for _ in range(8)]            # bq bk bqs bks bv bo c1b c2b
        wmats.append(jnp.stack(ws))
        wvecs.append(jnp.stack(bs[:6] + [ones, zeros, ones, zeros] + bs[6:]))

    wdt = jnp.bfloat16 if MXU_BF16 else jnp.float32
    if num_blocks:
        p['wmat'] = jnp.stack(wmats).astype(wdt)    # (num_blocks, 8, D, D)
        p['wvec'] = jnp.stack(wvecs)                # (num_blocks, 12, D) f32
    else:
        p['wmat'] = jnp.zeros((0, 8, hidden, hidden), wdt)
        p['wvec'] = jnp.zeros((0, 12, hidden), jnp.float32)
    return p


# ----------------------------- forward (glue) -----------------------------

@functools.partial(jax.jit, static_argnums=(1,))
def sasrec_forward(params, n_heads,
                   log_seqs, pos_seqs, neg_seqs,
                   ls1, ps1, ns1, ls2, ps2, ns2, ls3, ps3, ns3):
    D = params['item_emb'].shape[1]
    B, L = log_seqs.shape
    sc = D ** 0.5

    # embedding gathers stay in the JAX wrapper (HBM gather, not a kernel op)
    seqs_item = params['item_emb'][log_seqs] * sc
    s1 = params['side1_emb'][ls1] * sc
    s2 = params['side2_emb'][ls2] * sc
    s3 = params['side3_emb'][ls3] * sc
    pos_e = params['pos_emb'][None, :L, :]

    seqs_side = s1 + s2 + s3 + pos_e
    seqs = seqs_item + seqs_side

    tl3 = (log_seqs != 0).astype(jnp.float32)[:, :, None]   # (B, L, 1) timeline mask
    seqs = seqs * tl3
    seqs_side = seqs_side * tl3

    pos_embs = (params['item_emb'][pos_seqs] + params['side1_emb'][ps1]
                + params['side2_emb'][ps2] + params['side3_emb'][ps3])
    neg_embs = (params['item_emb'][neg_seqs] + params['side1_emb'][ns1]
                + params['side2_emb'][ns2] + params['side3_emb'][ns3])

    if params['wmat'].shape[0] == 0:
        # degenerate num_blocks == 0 config: plain jnp fallback
        ln = _layernorm(seqs, params['last_ln_g'][None], params['last_ln_b'][None])
        return jnp.sum(ln * pos_embs, -1), jnp.sum(ln * neg_embs, -1)

    return run_sasrec(seqs, seqs_side, tl3, params['wmat'], params['wvec'],
                      pos_embs, neg_embs, params['last_ln_g'],
                      params['last_ln_b'], n_heads)


# --------------------------------- main ---------------------------------

if __name__ == "__main__":
    B, L, D, H, NUM_BLOCKS = 2, 8, 32, 2, 2
    item_num, s1n, s2n, s3n = 20, 10, 10, 10

    key = jax.random.PRNGKey(0)
    pkey, dkey = jax.random.split(key)
    params = init_params(pkey, item_num, s1n, s2n, s3n, L, D, NUM_BLOCKS)

    ks = jax.random.split(dkey, 12)
    log_seqs = jax.random.randint(ks[0], (B, L), 0, item_num + 1)   # 0 = pad
    pos_seqs = jax.random.randint(ks[1], (B, L), 1, item_num + 1)
    neg_seqs = jax.random.randint(ks[2], (B, L), 1, item_num + 1)
    ls1 = jax.random.randint(ks[3], (B, L), 0, s1n + 1)
    ps1 = jax.random.randint(ks[4], (B, L), 1, s1n + 1)
    ns1 = jax.random.randint(ks[5], (B, L), 1, s1n + 1)
    ls2 = jax.random.randint(ks[6], (B, L), 0, s2n + 1)
    ps2 = jax.random.randint(ks[7], (B, L), 1, s2n + 1)
    ns2 = jax.random.randint(ks[8], (B, L), 1, s2n + 1)
    ls3 = jax.random.randint(ks[9], (B, L), 0, s3n + 1)
    ps3 = jax.random.randint(ks[10], (B, L), 1, s3n + 1)
    ns3 = jax.random.randint(ks[11], (B, L), 1, s3n + 1)

    pos_logits, neg_logits = sasrec_forward(
        params, H, log_seqs, pos_seqs, neg_seqs,
        ls1, ps1, ns1, ls2, ps2, ns2, ls3, ps3, ns3)
    jax.block_until_ready((pos_logits, neg_logits))

    assert pos_logits.shape == (B, L) and neg_logits.shape == (B, L)
    assert pos_logits.dtype == jnp.float32
    print("KERNEL_OK")
</pallas_src>

<mosaic_0001>
module attributes {stable_mosaic.version = 11 : i64} {
  func.func @_sasrec_kernel(%arg0: i32, %arg1: i32, %arg2: memref<2x8x32xf32, #tpu.memory_space<vmem>>, %arg3: memref<2x8x32xf32, #tpu.memory_space<vmem>>, %arg4: memref<2x8x1xf32, #tpu.memory_space<vmem>>, %arg5: memref<1x8x32x32xbf16, #tpu.memory_space<vmem>>, %arg6: memref<1x12x32xf32, #tpu.memory_space<vmem>>, %arg7: memref<2x8x32xf32, #tpu.memory_space<vmem>>, %arg8: memref<2x8x32xf32, #tpu.memory_space<vmem>>, %arg9: memref<1x32xf32, #tpu.memory_space<vmem>>, %arg10: memref<1x32xf32, #tpu.memory_space<vmem>>, %arg11: memref<2x8xf32, #tpu.memory_space<vmem>>, %arg12: memref<2x8xf32, #tpu.memory_space<vmem>>, %arg13: memref<2x8x32xf32, #tpu.memory_space<vmem>>, %arg14: memref<2x8x32xf32, #tpu.memory_space<vmem>>) attributes {dimension_semantics = [#tpu.dimension_semantics<parallel>, #tpu.dimension_semantics<arbitrary>], iteration_bounds = array<i64: 1, 2>, scalar_prefetch = 0 : i64, scratch_operands = 2 : i64, tpu.core_type = #tpu.core_type<tc>, window_params = [{transform_indices = @transform_0, window_bounds = array<i64: 2, 8, 32>}, {transform_indices = @transform_1, window_bounds = array<i64: 2, 8, 32>}, {transform_indices = @transform_2, window_bounds = array<i64: 2, 8, 1>}, {transform_indices = @transform_3, window_bounds = array<i64: 1, 8, 32, 32>}, {transform_indices = @transform_4, window_bounds = array<i64: 1, 12, 32>}, {transform_indices = @transform_5, window_bounds = array<i64: 2, 8, 32>}, {transform_indices = @transform_6, window_bounds = array<i64: 2, 8, 32>}, {pipeline_mode = #tpu.pipeline_mode<synchronous>, transform_indices = @transform_7, window_bounds = array<i64: 1, 32>}, {pipeline_mode = #tpu.pipeline_mode<synchronous>, transform_indices = @transform_8, window_bounds = array<i64: 1, 32>}, {transform_indices = @transform_9, window_bounds = array<i64: 2, 8>}, {transform_indices = @transform_10, window_bounds = array<i64: 2, 8>}]} {
    %c0_i32 = arith.constant 0 : i32
    %0 = arith.cmpi eq, %arg1, %c0_i32 : i32
    %1 = arith.extui %0 : i1 to i32
    %c0_i32_0 = arith.constant 0 : i32
    %2 = arith.cmpi ne, %1, %c0_i32_0 : i32
    scf.if %2 {
      %c0_123 = arith.constant 0 : index
      %c0_124 = arith.constant 0 : index
      %c0_125 = arith.constant 0 : index
      %298 = vector.load %arg2[%c0_123, %c0_124, %c0_125] : memref<2x8x32xf32, #tpu.memory_space<vmem>>, vector<2x8x32xf32>
      %c0_126 = arith.constant 0 : index
      %c0_127 = arith.constant 0 : index
      %c0_128 = arith.constant 0 : index
      %299 = vector.load %arg13[%c0_126, %c0_127, %c0_128] : memref<2x8x32xf32, #tpu.memory_space<vmem>>, vector<2x8x32xf32>
      tpu.vector_store %arg13[%c0_126, %c0_127, %c0_128], %298 {strides = array<i32>} : memref<2x8x32xf32, #tpu.memory_space<vmem>>, vector<2x8x32xf32>,
      %c0_129 = arith.constant 0 : index
      %c0_130 = arith.constant 0 : index
      %c0_131 = arith.constant 0 : index
      %300 = vector.load %arg3[%c0_129, %c0_130, %c0_131] : memref<2x8x32xf32, #tpu.memory_space<vmem>>, vector<2x8x32xf32>
      %c0_132 = arith.constant 0 : index
      %c0_133 = arith.constant 0 : index
      %c0_134 = arith.constant 0 : index
      %301 = vector.load %arg14[%c0_132, %c0_133, %c0_134] : memref<2x8x32xf32, #tpu.memory_space<vmem>>, vector<2x8x32xf32>
      tpu.vector_store %arg14[%c0_132, %c0_133, %c0_134], %300 {strides = array<i32>} : memref<2x8x32xf32, #tpu.memory_space<vmem>>, vector<2x8x32xf32>,
    } else {
    }
    %c0 = arith.constant 0 : index
    %c0_1 = arith.constant 0 : index
    %c0_2 = arith.constant 0 : index
    %c0_3 = arith.constant 0 : index
    %3 = vector.load %arg5[%c0, %c0_1, %c0_2, %c0_3] : memref<1x8x32x32xbf16, #tpu.memory_space<vmem>>, vector<1x1x32x32xbf16>
    %4 = vector.shape_cast %3 : vector<1x1x32x32xbf16> to vector<32x32xbf16>
    %c0_4 = arith.constant 0 : index
    %c1 = arith.constant 1 : index
    %c0_5 = arith.constant 0 : index
    %c0_6 = arith.constant 0 : index
    %5 = vector.load %arg5[%c0_4, %c1, %c0_5, %c0_6] : memref<1x8x32x32xbf16, #tpu.memory_space<vmem>>, vector<1x1x32x32xbf16>
    %6 = vector.shape_cast %5 : vector<1x1x32x32xbf16> to vector<32x32xbf16>
    %c0_7 = arith.constant 0 : index
    %c2 = arith.constant 2 : index
    %c0_8 = arith.constant 0 : index
    %c0_9 = arith.constant 0 : index
    %7 = vector.load %arg5[%c0_7, %c2, %c0_8, %c0_9] : memref<1x8x32x32xbf16, #tpu.memory_space<vmem>>, vector<1x1x32x32xbf16>
    %8 = vector.shape_cast %7 : vector<1x1x32x32xbf16> to vector<32x32xbf16>
    %c0_10 = arith.constant 0 : index
    %c3 = arith.constant 3 : index
    %c0_11 = arith.constant 0 : index
    %c0_12 = arith.constant 0 : index
    %9 = vector.load %arg5[%c0_10, %c3, %c0_11, %c0_12] : memref<1x8x32x32xbf16, #tpu.memory_space<vmem>>, vector<1x1x32x32xbf16>
    %10 = vector.shape_cast %9 : vector<1x1x32x32xbf16> to vector<32x32xbf16>
    %c0_13 = arith.constant 0 : index
    %c4 = arith.constant 4 : index
    %c0_14 = arith.constant 0 : index
    %c0_15 = arith.constant 0 : index
    %11 = vector.load %arg5[%c0_13, %c4, %c0_14, %c0_15] : memref<1x8x32x32xbf16, #tpu.memory_space<vmem>>, vector<1x1x32x32xbf16>
    %12 = vector.shape_cast %11 : vector<1x1x32x32xbf16> to vector<32x32xbf16>
    %c0_16 = arith.constant 0 : index
    %c5 = arith.constant 5 : index
    %c0_17 = arith.constant 0 : index
    %c0_18 = arith.constant 0 : index
    %13 = vector.load %arg5[%c0_16, %c5, %c0_17, %c0_18] : memref<1x8x32x32xbf16, #tpu.memory_space<vmem>>, vector<1x1x32x32xbf16>
    %14 = vector.shape_cast %13 : vector<1x1x32x32xbf16> to vector<32x32xbf16>
    %c0_19 = arith.constant 0 : index
    %c6 = arith.constant 6 : index
    %c0_20 = arith.constant 0 : index
    %c0_21 = arith.constant 0 : index
    %15 = vector.load %arg5[%c0_19, %c6, %c0_20, %c0_21] : memref<1x8x32x32xbf16, #tpu.memory_space<vmem>>, vector<1x1x32x32xbf16>
    %16 = vector.shape_cast %15 : vector<1x1x32x32xbf16> to vector<32x32xbf16>
    %c0_22 = arith.constant 0 : index
    %c7 = arith.constant 7 : index
    %c0_23 = arith.constant 0 : index
    %c0_24 = arith.constant 0 : index
    %17 = vector.load %arg5[%c0_22, %c7, %c0_23, %c0_24] : memref<1x8x32x32xbf16, #tpu.memory_space<vmem>>, vector<1x1x32x32xbf16>
    %18 = vector.shape_cast %17 : vector<1x1x32x32xbf16> to vector<32x32xbf16>
    %c0_25 = arith.constant 0 : index
    %c0_26 = arith.constant 0 : index
    %c0_27 = arith.constant 0 : index
    %19 = vector.load %arg6[%c0_25, %c0_26, %c0_27] : memref<1x12x32xf32, #tpu.memory_space<vmem>>, vector<1x1x32xf32>
    %20 = vector.shape_cast %19 : vector<1x1x32xf32> to vector<1x32xf32>
    %c0_28 = arith.constant 0 : index
    %c1_29 = arith.constant 1 : index
    %c0_30 = arith.constant 0 : index
    %21 = vector.load %arg6[%c0_28, %c1_29, %c0_30] : memref<1x12x32xf32, #tpu.memory_space<vmem>>, vector<1x1x32xf32>
    %22 = vector.shape_cast %21 : vector<1x1x32xf32> to vector<1x32xf32>
    %c0_31 = arith.constant 0 : index
    %c2_32 = arith.constant 2 : index
    %c0_33 = arith.constant 0 : index
    %23 = vector.load %arg6[%c0_31, %c2_32, %c0_33] : memref<1x12x32xf32, #tpu.memory_space<vmem>>, vector<1x1x32xf32>
    %24 = vector.shape_cast %23 : vector<1x1x32xf32> to vector<1x32xf32>
    %c0_34 = arith.constant 0 : index
    %c3_35 = arith.constant 3 : index
    %c0_36 = arith.constant 0 : index
    %25 = vector.load %arg6[%c0_34, %c3_35, %c0_36] : memref<1x12x32xf32, #tpu.memory_space<vmem>>, vector<1x1x32xf32>
    %26 = vector.shape_cast %25 : vector<1x1x32xf32> to vector<1x32xf32>
    %c0_37 = arith.constant 0 : index
    %c4_38 = arith.constant 4 : index
    %c0_39 = arith.constant 0 : index
    %27 = vector.load %arg6[%c0_37, %c4_38, %c0_39] : memref<1x12x32xf32, #tpu.memory_space<vmem>>, vector<1x1x32xf32>
    %28 = vector.shape_cast %27 : vector<1x1x32xf32> to vector<1x32xf32>
    %c0_40 = arith.constant 0 : index
    %c5_41 = arith.constant 5 : index
    %c0_42 = arith.constant 0 : index
    %29 = vector.load %arg6[%c0_40, %c5_41, %c0_42] : memref<1x12x32xf32, #tpu.memory_space<vmem>>, vector<1x1x32xf32>
    %30 = vector.shape_cast %29 : vector<1x1x32xf32> to vector<1x32xf32>
    %c0_43 = arith.constant 0 : index
    %c6_44 = arith.constant 6 : index
    %c0_45 = arith.constant 0 : index
    %31 = vector.load %arg6[%c0_43, %c6_44, %c0_45] : memref<1x12x32xf32, #tpu.memory_space<vmem>>, vector<1x1x32xf32>
    %32 = vector.shape_cast %31 : vector<1x1x32xf32> to vector<1x32xf32>
    %c0_46 = arith.constant 0 : index
    %c7_47 = arith.constant 7 : index
    %c0_48 = arith.constant 0 : index
    %33 = vector.load %arg6[%c0_46, %c7_47, %c0_48] : memref<1x12x32xf32, #tpu.memory_space<vmem>>, vector<1x1x32xf32>
    %34 = vector.shape_cast %33 : vector<1x1x32xf32> to vector<1x32xf32>
    %c0_49 = arith.constant 0 : index
    %c8 = arith.constant 8 : index
    %c0_50 = arith.constant 0 : index
    %35 = vector.load %arg6[%c0_49, %c8, %c0_50] : memref<1x12x32xf32, #tpu.memory_space<vmem>>, vector<1x1x32xf32>
    %36 = vector.shape_cast %35 : vector<1x1x32xf32> to vector<1x32xf32>
    %c0_51 = arith.constant 0 : index
    %c9 = arith.constant 9 : index
    %c0_52 = arith.constant 0 : index
    %37 = vector.load %arg6[%c0_51, %c9, %c0_52] : memref<1x12x32xf32, #tpu.memory_space<vmem>>, vector<1x1x32xf32>
    %38 = vector.shape_cast %37 : vector<1x1x32xf32> to vector<1x32xf32>
    %c0_53 = arith.constant 0 : index
    %c10 = arith.constant 10 : index
    %c0_54 = arith.constant 0 : index
    %39 = vector.load %arg6[%c0_53, %c10, %c0_54] : memref<1x12x32xf32, #tpu.memory_space<vmem>>, vector<1x1x32xf32>
    %40 = vector.shape_cast %39 : vector<1x1x32xf32> to vector<1x32xf32>
    %c0_55 = arith.constant 0 : index
    %c11 = arith.constant 11 : index
    %c0_56 = arith.constant 0 : index
    %41 = vector.load %arg6[%c0_55, %c11, %c0_56] : memref<1x12x32xf32, #tpu.memory_space<vmem>>, vector<1x1x32xf32>
    %42 = vector.shape_cast %41 : vector<1x1x32xf32> to vector<1x32xf32>
    %c0_57 = arith.constant 0 : index
    %c0_58 = arith.constant 0 : index
    %c0_59 = arith.constant 0 : index
    %43 = vector.load %arg13[%c0_57, %c0_58, %c0_59] : memref<2x8x32xf32, #tpu.memory_space<vmem>>, vector<2x8x32xf32>
    %44 = vector.shape_cast %43 : vector<2x8x32xf32> to vector<16x32xf32>
    %c0_60 = arith.constant 0 : index
    %c0_61 = arith.constant 0 : index
    %c0_62 = arith.constant 0 : index
    %45 = vector.load %arg14[%c0_60, %c0_61, %c0_62] : memref<2x8x32xf32, #tpu.memory_space<vmem>>, vector<2x8x32xf32>
    %46 = vector.shape_cast %45 : vector<2x8x32xf32> to vector<16x32xf32>
    %cst = arith.constant dense<0.000000e+00> : vector<16xf32>
    %47 = vector.multi_reduction <add>, %44, %cst [1] : vector<16x32xf32> to vector<16xf32>
    %48 = vector.shape_cast %47 : vector<16xf32> to vector<16x1xf32>
    %cst_63 = arith.constant 3.200000e+01 : f32
    %49 = vector.broadcast %cst_63 : f32 to vector<16x1xf32>
    %50 = arith.divf %48, %49 : vector<16x1xf32>
    %51 = vector.broadcast %50 : vector<16x1xf32> to vector<16x32xf32>
    %52 = arith.subf %44, %51 : vector<16x32xf32>
    %53 = arith.mulf %52, %52 : vector<16x32xf32>
    %cst_64 = arith.constant dense<0.000000e+00> : vector<16xf32>
    %54 = vector.multi_reduction <add>, %53, %cst_64 [1] : vector<16x32xf32> to vector<16xf32>
    %55 = vector.shape_cast %54 : vector<16xf32> to vector<16x1xf32>
    %cst_65 = arith.constant 3.200000e+01 : f32
    %56 = vector.broadcast %cst_65 : f32 to vector<16x1xf32>
    %57 = arith.divf %55, %56 : vector<16x1xf32>
    %58 = vector.broadcast %50 : vector<16x1xf32> to vector<16x32xf32>
    %59 = arith.subf %44, %58 : vector<16x32xf32>
    %cst_66 = arith.constant 9.99999993E-9 : f32
    %60 = vector.broadcast %cst_66 : f32 to vector<16x1xf32>
    %61 = arith.addf %57, %60 : vector<16x1xf32>
    %62 = math.rsqrt %61 : vector<16x1xf32>
    %63 = vector.broadcast %62 : vector<16x1xf32> to vector<16x32xf32>
    %64 = arith.mulf %59, %63 : vector<16x32xf32>
    %65 = vector.broadcast %32 : vector<1x32xf32> to vector<16x32xf32>
    %66 = arith.mulf %64, %65 : vector<16x32xf32>
    %67 = vector.broadcast %34 : vector<1x32xf32> to vector<16x32xf32>
    %68 = arith.addf %66, %67 : vector<16x32xf32>
    %cst_67 = arith.constant dense<0.000000e+00> : vector<16xf32>
    %69 = vector.multi_reduction <add>, %46, %cst_67 [1] : vector<16x32xf32> to vector<16xf32>
    %70 = vector.shape_cast %69 : vector<16xf32> to vector<16x1xf32>
    %cst_68 = arith.constant 3.200000e+01 : f32
    %71 = vector.broadcast %cst_68 : f32 to vector<16x1xf32>
    %72 = arith.divf %70, %71 : vector<16x1xf32>
    %73 = vector.broadcast %72 : vector<16x1xf32> to vector<16x32xf32>
    %74 = arith.subf %46, %73 : vector<16x32xf32>
    %75 = arith.mulf %74, %74 : vector<16x32xf32>
    %cst_69 = arith.constant dense<0.000000e+00> : vector<16xf32>
    %76 = vector.multi_reduction <add>, %75, %cst_69 [1] : vector<16x32xf32> to vector<16xf32>
    %77 = vector.shape_cast %76 : vector<16xf32> to vector<16x1xf32>
    %cst_70 = arith.constant 3.200000e+01 : f32
    %78 = vector.broadcast %cst_70 : f32 to vector<16x1xf32>
    %79 = arith.divf %77, %78 : vector<16x1xf32>
    %80 = vector.broadcast %72 : vector<16x1xf32> to vector<16x32xf32>
    %81 = arith.subf %46, %80 : vector<16x32xf32>
    %cst_71 = arith.constant 9.99999993E-9 : f32
    %82 = vector.broadcast %cst_71 : f32 to vector<16x1xf32>
    %83 = arith.addf %79, %82 : vector<16x1xf32>
    %84 = math.rsqrt %83 : vector<16x1xf32>
    %85 = vector.broadcast %84 : vector<16x1xf32> to vector<16x32xf32>
    %86 = arith.mulf %81, %85 : vector<16x32xf32>
    %87 = vector.broadcast %32 : vector<1x32xf32> to vector<16x32xf32>
    %88 = arith.mulf %86, %87 : vector<16x32xf32>
    %89 = vector.broadcast %34 : vector<1x32xf32> to vector<16x32xf32>
    %90 = arith.addf %88, %89 : vector<16x32xf32>
    %91 = arith.truncf %44 : vector<16x32xf32> to vector<16x32xbf16>
    %92 = arith.truncf %46 : vector<16x32xf32> to vector<16x32xbf16>
    %93 = arith.truncf %68 : vector<16x32xf32> to vector<16x32xbf16>
    %94 = arith.truncf %90 : vector<16x32xf32> to vector<16x32xbf16>
    %95 = tpu.iota {dimensions = array<i32: 0>} : vector<8x8xi32>
    %96 = tpu.iota {dimensions = array<i32: 1>} : vector<8x8xi32>
    %97 = arith.cmpi sgt, %96, %95 : vector<8x8xi32>
    %98 = vector.shape_cast %97 : vector<8x8xi1> to vector<1x8x8xi1>
    %99 = vector.extract_strided_slice %4 {offsets = [0, 0], sizes = [32, 16], strides = [1, 1]} : vector<32x32xbf16> to vector<32x16xbf16>
    %cst_72 = arith.constant dense<0.000000e+00> : vector<16x16xf32>
    %100 = tpu.matmul %93, %99, %cst_72 {dimension_numbers = #tpu.dot_dimension_numbers<[1], [0], [0], [1], [0, 0, 1, 1], [], []>} : vector<16x32xbf16>, vector<32x16xbf16>, vector<16x16xf32> -> vector<16x16xf32>
    %101 = vector.extract_strided_slice %20 {offsets = [0, 0], sizes = [1, 16], strides = [1, 1]} : vector<1x32xf32> to vector<1x16xf32>
    %102 = vector.broadcast %101 : vector<1x16xf32> to vector<16x16xf32>
    %103 = arith.addf %100, %102 : vector<16x16xf32>
    %cst_73 = arith.constant 2.500000e-01 : f32
    %104 = vector.broadcast %cst_73 : f32 to vector<16x16xf32>
    %105 = arith.mulf %103, %104 : vector<16x16xf32>
    %106 = vector.shape_cast %105 : vector<16x16xf32> to vector<2x8x16xf32>
    %107 = vector.extract_strided_slice %8 {offsets = [0, 0], sizes = [32, 16], strides = [1, 1]} : vector<32x32xbf16> to vector<32x16xbf16>
    %cst_74 = arith.constant dense<0.000000e+00> : vector<16x16xf32>
    %108 = tpu.matmul %94, %107, %cst_74 {dimension_numbers = #tpu.dot_dimension_numbers<[1], [0], [0], [1], [0, 0, 1, 1], [], []>} : vector<16x32xbf16>, vector<32x16xbf16>, vector<16x16xf32> -> vector<16x16xf32>
    %109 = vector.extract_strided_slice %24 {offsets = [0, 0], sizes = [1, 16], strides = [1, 1]} : vector<1x32xf32> to vector<1x16xf32>
    %110 = vector.broadcast %109 : vector<1x16xf32> to vector<16x16xf32>
    %111 = arith.addf %108, %110 : vector<16x16xf32>
    %cst_75 = arith.constant 2.500000e-01 : f32
    %112 = vector.broadcast %cst_75 : f32 to vector<16x16xf32>
    %113 = arith.mulf %111, %112 : vector<16x16xf32>
    %114 = vector.shape_cast %113 : vector<16x16xf32> to vector<2x8x16xf32>
    %115 = vector.extract_strided_slice %6 {offsets = [0, 0], sizes = [32, 16], strides = [1, 1]} : vector<32x32xbf16> to vector<32x16xbf16>
    %cst_76 = arith.constant dense<0.000000e+00> : vector<16x16xf32>
    %116 = tpu.matmul %91, %115, %cst_76 {dimension_numbers = #tpu.dot_dimension_numbers<[1], [0], [0], [1], [0, 0, 1, 1], [], []>} : vector<16x32xbf16>, vector<32x16xbf16>, vector<16x16xf32> -> vector<16x16xf32>
    %117 = vector.extract_strided_slice %22 {offsets = [0, 0], sizes = [1, 16], strides = [1, 1]} : vector<1x32xf32> to vector<1x16xf32>
    %118 = vector.broadcast %117 : vector<1x16xf32> to vector<16x16xf32>
    %119 = arith.addf %116, %118 : vector<16x16xf32>
    %120 = vector.shape_cast %119 : vector<16x16xf32> to vector<2x8x16xf32>
    %121 = vector.extract_strided_slice %10 {offsets = [0, 0], sizes = [32, 16], strides = [1, 1]} : vector<32x32xbf16> to vector<32x16xbf16>
    %cst_77 = arith.constant dense<0.000000e+00> : vector<16x16xf32>
    %122 = tpu.matmul %92, %121, %cst_77 {dimension_numbers = #tpu.dot_dimension_numbers<[1], [0], [0], [1], [0, 0, 1, 1], [], []>} : vector<16x32xbf16>, vector<32x16xbf16>, vector<16x16xf32> -> vector<16x16xf32>
    %123 = vector.extract_strided_slice %26 {offsets = [0, 0], sizes = [1, 16], strides = [1, 1]} : vector<1x32xf32> to vector<1x16xf32>
    %124 = vector.broadcast %123 : vector<1x16xf32> to vector<16x16xf32>
    %125 = arith.addf %122, %124 : vector<16x16xf32>
    %126 = vector.shape_cast %125 : vector<16x16xf32> to vector<2x8x16xf32>
    %127 = vector.extract_strided_slice %12 {offsets = [0, 0], sizes = [32, 16], strides = [1, 1]} : vector<32x32xbf16> to vector<32x16xbf16>
    %cst_78 = arith.constant dense<0.000000e+00> : vector<16x16xf32>
    %128 = tpu.matmul %91, %127, %cst_78 {dimension_numbers = #tpu.dot_dimension_numbers<[1], [0], [0], [1], [0, 0, 1, 1], [], []>} : vector<16x32xbf16>, vector<32x16xbf16>, vector<16x16xf32> -> vector<16x16xf32>
    %129 = vector.extract_strided_slice %28 {offsets = [0, 0], sizes = [1, 16], strides = [1, 1]} : vector<1x32xf32> to vector<1x16xf32>
    %130 = vector.broadcast %129 : vector<1x16xf32> to vector<16x16xf32>
    %131 = arith.addf %128, %130 : vector<16x16xf32>
    %132 = vector.shape_cast %131 : vector<16x16xf32> to vector<2x8x16xf32>
    %133 = arith.truncf %106 : vector<2x8x16xf32> to vector<2x8x16xbf16>
    %134 = arith.truncf %120 : vector<2x8x16xf32> to vector<2x8x16xbf16>
    "tpu.trace_start"() <{level = 10 : i32, message = "bqd,bkd->bqk"}> : () -> ()
    %cst_79 = arith.constant dense<0.000000e+00> : vector<2x8x8xf32>
    %135 = tpu.matmul %133, %134, %cst_79 {dimension_numbers = #tpu.dot_dimension_numbers<[2], [2], [1], [1], [0, 0, 0, 1, 1, 1], [0], [0]>} : vector<2x8x16xbf16>, vector<2x8x16xbf16>, vector<2x8x8xf32> -> vector<2x8x8xf32>
    "tpu.trace_stop"() : () -> ()
    %136 = arith.truncf %114 : vector<2x8x16xf32> to vector<2x8x16xbf16>
    %137 = arith.truncf %126 : vector<2x8x16xf32> to vector<2x8x16xbf16>
    "tpu.trace_start"() <{level = 10 : i32, message = "bqd,bkd->bqk"}> : () -> ()
    %cst_80 = arith.constant dense<0.000000e+00> : vector<2x8x8xf32>
    %138 = tpu.matmul %136, %137, %cst_80 {dimension_numbers = #tpu.dot_dimension_numbers<[2], [2], [1], [1], [0, 0, 0, 1, 1, 1], [0], [0]>} : vector<2x8x16xbf16>, vector<2x8x16xbf16>, vector<2x8x8xf32> -> vector<2x8x8xf32>
    "tpu.trace_stop"() : () -> ()
    %139 = vector.shape_cast %98 : vector<1x8x8xi1> to vector<1x8x8xi1>
    %140 = vector.broadcast %139 : vector<1x8x8xi1> to vector<2x8x8xi1>
    %141 = arith.select %140, %138, %135 : vector<2x8x8xi1>, vector<2x8x8xf32>
    %cst_81 = arith.constant dense<0xFF800000> : vector<2x8xf32>
    %142 = vector.multi_reduction <maximumf>, %141, %cst_81 [2] : vector<2x8x8xf32> to vector<2x8xf32>
    %143 = vector.shape_cast %142 : vector<2x8xf32> to vector<2x8x1xf32>
    %144 = vector.broadcast %143 : vector<2x8x1xf32> to vector<2x8x8xf32>
    %145 = arith.subf %141, %144 : vector<2x8x8xf32>
    %146 = math.exp %145 : vector<2x8x8xf32>
    %cst_82 = arith.constant dense<0.000000e+00> : vector<2x8xf32>
    %147 = vector.multi_reduction <add>, %146, %cst_82 [2] : vector<2x8x8xf32> to vector<2x8xf32>
    %148 = vector.shape_cast %147 : vector<2x8xf32> to vector<2x8x1xf32>
    %149 = tpu.reciprocal %148 {approx = true} : vector<2x8x1xf32> -> vector<2x8x1xf32>
    %150 = vector.broadcast %149 : vector<2x8x1xf32> to vector<2x8x8xf32>
    %151 = arith.mulf %146, %150 : vector<2x8x8xf32>
    %152 = arith.truncf %151 : vector<2x8x8xf32> to vector<2x8x8xbf16>
    %153 = arith.truncf %132 : vector<2x8x16xf32> to vector<2x8x16xbf16>
    "tpu.trace_start"() <{level = 10 : i32, message = "bqk,bkd->bqd"}> : () -> ()
    %cst_83 = arith.constant dense<0.000000e+00> : vector<2x8x16xf32>
    %154 = tpu.matmul %152, %153, %cst_83 {dimension_numbers = #tpu.dot_dimension_numbers<[2], [1], [1], [2], [0, 0, 0, 1, 1, 2], [0], [0]>} : vector<2x8x8xbf16>, vector<2x8x16xbf16>, vector<2x8x16xf32> -> vector<2x8x16xf32>
    "tpu.trace_stop"() : () -> ()
    %155 = vector.shape_cast %154 : vector<2x8x16xf32> to vector<16x16xf32>
    %156 = vector.extract_strided_slice %4 {offsets = [0, 16], sizes = [32, 16], strides = [1, 1]} : vector<32x32xbf16> to vector<32x16xbf16>
    %cst_84 = arith.constant dense<0.000000e+00> : vector<16x16xf32>
    %157 = tpu.matmul %93, %156, %cst_84 {dimension_numbers = #tpu.dot_dimension_numbers<[1], [0], [0], [1], [0, 0, 1, 1], [], []>} : vector<16x32xbf16>, vector<32x16xbf16>, vector<16x16xf32> -> vector<16x16xf32>
    %158 = vector.extract_strided_slice %20 {offsets = [0, 16], sizes = [1, 16], strides = [1, 1]} : vector<1x32xf32> to vector<1x16xf32>
    %159 = vector.broadcast %158 : vector<1x16xf32> to vector<16x16xf32>
    %160 = arith.addf %157, %159 : vector<16x16xf32>
    %cst_85 = arith.constant 2.500000e-01 : f32
    %161 = vector.broadcast %cst_85 : f32 to vector<16x16xf32>
    %162 = arith.mulf %160, %161 : vector<16x16xf32>
    %163 = vector.shape_cast %162 : vector<16x16xf32> to vector<2x8x16xf32>
    %164 = vector.extract_strided_slice %8 {offsets = [0, 16], sizes = [32, 16], strides = [1, 1]} : vector<32x32xbf16> to vector<32x16xbf16>
    %cst_86 = arith.constant dense<0.000000e+00> : vector<16x16xf32>
    %165 = tpu.matmul %94, %164, %cst_86 {dimension_numbers = #tpu.dot_dimension_numbers<[1], [0], [0], [1], [0, 0, 1, 1], [], []>} : vector<16x32xbf16>, vector<32x16xbf16>, vector<16x16xf32> -> vector<16x16xf32>
    %166 = vector.extract_strided_slice %24 {offsets = [0, 16], sizes = [1, 16], strides = [1, 1]} : vector<1x32xf32> to vector<1x16xf32>
    %167 = vector.broadcast %166 : vector<1x16xf32> to vector<16x16xf32>
    %168 = arith.addf %165, %167 : vector<16x16xf32>
    %cst_87 = arith.constant 2.500000e-01 : f32
    %169 = vector.broadcast %cst_87 : f32 to vector<16x16xf32>
    %170 = arith.mulf %168, %169 : vector<16x16xf32>
    %171 = vector.shape_cast %170 : vector<16x16xf32> to vector<2x8x16xf32>
    %172 = vector.extract_strided_slice %6 {offsets = [0, 16], sizes = [32, 16], strides = [1, 1]} : vector<32x32xbf16> to vector<32x16xbf16>
    %cst_88 = arith.constant dense<0.000000e+00> : vector<16x16xf32>
    %173 = tpu.matmul %91, %172, %cst_88 {dimension_numbers = #tpu.dot_dimension_numbers<[1], [0], [0], [1], [0, 0, 1, 1], [], []>} : vector<16x32xbf16>, vector<32x16xbf16>, vector<16x16xf32> -> vector<16x16xf32>
    %174 = vector.extract_strided_slice %22 {offsets = [0, 16], sizes = [1, 16], strides = [1, 1]} : vector<1x32xf32> to vector<1x16xf32>
    %175 = vector.broadcast %174 : vector<1x16xf32> to vector<16x16xf32>
    %176 = arith.addf %173, %175 : vector<16x16xf32>
    %177 = vector.shape_cast %176 : vector<16x16xf32> to vector<2x8x16xf32>
    %178 = vector.extract_strided_slice %10 {offsets = [0, 16], sizes = [32, 16], strides = [1, 1]} : vector<32x32xbf16> to vector<32x16xbf16>
    %cst_89 = arith.constant dense<0.000000e+00> : vector<16x16xf32>
    %179 = tpu.matmul %92, %178, %cst_89 {dimension_numbers = #tpu.dot_dimension_numbers<[1], [0], [0], [1], [0, 0, 1, 1], [], []>} : vector<16x32xbf16>, vector<32x16xbf16>, vector<16x16xf32> -> vector<16x16xf32>
    %180 = vector.extract_strided_slice %26 {offsets = [0, 16], sizes = [1, 16], strides = [1, 1]} : vector<1x32xf32> to vector<1x16xf32>
    %181 = vector.broadcast %180 : vector<1x16xf32> to vector<16x16xf32>
    %182 = arith.addf %179, %181 : vector<16x16xf32>
    %183 = vector.shape_cast %182 : vector<16x16xf32> to vector<2x8x16xf32>
    %184 = vector.extract_strided_slice %12 {offsets = [0, 16], sizes = [32, 16], strides = [1, 1]} : vector<32x32xbf16> to vector<32x16xbf16>
    %cst_90 = arith.constant dense<0.000000e+00> : vector<16x16xf32>
    %185 = tpu.matmul %91, %184, %cst_90 {dimension_numbers = #tpu.dot_dimension_numbers<[1], [0], [0], [1], [0, 0, 1, 1], [], []>} : vector<16x32xbf16>, vector<32x16xbf16>, vector<16x16xf32> -> vector<16x16xf32>
    %186 = vector.extract_strided_slice %28 {offsets = [0, 16], sizes = [1, 16], strides = [1, 1]} : vector<1x32xf32> to vector<1x16xf32>
    %187 = vector.broadcast %186 : vector<1x16xf32> to vector<16x16xf32>
    %188 = arith.addf %185, %187 : vector<16x16xf32>
    %189 = vector.shape_cast %188 : vector<16x16xf32> to vector<2x8x16xf32>
    %190 = arith.truncf %163 : vector<2x8x16xf32> to vector<2x8x16xbf16>
    %191 = arith.truncf %177 : vector<2x8x16xf32> to vector<2x8x16xbf16>
    "tpu.trace_start"() <{level = 10 : i32, message = "bqd,bkd->bqk"}> : () -> ()
    %cst_91 = arith.constant dense<0.000000e+00> : vector<2x8x8xf32>
    %192 = tpu.matmul %190, %191, %cst_91 {dimension_numbers = #tpu.dot_dimension_numbers<[2], [2], [1], [1], [0, 0, 0, 1, 1, 1], [0], [0]>} : vector<2x8x16xbf16>, vector<2x8x16xbf16>, vector<2x8x8xf32> -> vector<2x8x8xf32>
    "tpu.trace_stop"() : () -> ()
    %193 = arith.truncf %171 : vector<2x8x16xf32> to vector<2x8x16xbf16>
    %194 = arith.truncf %183 : vector<2x8x16xf32> to vector<2x8x16xbf16>
    "tpu.trace_start"() <{level = 10 : i32, message = "bqd,bkd->bqk"}> : () -> ()
    %cst_92 = arith.constant dense<0.000000e+00> : vector<2x8x8xf32>
    %195 = tpu.matmul %193, %194, %cst_92 {dimension_numbers = #tpu.dot_dimension_numbers<[2], [2], [1], [1], [0, 0, 0, 1, 1, 1], [0], [0]>} : vector<2x8x16xbf16>, vector<2x8x16xbf16>, vector<2x8x8xf32> -> vector<2x8x8xf32>
    "tpu.trace_stop"() : () -> ()
    %196 = vector.shape_cast %98 : vector<1x8x8xi1> to vector<1x8x8xi1>
    %197 = vector.broadcast %196 : vector<1x8x8xi1> to vector<2x8x8xi1>
    %198 = arith.select %197, %195, %192 : vector<2x8x8xi1>, vector<2x8x8xf32>
    %cst_93 = arith.constant dense<0xFF800000> : vector<2x8xf32>
    %199 = vector.multi_reduction <maximumf>, %198, %cst_93 [2] : vector<2x8x8xf32> to vector<2x8xf32>
    %200 = vector.shape_cast %199 : vector<2x8xf32> to vector<2x8x1xf32>
    %201 = vector.broadcast %200 : vector<2x8x1xf32> to vector<2x8x8xf32>
    %202 = arith.subf %198, %201 : vector<2x8x8xf32>
    %203 = math.exp %202 : vector<2x8x8xf32>
    %cst_94 = arith.constant dense<0.000000e+00> : vector<2x8xf32>
    %204 = vector.multi_reduction <add>, %203, %cst_94 [2] : vector<2x8x8xf32> to vector<2x8xf32>
    %205 = vector.shape_cast %204 : vector<2x8xf32> to vector<2x8x1xf32>
    %206 = tpu.reciprocal %205 {approx = true} : vector<2x8x1xf32> -> vector<2x8x1xf32>
    %207 = vector.broadcast %206 : vector<2x8x1xf32> to vector<2x8x8xf32>
    %208 = arith.mulf %203, %207 : vector<2x8x8xf32>
    %209 = arith.truncf %208 : vector<2x8x8xf32> to vector<2x8x8xbf16>
    %210 = arith.truncf %189 : vector<2x8x16xf32> to vector<2x8x16xbf16>
    "tpu.trace_start"() <{level = 10 : i32, message = "bqk,bkd->bqd"}> : () -> ()
    %cst_95 = arith.constant dense<0.000000e+00> : vector<2x8x16xf32>
    %211 = tpu.matmul %209, %210, %cst_95 {dimension_numbers = #tpu.dot_dimension_numbers<[2], [1], [1], [2], [0, 0, 0, 1, 1, 2], [0], [0]>} : vector<2x8x8xbf16>, vector<2x8x16xbf16>, vector<2x8x16xf32> -> vector<2x8x16xf32>
    "tpu.trace_stop"() : () -> ()
    %212 = vector.shape_cast %211 : vector<2x8x16xf32> to vector<16x16xf32>
    %213 = tpu.concatenate %155, %212 in 1 : vector<16x16xf32>, vector<16x16xf32> -> vector<16x32xf32>
    %214 = arith.truncf %213 : vector<16x32xf32> to vector<16x32xbf16>
    %cst_96 = arith.constant dense<0.000000e+00> : vector<16x32xf32>
    %215 = tpu.matmul %214, %14, %cst_96 {dimension_numbers = #tpu.dot_dimension_numbers<[1], [0], [0], [1], [0, 0, 1, 1], [], []>} : vector<16x32xbf16>, vector<32x32xbf16>, vector<16x32xf32> -> vector<16x32xf32>
    %216 = vector.broadcast %30 : vector<1x32xf32> to vector<16x32xf32>
    %217 = arith.addf %215, %216 : vector<16x32xf32>
    %218 = arith.addf %68, %217 : vector<16x32xf32>
    %219 = arith.addf %90, %217 : vector<16x32xf32>
    %cst_97 = arith.constant dense<0.000000e+00> : vector<16xf32>
    %220 = vector.multi_reduction <add>, %218, %cst_97 [1] : vector<16x32xf32> to vector<16xf32>
    %221 = vector.shape_cast %220 : vector<16xf32> to vector<16x1xf32>
    %cst_98 = arith.constant 3.200000e+01 : f32
    %222 = vector.broadcast %cst_98 : f32 to vector<16x1xf32>
    %223 = arith.divf %221, %222 : vector<16x1xf32>
    %224 = vector.broadcast %223 : vector<16x1xf32> to vector<16x32xf32>
    %225 = arith.subf %218, %224 : vector<16x32xf32>
    %226 = arith.mulf %225, %225 : vector<16x32xf32>
    %cst_99 = arith.constant dense<0.000000e+00> : vector<16xf32>
    %227 = vector.multi_reduction <add>, %226, %cst_99 [1] : vector<16x32xf32> to vector<16xf32>
    %228 = vector.shape_cast %227 : vector<16xf32> to vector<16x1xf32>
    %cst_100 = arith.constant 3.200000e+01 : f32
    %229 = vector.broadcast %cst_100 : f32 to vector<16x1xf32>
    %230 = arith.divf %228, %229 : vector<16x1xf32>
    %231 = vector.broadcast %223 : vector<16x1xf32> to vector<16x32xf32>
    %232 = arith.subf %218, %231 : vector<16x32xf32>
    %cst_101 = arith.constant 9.99999993E-9 : f32
    %233 = vector.broadcast %cst_101 : f32 to vector<16x1xf32>
    %234 = arith.addf %230, %233 : vector<16x1xf32>
    %235 = math.rsqrt %234 : vector<16x1xf32>
    %236 = vector.broadcast %235 : vector<16x1xf32> to vector<16x32xf32>
    %237 = arith.mulf %232, %236 : vector<16x32xf32>
    %238 = vector.broadcast %36 : vector<1x32xf32> to vector<16x32xf32>
    %239 = arith.mulf %237, %238 : vector<16x32xf32>
    %240 = vector.broadcast %38 : vector<1x32xf32> to vector<16x32xf32>
    %241 = arith.addf %239, %240 : vector<16x32xf32>
    %cst_102 = arith.constant dense<0.000000e+00> : vector<16xf32>
    %242 = vector.multi_reduction <add>, %219, %cst_102 [1] : vector<16x32xf32> to vector<16xf32>
    %243 = vector.shape_cast %242 : vector<16xf32> to vector<16x1xf32>
    %cst_103 = arith.constant 3.200000e+01 : f32
    %244 = vector.broadcast %cst_103 : f32 to vector<16x1xf32>
    %245 = arith.divf %243, %244 : vector<16x1xf32>
    %246 = vector.broadcast %245 : vector<16x1xf32> to vector<16x32xf32>
    %247 = arith.subf %219, %246 : vector<16x32xf32>
    %248 = arith.mulf %247, %247 : vector<16x32xf32>
    %cst_104 = arith.constant dense<0.000000e+00> : vector<16xf32>
    %249 = vector.multi_reduction <add>, %248, %cst_104 [1] : vector<16x32xf32> to vector<16xf32>
    %250 = vector.shape_cast %249 : vector<16xf32> to vector<16x1xf32>
    %cst_105 = arith.constant 3.200000e+01 : f32
    %251 = vector.broadcast %cst_105 : f32 to vector<16x1xf32>
    %252 = arith.divf %250, %251 : vector<16x1xf32>
    %253 = vector.broadcast %245 : vector<16x1xf32> to vector<16x32xf32>
    %254 = arith.subf %219, %253 : vector<16x32xf32>
    %cst_106 = arith.constant 9.99999993E-9 : f32
    %255 = vector.broadcast %cst_106 : f32 to vector<16x1xf32>
    %256 = arith.addf %252, %255 : vector<16x1xf32>
    %257 = math.rsqrt %256 : vector<16x1xf32>
    %258 = vector.broadcast %257 : vector<16x1xf32> to vector<16x32xf32>
    %259 = arith.mulf %254, %258 : vector<16x32xf32>
    %260 = vector.broadcast %36 : vector<1x32xf32> to vector<16x32xf32>
    %261 = arith.mulf %259, %260 : vector<16x32xf32>
    %262 = vector.broadcast %38 : vector<1x32xf32> to vector<16x32xf32>
    %263 = arith.addf %261, %262 : vector<16x32xf32>
    %c0_107 = arith.constant 0 : index
    %c0_108 = arith.constant 0 : index
    %c0_109 = arith.constant 0 : index
    %264 = vector.load %arg4[%c0_107, %c0_108, %c0_109] : memref<2x8x1xf32, #tpu.memory_space<vmem>>, vector<2x8x1xf32>
    %265 = arith.truncf %241 : vector<16x32xf32> to vector<16x32xbf16>
    %cst_110 = arith.constant dense<0.000000e+00> : vector<16x32xf32>
    %266 = tpu.matmul %265, %16, %cst_110 {dimension_numbers = #tpu.dot_dimension_numbers<[1], [0], [0], [1], [0, 0, 1, 1], [], []>} : vector<16x32xbf16>, vector<32x32xbf16>, vector<16x32xf32> -> vector<16x32xf32>
    %267 = vector.broadcast %40 : vector<1x32xf32> to vector<16x32xf32>
    %268 = arith.addf %266, %267 : vector<16x32xf32>
    %cst_111 = arith.constant 0.000000e+00 : f32
    %269 = vector.broadcast %cst_111 : f32 to vector<16x32xf32>
    %270 = arith.maximumf %268, %269 : vector<16x32xf32>
    %271 = arith.truncf %270 : vector<16x32xf32> to vector<16x32xbf16>
    %cst_112 = arith.constant dense<0.000000e+00> : vector<16x32xf32>
    %272 = tpu.matmul %271, %18, %cst_112 {dimension_numbers = #tpu.dot_dimension_numbers<[1], [0], [0], [1], [0, 0, 1, 1], [], []>} : vector<16x32xbf16>, vector<32x32xbf16>, vector<16x32xf32> -> vector<16x32xf32>
    %273 = vector.broadcast %42 : vector<1x32xf32> to vector<16x32xf32>
    %274 = arith.addf %272, %273 : vector<16x32xf32>
    %275 = arith.addf %274, %241 : vector<16x32xf32>
    %276 = vector.shape_cast %275 : vector<16x32xf32> to vector<2x8x32xf32>
    %277 = vector.broadcast %264 : vector<2x8x1xf32> to vector<2x8x32xf32>
    %278 = arith.mulf %276, %277 : vector<2x8x32xf32>
    %279 = arith.truncf %263 : vector<16x32xf32> to vector<16x32xbf16>
    %cst_113 = arith.constant dense<0.000000e+00> : vector<16x32xf32>
    %280 = tpu.matmul %279, %16, %cst_113 {dimension_numbers = #tpu.dot_dimension_numbers<[1], [0], [0], [1], [0, 0, 1, 1], [], []>} : vector<16x32xbf16>, vector<32x32xbf16>, vector<16x32xf32> -> vector<16x32xf32>
    %281 = vector.broadcast %40 : vector<1x32xf32> to vector<16x32xf32>
    %282 = arith.addf %280, %281 : vector<16x32xf32>
    %cst_114 = arith.constant 0.000000e+00 : f32
    %283 = vector.broadcast %cst_114 : f32 to vector<16x32xf32>
    %284 = arith.maximumf %282, %283 : vector<16x32xf32>
    %285 = arith.truncf %284 : vector<16x32xf32> to vector<16x32xbf16>
    %cst_115 = arith.constant dense<0.000000e+00> : vector<16x32xf32>
    %286 = tpu.matmul %285, %18, %cst_115 {dimension_numbers = #tpu.dot_dimension_numbers<[1], [0], [0], [1], [0, 0, 1, 1], [], []>} : vector<16x32xbf16>, vector<32x32xbf16>, vector<16x32xf32> -> vector<16x32xf32>
    %287 = vector.broadcast %42 : vector<1x32xf32> to vector<16x32xf32>
    %288 = arith.addf %286, %287 : vector<16x32xf32>
    %289 = arith.addf %288, %263 : vector<16x32xf32>
    %290 = vector.shape_cast %289 : vector<16x32xf32> to vector<2x8x32xf32>
    %291 = vector.broadcast %264 : vector<2x8x1xf32> to vector<2x8x32xf32>
    %292 = arith.mulf %290, %291 : vector<2x8x32xf32>
    %c0_116 = arith.constant 0 : index
    %c0_117 = arith.constant 0 : index
    %c0_118 = arith.constant 0 : index
    %293 = vector.load %arg13[%c0_116, %c0_117, %c0_118] : memref<2x8x32xf32, #tpu.memory_space<vmem>>, vector<2x8x32xf32>
    tpu.vector_store %arg13[%c0_116, %c0_117, %c0_118], %278 {strides = array<i32>} : memref<2x8x32xf32, #tpu.memory_space<vmem>>, vector<2x8x32xf32>,
    %c0_119 = arith.constant 0 : index
    %c0_120 = arith.constant 0 : index
    %c0_121 = arith.constant 0 : index
    %294 = vector.load %arg14[%c0_119, %c0_120, %c0_121] : memref<2x8x32xf32, #tpu.memory_space<vmem>>, vector<2x8x32xf32>
    tpu.vector_store %arg14[%c0_119, %c0_120, %c0_121], %292 {strides = array<i32>} : memref<2x8x32xf32, #tpu.memory_space<vmem>>, vector<2x8x32xf32>,
    %c1_i32 = arith.constant 1 : i32
    %295 = arith.cmpi eq, %arg1, %c1_i32 : i32
    %296 = arith.extui %295 : i1 to i32
    %c0_i32_122 = arith.constant 0 : i32
    %297 = arith.cmpi ne, %296, %c0_i32_122 : i32
    scf.if %297 {
      %c0_123 = arith.constant 0 : index
      %c0_124 = arith.constant 0 : index
      %298 = vector.load %arg9[%c0_123, %c0_124] : memref<1x32xf32, #tpu.memory_space<vmem>>, vector<1x32xf32>
      %299 = vector.shape_cast %298 : vector<1x32xf32> to vector<1x1x32xf32>
      %c0_125 = arith.constant 0 : index
      %c0_126 = arith.constant 0 : index
      %300 = vector.load %arg10[%c0_125, %c0_126] : memref<1x32xf32, #tpu.memory_space<vmem>>, vector<1x32xf32>
      %301 = vector.shape_cast %300 : vector<1x32xf32> to vector<1x1x32xf32>
      %cst_127 = arith.constant dense<0.000000e+00> : vector<2x8xf32>
      %302 = vector.multi_reduction <add>, %278, %cst_127 [2] : vector<2x8x32xf32> to vector<2x8xf32>
      %303 = vector.shape_cast %302 : vector<2x8xf32> to vector<2x8x1xf32>
      %cst_128 = arith.constant 3.200000e+01 : f32
      %304 = vector.broadcast %cst_128 : f32 to vector<2x8x1xf32>
      %305 = arith.divf %303, %304 : vector<2x8x1xf32>
      %306 = vector.broadcast %305 : vector<2x8x1xf32> to vector<2x8x32xf32>
      %307 = arith.subf %278, %306 : vector<2x8x32xf32>
      %308 = arith.mulf %307, %307 : vector<2x8x32xf32>
      %cst_129 = arith.constant dense<0.000000e+00> : vector<2x8xf32>
      %309 = vector.multi_reduction <add>, %308, %cst_129 [2] : vector<2x8x32xf32> to vector<2x8xf32>
      %310 = vector.shape_cast %309 : vector<2x8xf32> to vector<2x8x1xf32>
      %cst_130 = arith.constant 3.200000e+01 : f32
      %311 = vector.broadcast %cst_130 : f32 to vector<2x8x1xf32>
      %312 = arith.divf %310, %311 : vector<2x8x1xf32>
      %313 = vector.broadcast %305 : vector<2x8x1xf32> to vector<2x8x32xf32>
      %314 = arith.subf %278, %313 : vector<2x8x32xf32>
      %cst_131 = arith.constant 9.99999993E-9 : f32
      %315 = vector.broadcast %cst_131 : f32 to vector<2x8x1xf32>
      %316 = arith.addf %312, %315 : vector<2x8x1xf32>
      %317 = math.rsqrt %316 : vector<2x8x1xf32>
      %318 = vector.broadcast %317 : vector<2x8x1xf32> to vector<2x8x32xf32>
      %319 = arith.mulf %314, %318 : vector<2x8x32xf32>
      %320 = vector.broadcast %299 : vector<1x1x32xf32> to vector<2x8x32xf32>
      %321 = arith.mulf %319, %320 : vector<2x8x32xf32>
      %322 = vector.broadcast %301 : vector<1x1x32xf32> to vector<2x8x32xf32>
      %323 = arith.addf %321, %322 : vector<2x8x32xf32>
      %c0_132 = arith.constant 0 : index
      %c0_133 = arith.constant 0 : index
      %c0_134 = arith.constant 0 : index
      %324 = vector.load %arg7[%c0_132, %c0_133, %c0_134] : memref<2x8x32xf32, #tpu.memory_space<vmem>>, vector<2x8x32xf32>
      %325 = arith.mulf %323, %324 : vector<2x8x32xf32>
      %cst_135 = arith.constant dense<0.000000e+00> : vector<2x8xf32>
      %326 = vector.multi_reduction <add>, %325, %cst_135 [2] : vector<2x8x32xf32> to vector<2x8xf32>
      %c0_136 = arith.constant 0 : index
      %c0_137 = arith.constant 0 : index
      %327 = vector.load %arg11[%c0_136, %c0_137] : memref<2x8xf32, #tpu.memory_space<vmem>>, vector<2x8xf32>
      tpu.vector_store %arg11[%c0_136, %c0_137], %326 {strides = array<i32>} : memref<2x8xf32, #tpu.memory_space<vmem>>, vector<2x8xf32>,
      %c0_138 = arith.constant 0 : index
      %c0_139 = arith.constant 0 : index
      %c0_140 = arith.constant 0 : index
      %328 = vector.load %arg8[%c0_138, %c0_139, %c0_140] : memref<2x8x32xf32, #tpu.memory_space<vmem>>, vector<2x8x32xf32>
      %329 = arith.mulf %323, %328 : vector<2x8x32xf32>
      %cst_141 = arith.constant dense<0.000000e+00> : vector<2x8xf32>
      %330 = vector.multi_reduction <add>, %329, %cst_141 [2] : vector<2x8x32xf32> to vector<2x8xf32>
      %c0_142 = arith.constant 0 : index
      %c0_143 = arith.constant 0 : index
      %331 = vector.load %arg12[%c0_142, %c0_143] : memref<2x8xf32, #tpu.memory_space<vmem>>, vector<2x8xf32>
      tpu.vector_store %arg12[%c0_142, %c0_143], %330 {strides = array<i32>} : memref<2x8xf32, #tpu.memory_space<vmem>>, vector<2x8xf32>,
    } else {
    }
    return
  }
  func.func @transform_0(%arg0: i32, %arg1: i32) -> (i32, i32, i32) {
    %c0_i32 = arith.constant 0 : i32
    %c0_i32_0 = arith.constant 0 : i32
    %c0_i32_1 = arith.constant 0 : i32
    return %arg0, %c0_i32, %c0_i32_0 : i32, i32, i32
  }
  func.func @transform_1(%arg0: i32, %arg1: i32) -> (i32, i32, i32) {
    %c0_i32 = arith.constant 0 : i32
    %c0_i32_0 = arith.constant 0 : i32
    %c0_i32_1 = arith.constant 0 : i32
    return %arg0, %c0_i32, %c0_i32_0 : i32, i32, i32
  }
  func.func @transform_2(%arg0: i32, %arg1: i32) -> (i32, i32, i32) {
    %c0_i32 = arith.constant 0 : i32
    %c0_i32_0 = arith.constant 0 : i32
    %c0_i32_1 = arith.constant 0 : i32
    return %arg0, %c0_i32, %c0_i32_0 : i32, i32, i32
  }
  func.func @transform_3(%arg0: i32, %arg1: i32) -> (i32, i32, i32, i32) {
    %c0_i32 = arith.constant 0 : i32
    %c0_i32_0 = arith.constant 0 : i32
    %c0_i32_1 = arith.constant 0 : i32
    %c0_i32_2 = arith.constant 0 : i32
    return %arg1, %c0_i32, %c0_i32_0, %c0_i32_1 : i32, i32, i32, i32
  }
  func.func @transform_4(%arg0: i32, %arg1: i32) -> (i32, i32, i32) {
    %c0_i32 = arith.constant 0 : i32
    %c0_i32_0 = arith.constant 0 : i32
    %c0_i32_1 = arith.constant 0 : i32
    return %arg1, %c0_i32, %c0_i32_0 : i32, i32, i32
  }
  func.func @transform_5(%arg0: i32, %arg1: i32) -> (i32, i32, i32) {
    %c0_i32 = arith.constant 0 : i32
    %c0_i32_0 = arith.constant 0 : i32
    %c0_i32_1 = arith.constant 0 : i32
    return %arg0, %c0_i32, %c0_i32_0 : i32, i32, i32
  }
  func.func @transform_6(%arg0: i32, %arg1: i32) -> (i32, i32, i32) {
    %c0_i32 = arith.constant 0 : i32
    %c0_i32_0 = arith.constant 0 : i32
    %c0_i32_1 = arith.constant 0 : i32
    return %arg0, %c0_i32, %c0_i32_0 : i32, i32, i32
  }
  func.func @transform_7(%arg0: i32, %arg1: i32) -> (i32, i32) {
    %c0_i32 = arith.constant 0 : i32
    %c0_i32_0 = arith.constant 0 : i32
    %c0_i32_1 = arith.constant 0 : i32
    return %c0_i32, %c0_i32_0 : i32, i32
  }
  func.func @transform_8(%arg0: i32, %arg1: i32) -> (i32, i32) {
    %c0_i32 = arith.constant 0 : i32
    %c0_i32_0 = arith.constant 0 : i32
    %c0_i32_1 = arith.constant 0 : i32
    return %c0_i32, %c0_i32_0 : i32, i32
  }
  func.func @transform_9(%arg0: i32, %arg1: i32) -> (i32, i32) {
    %c0_i32 = arith.constant 0 : i32
    %c0_i32_0 = arith.constant 0 : i32
    return %arg0, %c0_i32 : i32, i32
  }
  func.func @transform_10(%arg0: i32, %arg1: i32) -> (i32, i32) {
    %c0_i32 = arith.constant 0 : i32
    %c0_i32_0 = arith.constant 0 : i32
    return %arg0, %c0_i32 : i32, i32
  }
}

</mosaic_0001>

<llo_original>
// kernel: sasrec_forward.1
$region0: #{sasrec_forward.1}
  #allocation0 [shape = 'u32[]', space=smem, size = 0x4, offset = 0x4, fixed_abs, tag = 'smem constant byte address 0x4 - core index']
  #allocation1 [shape = 'u32[144,128]{1,0:T(1,128)}', space=vmem, size = 0x12000, scoped, tag = 'internal scratch']
  #allocation2 [shape = 'f32[2,8,32]{2,1,0:T(8,128)}', space=vmem, size = 0x2000, scoped, tag = 'scratch operand']
  #allocation3 [shape = 'f32[2,8,32]{2,1,0:T(8,128)}', space=vmem, size = 0x2000, scoped, tag = 'scratch operand']
  %s0 = inlined_call_operand.vmem [shape: f32[2,8,32], index: 0, kind: input, shape index: {}]
  %s1 = inlined_call_operand.vmem [shape: f32[2,8,32], index: 1, kind: input, shape index: {}]
  %s2 = inlined_call_operand.vmem [shape: f32[2,8,1], index: 2, kind: input, shape index: {}]
  %s3 = inlined_call_operand.vmem [shape: bf16[2,8,32,32], index: 3, kind: input, shape index: {}]
  %s4 = inlined_call_operand.vmem [shape: f32[2,12,32], index: 4, kind: input, shape index: {}]
  %s5 = inlined_call_operand.vmem [shape: f32[2,8,32], index: 5, kind: input, shape index: {}]
  %s6 = inlined_call_operand.vmem [shape: f32[2,8,32], index: 6, kind: input, shape index: {}]
  %s7 = inlined_call_operand.vmem [shape: f32[1,32], index: 7, kind: input, shape index: {}]
  %s8 = inlined_call_operand.vmem [shape: f32[1,32], index: 8, kind: input, shape index: {}]
  %s9 = inlined_call_operand.hbm [shape: f32[2,8], index: 9, kind: output, shape index: {0}]
  %s10 = inlined_call_operand.hbm [shape: f32[2,8], index: 10, kind: output, shape index: {1}]
  %11 = xla_tuple %s9, %s10
  %s12 = sld [smem:[#allocation0]]
  $region85: #{sasrec_forward.1} parent=0
    _
  %s14 = ssub.s32 1, %s12
  %s15 = scalar_select 0, %s14, %s12
  $region1: #{sasrec_forward.1} parent=0
    #allocation4 [shape = 'u8[1024]{0}', space=vmem, size = 0x400, scoped, tag = 'output window, operand 0, single buffered']
    #allocation5 [shape = 's32[2]{0}', space=sflag, size = 0x8, scoped, tag = 'scoped memory for sasrec_forward.1']
    #allocation6 [shape = 'u8[1024]{0}', space=vmem, size = 0x400, scoped, tag = 'output window, operand 1, single buffered']
    #allocation7 [shape = 's32[1]{0}', space=sflag, size = 0x4, scoped, tag = 'scoped memory for sasrec_forward.1']
    %16 = vsyncpa [#allocation5], 0
    %17 = vsyncpa [#allocation7], 0
    loop: start=0, step=1, limit=4
    $region2: #{sasrec_forward.1} parent=1 // loop_pre_header
      _
    $region3: #{sasrec_forward.1} parent=1 // loop_header
      %s19 = sphi 0, %s23
      %p20 = scmp.ge.s32.totalorder %s19, 4
      %s26 = sphi 0, %s38
      %s27 = sphi 0, %s34
      %s28 = sphi 0, %s26
      %s29 = sphi 0, %s27
      %s30 = sphi 0, %s28
      %s31 = sphi 0, %s29
      %s41 = sphi 0, %s43
      %s44 = sphi 0, %s41
      %s45 = sphi 0, %s44
      %s61 = sphi 0, %s45
      %s67 = sphi 0, %s69
      %s70 = sphi 0, %s67
      %s71 = sphi 0, %s70
      %s87 = sphi 0, %s71
      %s93 = sphi 0, %s95
      %s96 = sphi 0, %s93
      %s97 = sphi 0, %s96
      %s113 = sphi 0, %s97
      %s119 = sphi 0, %s121
      %s122 = sphi 0, %s119
      %s123 = sphi 0, %s122
      %s139 = sphi 0, %s123
      %s145 = sphi 0, %s147
      %s148 = sphi 0, %s145
      %s149 = sphi 0, %s148
      %s165 = sphi 0, %s149
      %s171 = sphi 0, %s173
      %s174 = sphi 0, %s171
      %s175 = sphi 0, %s174
      %s191 = sphi 0, %s175
      %s197 = sphi 0, %s199
      %s200 = sphi 0, %s197
      %s201 = sphi 0, %s200
      %s217 = sphi 0, %s201
      %s221 = sphi 0, %s221
      %s223 = sphi 0, %s221
      %s224 = sphi 0, %s223
      %s238 = sphi 0, %s224
      %s242 = sphi 0, %s242
      %s244 = sphi 0, %s242
      %s245 = sphi 0, %s244
      %s259 = sphi 0, %s245
      %s265 = sphi 0, %s267
      %s268 = sphi 0, %s265
      %s269 = sphi 0, %s268
      %s285 = sphi 0, %s269
      %s291 = sphi 0, %s293
      %s294 = sphi 0, %s291
      %s295 = sphi 0, %s294
      %s311 = sphi 0, %s295
    $region4: #{sasrec_forward.1} parent=1 // loop_header_branch
      %22 = sbr.rel (%p20) target = $region8
    $region5: #{sasrec_forward.1} parent=1 // loop_body
      %s24 = ssub.s32 %s19, 1
      %s25 = ssub.s32 %s19, 2
      %s32 = sadd.s32 1, %s27
      %p33 = scmp.ge.s32.totalorder %s32, 2
      %s34 = scalar_select %p33, 0, %s32
      %s35 = sadd.s32 1, %s26
      %s36 = scalar_select %p33, %s35, %s26
      %p37 = scmp.ge.s32.totalorder %s36, 1
      %s38 = scalar_select %p37, 0, %s36
      %s39 = ssub.s32 %s26, %s38
      %p40 = scmp.eq.s32.totalorder %s39, 0
      %s42 = sadd.s32 %s41, 1
      %s43 = scalar_select %p40, %s41, %s42
      %p46 = pneg %p40
      %p47 = scmp.eq.s32.totalorder %s19, 1
      %p48 = por %p46, %p47
      %p49 = scmp.ne.s32.totalorder %s41, %s44
      %p50 = scmp.eq.s32.totalorder %s19, 0
      %p51 = por %p49, %p50
      %p52 = scmp.ne.s32.totalorder %s41, %s44
      %p53 = scmp.eq.s32.totalorder %s24, 1
      %p54 = por %p52, %p53
      %p55 = scmp.ne.s32.totalorder %s44, %s45
      %p56 = scmp.eq.s32.totalorder %s24, 0
      %p57 = por %p55, %p56
      %p58 = scmp.ne.s32.totalorder %s44, %s45
      %p59 = scmp.eq.s32.totalorder %s25, 1
      %p60 = por %p58, %p59
      %p62 = scmp.ne.s32.totalorder %s45, %s61
      %p63 = scmp.eq.s32.totalorder %s25, 0
      %p64 = por %p62, %p63
      %s65 = ssub.s32 %s26, %s38
      %p66 = scmp.eq.s32.totalorder %s65, 0
      %s68 = sadd.s32 %s67, 1
      %s69 = scalar_select %p66, %s67, %s68
      %p72 = pneg %p66
      %p73 = scmp.eq.s32.totalorder %s19, 1
      %p74 = por %p72, %p73
      %p75 = scmp.ne.s32.totalorder %s67, %s70
      %p76 = scmp.eq.s32.totalorder %s19, 0
      %p77 = por %p75, %p76
      %p78 = scmp.ne.s32.totalorder %s67, %s70
      %p79 = scmp.eq.s32.totalorder %s24, 1
      %p80 = por %p78, %p79
      %p81 = scmp.ne.s32.totalorder %s70, %s71
      %p82 = scmp.eq.s32.totalorder %s24, 0
      %p83 = por %p81, %p82
      %p84 = scmp.ne.s32.totalorder %s70, %s71
      %p85 = scmp.eq.s32.totalorder %s25, 1
      %p86 = por %p84, %p85
      %p88 = scmp.ne.s32.totalorder %s71, %s87
      %p89 = scmp.eq.s32.totalorder %s25, 0
      %p90 = por %p88, %p89
      %s91 = ssub.s32 %s26, %s38
      %p92 = scmp.eq.s32.totalorder %s91, 0
      %s94 = sadd.s32 %s93, 1
      %s95 = scalar_select %p92, %s93, %s94
      %p98 = pneg %p92
      %p99 = scmp.eq.s32.totalorder %s19, 1
      %p100 = por %p98, %p99
      %p101 = scmp.ne.s32.totalorder %s93, %s96
      %p102 = scmp.eq.s32.totalorder %s19, 0
      %p103 = por %p101, %p102
      %p104 = scmp.ne.s32.totalorder %s93, %s96
      %p105 = scmp.eq.s32.totalorder %s24, 1
      %p106 = por %p104, %p105
      %p107 = scmp.ne.s32.totalorder %s96, %s97
      %p108 = scmp.eq.s32.totalorder %s24, 0
      %p109 = por %p107, %p108
      %p110 = scmp.ne.s32.totalorder %s96, %s97
      %p111 = scmp.eq.s32.totalorder %s25, 1
      %p112 = por %p110, %p111
      %p114 = scmp.ne.s32.totalorder %s97, %s113
      %p115 = scmp.eq.s32.totalorder %s25, 0
      %p116 = por %p114, %p115
      %s117 = ssub.s32 %s27, %s34
      %p118 = scmp.eq.s32.totalorder %s117, 0
      %s120 = sadd.s32 %s119, 1
      %s121 = scalar_select %p118, %s119, %s120
      %p124 = pneg %p118
      %p125 = scmp.eq.s32.totalorder %s19, 1
      %p126 = por %p124, %p125
      %p127 = scmp.ne.s32.totalorder %s119, %s122
      %p128 = scmp.eq.s32.totalorder %s19, 0
      %p129 = por %p127, %p128
      %p130 = scmp.ne.s32.totalorder %s119, %s122
      %p131 = scmp.eq.s32.totalorder %s24, 1
      %p132 = por %p130, %p131
      %p133 = scmp.ne.s32.totalorder %s122, %s123
      %p134 = scmp.eq.s32.totalorder %s24, 0
      %p135 = por %p133, %p134
      %p136 = scmp.ne.s32.totalorder %s122, %s123
      %p137 = scmp.eq.s32.totalorder %s25, 1
      %p138 = por %p136, %p137
      %p140 = scmp.ne.s32.totalorder %s123, %s139
      %p141 = scmp.eq.s32.totalorder %s25, 0
      %p142 = por %p140, %p141
      %s143 = ssub.s32 %s27, %s34
      %p144 = scmp.eq.s32.totalorder %s143, 0
      %s146 = sadd.s32 %s145, 1
      %s147 = scalar_select %p144, %s145, %s146
      %p150 = pneg %p144
      %p151 = scmp.eq.s32.totalorder %s19, 1
      %p152 = por %p150, %p151
      %p153 = scmp.ne.s32.totalorder %s145, %s148
      %p154 = scmp.eq.s32.totalorder %s19, 0
      %p155 = por %p153, %p154
      %p156 = scmp.ne.s32.totalorder %s145, %s148
      %p157 = scmp.eq.s32.totalorder %s24, 1
      %p158 = por %p156, %p157
      %p159 = scmp.ne.s32.totalorder %s148, %s149
      %p160 = scmp.eq.s32.totalorder %s24, 0
      %p161 = por %p159, %p160
      %p162 = scmp.ne.s32.totalorder %s148, %s149
      %p163 = scmp.eq.s32.totalorder %s25, 1
      %p164 = por %p162, %p163
      %p166 = scmp.ne.s32.totalorder %s149, %s165
      %p167 = scmp.eq.s32.totalorder %s25, 0
      %p168 = por %p166, %p167
      %s169 = ssub.s32 %s26, %s38
      %p170 = scmp.eq.s32.totalorder %s169, 0
      %s172 = sadd.s32 %s171, 1
      %s173 = scalar_select %p170, %s171, %s172
      %p176 = pneg %p170
      %p177 = scmp.eq.s32.totalorder %s19, 1
      %p178 = por %p176, %p177
      %p179 = scmp.ne.s32.totalorder %s171, %s174
      %p180 = scmp.eq.s32.totalorder %s19, 0
      %p181 = por %p179, %p180
      %p182 = scmp.ne.s32.totalorder %s171, %s174
      %p183 = scmp.eq.s32.totalorder %s24, 1
      %p184 = por %p182, %p183
      %p185 = scmp.ne.s32.totalorder %s174, %s175
      %p186 = scmp.eq.s32.totalorder %s24, 0
      %p187 = por %p185, %p186
      %p188 = scmp.ne.s32.totalorder %s174, %s175
      %p189 = scmp.eq.s32.totalorder %s25, 1
      %p190 = por %p188, %p189
      %p192 = scmp.ne.s32.totalorder %s175, %s191
      %p193 = scmp.eq.s32.totalorder %s25, 0
      %p194 = por %p192, %p193
      %s195 = ssub.s32 %s26, %s38
      %p196 = scmp.eq.s32.totalorder %s195, 0
      %s198 = sadd.s32 %s197, 1
      %s199 = scalar_select %p196, %s197, %s198
      %p202 = pneg %p196
      %p203 = scmp.eq.s32.totalorder %s19, 1
      %p204 = por %p202, %p203
      %p205 = scmp.ne.s32.totalorder %s197, %s200
      %p206 = scmp.eq.s32.totalorder %s19, 0
      %p207 = por %p205, %p206
      %p208 = scmp.ne.s32.totalorder %s197, %s200
      %p209 = scmp.eq.s32.totalorder %s24, 1
      %p210 = por %p208, %p209
      %p211 = scmp.ne.s32.totalorder %s200, %s201
      %p212 = scmp.eq.s32.totalorder %s24, 0
      %p213 = por %p211, %p212
      %p214 = scmp.ne.s32.totalorder %s200, %s201
      %p215 = scmp.eq.s32.totalorder %s25, 1
      %p216 = por %p214, %p215
      %p218 = scmp.ne.s32.totalorder %s201, %s217
      %p219 = scmp.eq.s32.totalorder %s25, 0
      %p220 = por %p218, %p219
      %s222 = sadd.s32 %s221, 1
      %p225 = scmp.eq.s32.totalorder %s19, 1
      %p226 = scmp.ne.s32.totalorder %s221, %s223
      %p227 = scmp.eq.s32.totalorder %s19, 0
      %p228 = por %p226, %p227
      %p229 = scmp.ne.s32.totalorder %s221, %s223
      %p230 = scmp.eq.s32.totalorder %s24, 1
      %p231 = por %p229, %p230
      %p232 = scmp.ne.s32.totalorder %s223, %s224
      %p233 = scmp.eq.s32.totalorder %s24, 0
      %p234 = por %p232, %p233
      %p235 = scmp.ne.s32.totalorder %s223, %s224
      %p236 = scmp.eq.s32.totalorder %s25, 1
      %p237 = por %p235, %p236
      %p239 = scmp.ne.s32.totalorder %s224, %s238
      %p240 = scmp.eq.s32.totalorder %s25, 0
      %p241 = por %p239, %p240
      %s243 = sadd.s32 %s242, 1
      %p246 = scmp.eq.s32.totalorder %s19, 1
      %p247 = scmp.ne.s32.totalorder %s242, %s244
      %p248 = scmp.eq.s32.totalorder %s19, 0
      %p249 = por %p247, %p248
      %p250 = scmp.ne.s32.totalorder %s242, %s244
      %p251 = scmp.eq.s32.totalorder %s24, 1
      %p252 = por %p250, %p251
      %p253 = scmp.ne.s32.totalorder %s244, %s245
      %p254 = scmp.eq.s32.totalorder %s24, 0
      %p255 = por %p253, %p254
      %p256 = scmp.ne.s32.totalorder %s244, %s245
      %p257 = scmp.eq.s32.totalorder %s25, 1
      %p258 = por %p256, %p257
      %p260 = scmp.ne.s32.totalorder %s245, %s259
      %p261 = scmp.eq.s32.totalorder %s25, 0
      %p262 = por %p260, %p261
      %s263 = ssub.s32 %s26, %s38
      %p264 = scmp.eq.s32.totalorder %s263, 0
      %s266 = sadd.s32 %s265, 1
      %s267 = scalar_select %p264, %s265, %s266
      %p270 = pneg %p264
      %p271 = scmp.eq.s32.totalorder %s19, 1
      %p272 = por %p270, %p271
      %p273 = scmp.ne.s32.totalorder %s265, %s268
      %p274 = scmp.eq.s32.totalorder %s19, 0
      %p275 = por %p273, %p274
      %p276 = scmp.ne.s32.totalorder %s265, %s268
      %p277 = scmp.eq.s32.totalorder %s24, 1
      %p278 = por %p276, %p277
      %p279 = scmp.ne.s32.totalorder %s268, %s269
      %p280 = scmp.eq.s32.totalorder %s24, 0
      %p281 = por %p279, %p280
      %p282 = scmp.ne.s32.totalorder %s268, %s269
      %p283 = scmp.eq.s32.totalorder %s25, 1
      %p284 = por %p282, %p283
      %p286 = scmp.ne.s32.totalorder %s269, %s285
      %p287 = scmp.eq.s32.totalorder %s25, 0
      %p288 = por %p286, %p287
      %s289 = ssub.s32 %s26, %s38
      %p290 = scmp.eq.s32.totalorder %s289, 0
      %s292 = sadd.s32 %s291, 1
      %s293 = scalar_select %p290, %s291, %s292
      %p296 = pneg %p290
      %p297 = scmp.eq.s32.totalorder %s19, 1
      %p298 = por %p296, %p297
      %p299 = scmp.ne.s32.totalorder %s291, %s294
      %p300 = scmp.eq.s32.totalorder %s19, 0
      %p301 = por %p299, %p300
      %p302 = scmp.ne.s32.totalorder %s291, %s294
      %p303 = scmp.eq.s32.totalorder %s24, 1
      %p304 = por %p302, %p303
      %p305 = scmp.ne.s32.totalorder %s294, %s295
      %p306 = scmp.eq.s32.totalorder %s24, 0
      %p307 = por %p305, %p306
      %p308 = scmp.ne.s32.totalorder %s294, %s295
      %p309 = scmp.eq.s32.totalorder %s25, 1
      %p310 = por %p308, %p309
      %p312 = scmp.ne.s32.totalorder %s295, %s311
      %p313 = scmp.eq.s32.totalorder %s25, 0
      %p314 = por %p312, %p313
      %p315 = scmp.le.s32.totalorder 1, %s19
      %p316 = scmp.lt.s32.totalorder %s19, 3
      %p317 = pnand %p315, %p316
      %p318 = pneg %p317
      // Predicated region
      $region9: #{sasrec_forward.1} parent=5 // pred_check
        _
      $region10: #{sasrec_forward.1} parent=5 // pred_check_branch
        %320 = sbr.rel (%p317) target = $region12
      $region11: #{sasrec_forward.1} parent=5 // pred_region
        %s321 = ssub.s32 %s19, 1
        // Predicated region
        $region13: #{sasrec_forward.1} parent=11 // pred_check
          %p322 = pneg %p57
        $region14: #{sasrec_forward.1} parent=11 // pred_check_branch
          %324 = sbr.rel (%p322) target = $region16
        $region15: #{sasrec_forward.1} parent=11 // pred_region
          %s325 = smul.u32 2, %s28
          %p326 = scmp.lt.s32.totalorder %s325, 1
          %s327 = scalar_select %p326, %s325, 1
          %s328 = smul.addr %s327, 8
          %s329 = scalar_lea.vmem %s0, %s328
          %s330 = smul.u32 2, %s28
        $region16: #{sasrec_forward.1} parent=11 // pred_fallthru
          _
        // Predicated region
        $region17: #{sasrec_forward.1} parent=11 // pred_check
          %p331 = pneg %p83
        $region18: #{sasrec_forward.1} parent=11 // pred_check_branch
          %333 = sbr.rel (%p331) target = $region20
        $region19: #{sasrec_forward.1} parent=11 // pred_region
          %s334 = smul.u32 2, %s28
          %p335 = scmp.lt.s32.totalorder %s334, 1
          %s336 = scalar_select %p335, %s334, 1
          %s337 = smul.addr %s336, 8
          %s338 = scalar_lea.vmem %s1, %s337
          %s339 = smul.u32 2, %s28
        $region20: #{sasrec_forward.1} parent=11 // pred_fallthru
          _
        // Predicated region
        $region21: #{sasrec_forward.1} parent=11 // pred_check
          %p340 = pneg %p109
        $region22: #{sasrec_forward.1} parent=11 // pred_check_branch
          %342 = sbr.rel (%p340) target = $region24
        $region23: #{sasrec_forward.1} parent=11 // pred_region
          %s343 = smul.u32 2, %s28
          %p344 = scmp.lt.s32.totalorder %s343, 1
          %s345 = scalar_select %p344, %s343, 1
          %s346 = smul.addr %s345, 8
          %s347 = scalar_lea.vmem %s2, %s346
          %s348 = smul.u32 2, %s28
        $region24: #{sasrec_forward.1} parent=11 // pred_fallthru
          _
        // Predicated region
        $region25: #{sasrec_forward.1} parent=11 // pred_check
          %p349 = pneg %p187
        $region26: #{sasrec_forward.1} parent=11 // pred_check_branch
          %351 = sbr.rel (%p349) target = $region28
        $region27: #{sasrec_forward.1} parent=11 // pred_region
          %s352 = smul.u32 2, %s28
          %p353 = scmp.lt.s32.totalorder %s352, 1
          %s354 = scalar_select %p353, %s352, 1
          %s355 = smul.addr %s354, 8
          %s356 = scalar_lea.vmem %s5, %s355
          %s357 = smul.u32 2, %s28
        $region28: #{sasrec_forward.1} parent=11 // pred_fallthru
          _
        // Predicated region
        $region29: #{sasrec_forward.1} parent=11 // pred_check
          %p358 = pneg %p213
        $region30: #{sasrec_forward.1} parent=11 // pred_check_branch
          %360 = sbr.rel (%p358) target = $region32
        $region31: #{sasrec_forward.1} parent=11 // pred_region
          %s361 = smul.u32 2, %s28
          %p362 = scmp.lt.s32.totalorder %s361, 1
          %s363 = scalar_select %p362, %s361, 1
          %s364 = smul.addr %s363, 8
          %s365 = scalar_lea.vmem %s6, %s364
          %s366 = smul.u32 2, %s28
        $region32: #{sasrec_forward.1} parent=11 // pred_fallthru
          _
        // Predicated region
        $region33: #{sasrec_forward.1} parent=11 // pred_check
          %p367 = pneg %p234
        $region34: #{sasrec_forward.1} parent=11 // pred_check_branch
          %369 = sbr.rel (%p367) target = $region36
        $region35: #{sasrec_forward.1} parent=11 // pred_region
          _
        $region36: #{sasrec_forward.1} parent=11 // pred_fallthru
          _
        // Predicated region
        $region37: #{sasrec_forward.1} parent=11 // pred_check
          %p370 = pneg %p255
        $region38: #{sasrec_forward.1} parent=11 // pred_check_branch
          %372 = sbr.rel (%p370) target = $region40
        $region39: #{sasrec_forward.1} parent=11 // pred_region
          _
        $region40: #{sasrec_forward.1} parent=11 // pred_fallthru
          _
      $region12: #{sasrec_forward.1} parent=5 // pred_fallthru
        _
      %p373 = scmp.lt.s32.totalorder %s19, 2
      // Predicated region
      $region41: #{sasrec_forward.1} parent=5 // pred_check
        %p374 = pneg %p373
      $region42: #{sasrec_forward.1} parent=5 // pred_check_branch
        %376 = sbr.rel (%p374) target = $region44
      $region43: #{sasrec_forward.1} parent=5 // pred_region
        // Predicated region
        $region45: #{sasrec_forward.1} parent=43 // pred_check
          %p377 = pneg %p129
        $region46: #{sasrec_forward.1} parent=43 // pred_check_branch
          %379 = sbr.rel (%p377) target = $region48
        $region47: #{sasrec_forward.1} parent=43 // pred_region
          %p380 = scmp.lt.s32.totalorder %s27, 1
          %s381 = scalar_select %p380, %s27, 1
          %s382 = smul.addr %s381, 32
          %s383 = smul.addr %s382, 4
          %s384 = scalar_lea.vmem %s3, %s383
        $region48: #{sasrec_forward.1} parent=43 // pred_fallthru
          _
        // Predicated region
        $region49: #{sasrec_forward.1} parent=43 // pred_check
          %p385 = pneg %p155
        $region50: #{sasrec_forward.1} parent=43 // pred_check_branch
          %387 = sbr.rel (%p385) target = $region52
        $region51: #{sasrec_forward.1} parent=43 // pred_region
          %p388 = scmp.lt.s32.totalorder %s27, 1
          %s389 = scalar_select %p388, %s27, 1
          %s390 = smul.addr %s389, 2
          %s391 = smul.addr %s390, 8
          %s392 = scalar_lea.vmem %s4, %s391
        $region52: #{sasrec_forward.1} parent=43 // pred_fallthru
          _
      $region44: #{sasrec_forward.1} parent=5 // pred_fallthru
        _
      %p393 = scmp.le.s32.totalorder 1, %s19
      %p394 = scmp.lt.s32.totalorder %s19, 3
      %p395 = pnand %p393, %p394
      %p396 = pneg %p395
      // Predicated region
      $region53: #{sasrec_forward.1} parent=5 // pred_check
        _
      $region54: #{sasrec_forward.1} parent=5 // pred_check_branch
        %398 = sbr.rel (%p395) target = $region56
      $region55: #{sasrec_forward.1} parent=5 // pred_region
        %s399 = ssub.s32 %s19, 1
        %s400 = smul.u32 2, %s28
        %p401 = scmp.lt.s32.totalorder %s400, 1
        %s402 = scalar_select %p401, %s400, 1
        %s403 = smul.addr %s402, 8
        %s404 = scalar_lea.vmem %s0, %s403
        %p405 = pneg %p57
        %p406 = pneg %p54
        %s407 = smul.u32 2, %s28
        %p408 = scmp.lt.s32.totalorder %s407, 1
        %s409 = scalar_select %p408, %s407, 1
        %s410 = smul.addr %s409, 8
        %s411 = scalar_lea.vmem %s1, %s410
        %p412 = pneg %p83
        %p413 = pneg %p80
        %s414 = smul.u32 2, %s28
        %p415 = scmp.lt.s32.totalorder %s414, 1
        %s416 = scalar_select %p415, %s414, 1
        %s417 = smul.addr %s416, 8
        %s418 = scalar_lea.vmem %s2, %s417
        %p419 = pneg %p109
        %p420 = pneg %p106
        %p421 = scmp.lt.s32.totalorder %s29, 1
        %s422 = scalar_select %p421, %s29, 1
        %s423 = smul.addr %s422, 32
        %s424 = smul.addr %s423, 4
        %s425 = scalar_lea.vmem %s3, %s424
        %p426 = pneg %p135
        %p427 = pneg %p132
        %p428 = scmp.lt.s32.totalorder %s29, 1
        %s429 = scalar_select %p428, %s29, 1
        %s430 = smul.addr %s429, 2
        %s431 = smul.addr %s430, 8
        %s432 = scalar_lea.vmem %s4, %s431
        %p433 = pneg %p161
        %p434 = pneg %p158
        %s435 = smul.u32 2, %s28
        %p436 = scmp.lt.s32.totalorder %s435, 1
        %s437 = scalar_select %p436, %s435, 1
        %s438 = smul.addr %s437, 8
        %s439 = scalar_lea.vmem %s5, %s438
        %p440 = pneg %p187
        %p441 = pneg %p184
        %s442 = smul.u32 2, %s28
        %p443 = scmp.lt.s32.totalorder %s442, 1
        %s444 = scalar_select %p443, %s442, 1
        %s445 = smul.addr %s444, 8
        %s446 = scalar_lea.vmem %s6, %s445
        %p447 = pneg %p213
        %p448 = pneg %p210
        %p449 = pneg %p234
        %p450 = pneg %p231
        %p451 = pneg %p255
        %p452 = pneg %p252
        %p453 = pneg %p281
        %p454 = pneg %p278
        %p455 = pneg %p307
        %p456 = pneg %p304
        %s457 = smul.u32 2, %s28
        %p458 = scmp.lt.s32.totalorder %s457, 1
        %s459 = scalar_select %p458, %s457, 1
        %s460 = smul.addr %s459, 8
        %s461 = scalar_lea.vmem %s0, %s460
        %s462 = smul.u32 2, %s28
        %s463 = smul.u32 2, %s28
        %p464 = scmp.lt.s32.totalorder %s463, 1
        %s465 = scalar_select %p464, %s463, 1
        %s466 = smul.addr %s465, 8
        %s467 = scalar_lea.vmem %s1, %s466
        %s468 = smul.u32 2, %s28
        %s469 = smul.u32 2, %s28
        %p470 = scmp.lt.s32.totalorder %s469, 1
        %s471 = scalar_select %p470, %s469, 1
        %s472 = smul.addr %s471, 8
        %s473 = scalar_lea.vmem %s2, %s472
        %s474 = smul.u32 2, %s28
        %p475 = scmp.lt.s32.totalorder %s29, 1
        %s476 = scalar_select %p475, %s29, 1
        %s477 = smul.addr %s476, 32
        %s478 = smul.addr %s477, 4
        %s479 = scalar_lea.vmem %s3, %s478
        %p480 = scmp.lt.s32.totalorder %s29, 1
        %s481 = scalar_select %p480, %s29, 1
        %s482 = smul.addr %s481, 2
        %s483 = smul.addr %s482, 8
        %s484 = scalar_lea.vmem %s4, %s483
        %s485 = smul.u32 2, %s28
        %p486 = scmp.lt.s32.totalorder %s485, 1
        %s487 = scalar_select %p486, %s485, 1
        %s488 = smul.addr %s487, 8
        %s489 = scalar_lea.vmem %s5, %s488
        %s490 = smul.u32 2, %s28
        %s491 = smul.u32 2, %s28
        %p492 = scmp.lt.s32.totalorder %s491, 1
        %s493 = scalar_select %p492, %s491, 1
        %s494 = smul.addr %s493, 8
        %s495 = scalar_lea.vmem %s6, %s494
        %s496 = smul.u32 2, %s28
        %p498 = scmp.eq.s32.totalorder %s29, 0
        // Predicated region
        $region57: #{sasrec_forward.1} parent=55 // pred_check
          %p499 = pneg %p498
        $region58: #{sasrec_forward.1} parent=55 // pred_check_branch
          %501 = sbr.rel (%p499) target = $region60
        $region59: #{sasrec_forward.1} parent=55 // pred_region
          %v502 = vld [vmem:[%s461] sm:$0xff]
          %v503 = vld [vmem:[%s461 + $0x8] sm:$0xff]
          %vm504 = vcmask 261120
          %505 = vst.msk [vmem:[#allocation2] sm:$0xff] %vm504, %v502
          %506 = vst.msk [vmem:[#allocation2 + $0x8] sm:$0xff] %vm504, %v503
          %v507 = vld [vmem:[%s467] sm:$0xff]
          %v508 = vld [vmem:[%s467 + $0x8] sm:$0xff]
          %509 = vst.msk [vmem:[#allocation3] sm:$0xff] %vm504, %v507
          %510 = vst.msk [vmem:[#allocation3 + $0x8] sm:$0xff] %vm504, %v508
        $region60: #{sasrec_forward.1} parent=55 // pred_fallthru
          _
        %v511 = vld [vmem:[%s479] sm:$0xf]
        %v512 = vld [vmem:[%s479 + $0x4] sm:$0xf]
        %v513 = vld [vmem:[%s479 + $0x8] sm:$0xf]
        %v514 = vld [vmem:[%s479 + $0xc] sm:$0xf]
        %s515 = scalar_lea.vmem %s479, 16
        %v516 = vld [vmem:[%s515] sm:$0xf]
        %v517 = vld [vmem:[%s515 + $0x4] sm:$0xf]
        %v518 = vld [vmem:[%s515 + $0x8] sm:$0xf]
        %v519 = vld [vmem:[%s515 + $0xc] sm:$0xf]
        %s520 = scalar_lea.vmem %s479, 32
        %v521 = vld [vmem:[%s520] sm:$0xf]
        %v522 = vld [vmem:[%s520 + $0x4] sm:$0xf]
        %v523 = vld [vmem:[%s520 + $0x8] sm:$0xf]
        %v524 = vld [vmem:[%s520 + $0xc] sm:$0xf]
        %s525 = scalar_lea.vmem %s479, 48
        %v526 = vld [vmem:[%s525] sm:$0xf]
        %v527 = vld [vmem:[%s525 + $0x4] sm:$0xf]
        %v528 = vld [vmem:[%s525 + $0x8] sm:$0xf]
        %v529 = vld [vmem:[%s525 + $0xc] sm:$0xf]
        %s530 = scalar_lea.vmem %s479, 64
        %v531 = vld [vmem:[%s530] sm:$0xf]
        %v532 = vld [vmem:[%s530 + $0x4] sm:$0xf]
        %v533 = vld [vmem:[%s530 + $0x8] sm:$0xf]
        %v534 = vld [vmem:[%s530 + $0xc] sm:$0xf]
        %s535 = scalar_lea.vmem %s479, 80
        %v536 = vld [vmem:[%s535] sm:$0xf]
        %v537 = vld [vmem:[%s535 + $0x4] sm:$0xf]
        %v538 = vld [vmem:[%s535 + $0x8] sm:$0xf]
        %v539 = vld [vmem:[%s535 + $0xc] sm:$0xf]
        %s540 = scalar_lea.vmem %s479, 96
        %v541 = vld [vmem:[%s540] sm:$0xf]
        %v542 = vld [vmem:[%s540 + $0x4] sm:$0xf]
        %v543 = vld [vmem:[%s540 + $0x8] sm:$0xf]
        %v544 = vld [vmem:[%s540 + $0xc] sm:$0xf]
        %s545 = scalar_lea.vmem %s479, 112
        %v546 = vld [vmem:[%s545] sm:$0xf]
        %v547 = vld [vmem:[%s545 + $0x4] sm:$0xf]
        %v548 = vld [vmem:[%s545 + $0x8] sm:$0xf]
        %v549 = vld [vmem:[%s545 + $0xc] sm:$0xf]
        %v550 = vld [vmem:[%s484] sm:$0x1]
        %v551 = vld [vmem:[%s484 + $0x1] sm:$0x1]
        %v552 = vld [vmem:[%s484 + $0x2] sm:$0x1]
        %v553 = vld [vmem:[%s484 + $0x3] sm:$0x1]
        %v554 = vld [vmem:[%s484 + $0x4] sm:$0x1]
        %v555 = vld [vmem:[%s484 + $0x5] sm:$0x1]
        %v556 = vld [vmem:[%s484 + $0x6] sm:$0x1]
        %v557 = vld [vmem:[%s484 + $0x7] sm:$0x1]
        %v558 = vld [vmem:[%s484 + $0x8] sm:$0x1]
        %v559 = vld [vmem:[%s484 + $0x9] sm:$0x1]
        %v560 = vld [vmem:[%s484 + $0xa] sm:$0x1]
        %v561 = vld [vmem:[%s484 + $0xb] sm:$0x1]
        %v562 = vld [vmem:[#allocation2] sm:$0xff]
        %v563 = vld [vmem:[#allocation2 + $0x8] sm:$0xff]
        %v564 = vld [vmem:[#allocation3] sm:$0xff]
        %v565 = vld [vmem:[#allocation3 + $0x8] sm:$0xff]
        %vm566 = vcmask 261120
        %v567 = vsel %vm566, %v562, 0.0
        %568 = vadd.xlane.f32.xlu0 %v567
        %v569 = vpop.xlane.xlu0 %568
        %v570 = vsel %vm566, %v563, 0.0
        %571 = vadd.xlane.f32.xlu0 %v570
        %v572 = vpop.xlane.xlu0 %571
        %v573 = vrcp.pop 32.0
        %v574 = vmul.f32 %v569, %v573
        %v575 = vmul.f32 %v572, %v573
        %v576 = vsub.f32 %v562, %v574
        %v577 = vsub.f32 %v563, %v575
        %v578 = vmul.f32 %v576, %v576
        %v579 = vmul.f32 %v577, %v577
        %v580 = vsel %vm566, %v578, 0.0
        %581 = vadd.xlane.f32.xlu0 %v580
        %v582 = vpop.xlane.xlu0 %581
        %v583 = vsel %vm566, %v579, 0.0
        %584 = vadd.xlane.f32.xlu0 %v583
        %v585 = vpop.xlane.xlu0 %584
        %v586 = vmul.f32 %v582, %v573
        %v587 = vmul.f32 %v585, %v573
        %v588 = vadd.f32 %v586, 1e-08
        %v589 = vadd.f32 %v587, 1e-08
        %v590 = vrsqrt.pop %v588
        %v591 = vrsqrt.pop %v589
        %v592 = vmul.f32 %v576, %v590
        %v593 = vmul.f32 %v577, %v591
        %v594 = vlaneseq
        %v595 = vshrl.u32 %v594, 7
        %v596 = vsub.s32 0, %v595
        %v597 = vrot.slane %v556, %v596
        %v598 = vmul.f32 %v592, %v597
        %v599 = vmul.f32 %v593, %v597
        %v600 = vlaneseq
        %v601 = vshrl.u32 %v600, 7
        %v602 = vsub.s32 0, %v601
        %v603 = vrot.slane %v557, %v602
        %v604 = vadd.f32 %v598, %v603
        %v605 = vadd.f32 %v599, %v603
        %v606 = vsel %vm566, %v564, 0.0
        %607 = vadd.xlane.f32.xlu0 %v606
        %v608 = vpop.xlane.xlu0 %607
        %v609 = vsel %vm566, %v565, 0.0
        %610 = vadd.xlane.f32.xlu0 %v609
        %v611 = vpop.xlane.xlu0 %610
        %v612 = vmul.f32 %v608, %v573
        %v613 = vmul.f32 %v611, %v573
        %v614 = vsub.f32 %v564, %v612
        %v615 = vsub.f32 %v565, %v613
        %v616 = vmul.f32 %v614, %v614
        %v617 = vmul.f32 %v615, %v615
        %v618 = vsel %vm566, %v616, 0.0
        %619 = vadd.xlane.f32.xlu0 %v618
        %v620 = vpop.xlane.xlu0 %619
        %v621 = vsel %vm566, %v617, 0.0
        %622 = vadd.xlane.f32.xlu0 %v621
        %v623 = vpop.xlane.xlu0 %622
        %v624 = vmul.f32 %v620, %v573
        %v625 = vmul.f32 %v623, %v573
        %v626 = vadd.f32 %v624, 1e-08
        %v627 = vadd.f32 %v625, 1e-08
        %v628 = vrsqrt.pop %v626
        %v629 = vrsqrt.pop %v627
        %v630 = vmul.f32 %v614, %v628
        %v631 = vmul.f32 %v615, %v629
        %v632 = vmul.f32 %v630, %v597
        %v633 = vmul.f32 %v631, %v597
        %v634 = vadd.f32 %v632, %v603
        %v635 = vadd.f32 %v633, %v603
        %v636 = vpack.c.bf16 %v563, %v562
        %v637 = vpack.c.bf16 %v565, %v564
        %v638 = vpack.c.bf16 %v605, %v604
        %v639 = vpack.c.bf16 %v635, %v634
        %v640 = vlaneseq
        %v641 = vshrl.u32 %v640, 7
        %v642 = vlaneseq
        %v643 = vand.u32 %v642, 127
        %vm644 = vcmp.gt.s32.totalorder %v643, %v641
        %v645 = vlaneseq
        %v646 = vshrl.u32 %v645, 7
        %v647 = vsub.s32 0, %v646
        %v648 = vrot.slane %v550, %v647
        %v653 = vunpack.c.l.b16 %v511
        %v654 = vunpack.c.l.b16 %v512
        %v655 = vunpack.c.l.b16 %v513
        %v656 = vunpack.c.l.b16 %v514
        %v657 = vpack.c.b16 %v654, %v653
        %v658 = vpack.c.b16 %v656, %v655
        %v662 = vsel %vm566, %v638, 0
        %664 = vmatprep.subr.bf16.mxu0 0
        %665 = vmatpush1.bf16.msra.mxu0 %v657
        %666 = vmatprep.subr.bf16.mxu0 0
        %667 = vmatpush1.bf16.msra.mxu0 %v658
        %668 = vmatprep.subr.bf16.mxu0 0
        %669 = vmatpush1.bf16.msra.mxu0 0
        %670 = vmatprep.subr.bf16.mxu0 0
        %671 = vmatpush1.bf16.msra.mxu0 0
        %672 = vmatprep.subr.bf16.mxu0 0
        %673 = vmatpush1.bf16.msra.mxu0 0
        %674 = vmatprep.subr.bf16.mxu0 0
        %675 = vmatpush1.bf16.msra.mxu0 0
        %676 = vmatprep.subr.bf16.mxu0 0
        %677 = vmatpush1.bf16.msra.mxu0 0
        %678 = vmatprep.subr.bf16.mxu0 0
        %679 = vmatpush1.bf16.msra.mxu0 0
        %680 = vmatprep.subr.bf16.mxu0 0
        %681 = vmatpush1.bf16.msra.mxu0 0
        %682 = vmatprep.subr.bf16.mxu0 0
        %683 = vmatpush1.bf16.msra.mxu0 0
        %684 = vmatprep.subr.bf16.mxu0 0
        %685 = vmatpush1.bf16.msra.mxu0 0
        %686 = vmatprep.subr.bf16.mxu0 0
        %687 = vmatpush1.bf16.msra.mxu0 0
        %688 = vmatprep.subr.bf16.mxu0 0
        %689 = vmatpush1.bf16.msra.mxu0 0
        %690 = vmatprep.subr.bf16.mxu0 0
        %691 = vmatpush1.bf16.msra.mxu0 0
        %692 = vmatprep.subr.bf16.mxu0 0
        %693 = vmatpush1.bf16.msra.mxu0 0
        %694 = vmatprep.subr.bf16.mxu0 0
        %695 = vmatpush1.bf16.msra.mxu0 0
        %696 = vmatprep.mubr.bf16.mxu0 0
        %697 = vmatmul.mubr.bf16.gmra.mrb[0].mxu0 %v662
        %v698 = vpop.f32.mrb[0].mxu0
        %v699 = vadd.f32 %v648, %v698
        %v700 = vpop.f32.mrb[0].mxu0
        %v701 = vpop.f32.mrb[0].mxu0
        %v702 = vadd.f32 %v648, %v701
        %v703 = vpop.f32.mrb[0].mxu0
        %704 = vdwg.mxu0
        %v705 = vmul.f32 %v699, 0.25
        %v706 = vmul.f32 %v702, 0.25
        %v707 = vlaneseq
        %v708 = vshrl.u32 %v707, 7
        %v709 = vsub.s32 0, %v708
        %v710 = vrot.slane %v552, %v709
        %v715 = vunpack.c.l.b16 %v521
        %v716 = vunpack.c.l.b16 %v522
        %v717 = vunpack.c.l.b16 %v523
        %v718 = vunpack.c.l.b16 %v524
        %v719 = vpack.c.b16 %v716, %v715
        %v720 = vpack.c.b16 %v718, %v717
        %v724 = vsel %vm566, %v639, 0
        %726 = vmatprep.subr.bf16.mxu0 0
        %727 = vmatpush1.bf16.msra.mxu0 %v719
        %728 = vmatprep.subr.bf16.mxu0 0
        %729 = vmatpush1.bf16.msra.mxu0 %v720
        %730 = vmatprep.subr.bf16.mxu0 0
        %731 = vmatpush1.bf16.msra.mxu0 0
        %732 = vmatprep.subr.bf16.mxu0 0
        %733 = vmatpush1.bf16.msra.mxu0 0
        %734 = vmatprep.subr.bf16.mxu0 0
        %735 = vmatpush1.bf16.msra.mxu0 0
        %736 = vmatprep.subr.bf16.mxu0 0
        %737 = vmatpush1.bf16.msra.mxu0 0
        %738 = vmatprep.subr.bf16.mxu0 0
        %739 = vmatpush1.bf16.msra.mxu0 0
        %740 = vmatprep.subr.bf16.mxu0 0
        %741 = vmatpush1.bf16.msra.mxu0 0
        %742 = vmatprep.subr.bf16.mxu0 0
        %743 = vmatpush1.bf16.msra.mxu0 0
        %744 = vmatprep.subr.bf16.mxu0 0
        %745 = vmatpush1.bf16.msra.mxu0 0
        %746 = vmatprep.subr.bf16.mxu0 0
        %747 = vmatpush1.bf16.msra.mxu0 0
        %748 = vmatprep.subr.bf16.mxu0 0
        %749 = vmatpush1.bf16.msra.mxu0 0
        %750 = vmatprep.subr.bf16.mxu0 0
        %751 = vmatpush1.bf16.msra.mxu0 0
        %752 = vmatprep.subr.bf16.mxu0 0
        %753 = vmatpush1.bf16.msra.mxu0 0
        %754 = vmatprep.subr.bf16.mxu0 0
        %755 = vmatpush1.bf16.msra.mxu0 0
        %756 = vmatprep.subr.bf16.mxu0 0
        %757 = vmatpush1.bf16.msra.mxu0 0
        %758 = vmatprep.mubr.bf16.mxu0 0
        %759 = vmatmul.mubr.bf16.gmra.mrb[0].mxu0 %v724
        %v760 = vpop.f32.mrb[0].mxu0
        %v761 = vadd.f32 %v710, %v760
        %v762 = vpop.f32.mrb[0].mxu0
        %v763 = vpop.f32.mrb[0].mxu0
        %v764 = vadd.f32 %v710, %v763
        %v765 = vpop.f32.mrb[0].mxu0
        %766 = vdwg.mxu0
        %v767 = vmul.f32 %v761, 0.25
        %v768 = vmul.f32 %v764, 0.25
        %v769 = vlaneseq
        %v770 = vshrl.u32 %v769, 7
        %v771 = vsub.s32 0, %v770
        %v772 = vrot.slane %v551, %v771
        %v777 = vunpack.c.l.b16 %v516
        %v778 = vunpack.c.l.b16 %v517
        %v779 = vunpack.c.l.b16 %v518
        %v780 = vunpack.c.l.b16 %v519
        %v781 = vpack.c.b16 %v778, %v777
        %v782 = vpack.c.b16 %v780, %v779
        %v786 = vsel %vm566, %v636, 0
        %788 = vmatprep.subr.bf16.mxu0 0
        %789 = vmatpush1.bf16.msra.mxu0 %v781
        %790 = vmatprep.subr.bf16.mxu0 0
        %791 = vmatpush1.bf16.msra.mxu0 %v782
        %792 = vmatprep.subr.bf16.mxu0 0
        %793 = vmatpush1.bf16.msra.mxu0 0
        %794 = vmatprep.subr.bf16.mxu0 0
        %795 = vmatpush1.bf16.msra.mxu0 0
        %796 = vmatprep.subr.bf16.mxu0 0
        %797 = vmatpush1.bf16.msra.mxu0 0
        %798 = vmatprep.subr.bf16.mxu0 0
        %799 = vmatpush1.bf16.msra.mxu0 0
        %800 = vmatprep.subr.bf16.mxu0 0
        %801 = vmatpush1.bf16.msra.mxu0 0
        %802 = vmatprep.subr.bf16.mxu0 0
        %803 = vmatpush1.bf16.msra.mxu0 0
        %804 = vmatprep.subr.bf16.mxu0 0
        %805 = vmatpush1.bf16.msra.mxu0 0
        %806 = vmatprep.subr.bf16.mxu0 0
        %807 = vmatpush1.bf16.msra.mxu0 0
        %808 = vmatprep.subr.bf16.mxu0 0
        %809 = vmatpush1.bf16.msra.mxu0 0
        %810 = vmatprep.subr.bf16.mxu0 0
        %811 = vmatpush1.bf16.msra.mxu0 0
        %812 = vmatprep.subr.bf16.mxu0 0
        %813 = vmatpush1.bf16.msra.mxu0 0
        %814 = vmatprep.subr.bf16.mxu0 0
        %815 = vmatpush1.bf16.msra.mxu0 0
        %816 = vmatprep.subr.bf16.mxu0 0
        %817 = vmatpush1.bf16.msra.mxu0 0
        %818 = vmatprep.subr.bf16.mxu0 0
        %819 = vmatpush1.bf16.msra.mxu0 0
        %820 = vmatprep.mubr.bf16.mxu0 0
        %821 = vmatmul.mubr.bf16.gmra.mrb[0].mxu0 %v786
        %v822 = vpop.f32.mrb[0].mxu0
        %v823 = vadd.f32 %v772, %v822
        %v824 = vpop.f32.mrb[0].mxu0
        %v825 = vpop.f32.mrb[0].mxu0
        %v826 = vadd.f32 %v772, %v825
        %v827 = vpop.f32.mrb[0].mxu0
        %828 = vdwg.mxu0
        %v829 = vlaneseq
        %v830 = vshrl.u32 %v829, 7
        %v831 = vsub.s32 0, %v830
        %v832 = vrot.slane %v553, %v831
        %v837 = vunpack.c.l.b16 %v526
        %v838 = vunpack.c.l.b16 %v527
        %v839 = vunpack.c.l.b16 %v528
        %v840 = vunpack.c.l.b16 %v529
        %v841 = vpack.c.b16 %v838, %v837
        %v842 = vpack.c.b16 %v840, %v839
        %v846 = vsel %vm566, %v637, 0
        %848 = vmatprep.subr.bf16.mxu0 0
        %849 = vmatpush1.bf16.msra.mxu0 %v841
        %850 = vmatprep.subr.bf16.mxu0 0
        %851 = vmatpush1.bf16.msra.mxu0 %v842
        %852 = vmatprep.subr.bf16.mxu0 0
        %853 = vmatpush1.bf16.msra.mxu0 0
        %854 = vmatprep.subr.bf16.mxu0 0
        %855 = vmatpush1.bf16.msra.mxu0 0
        %856 = vmatprep.subr.bf16.mxu0 0
        %857 = vmatpush1.bf16.msra.mxu0 0
        %858 = vmatprep.subr.bf16.mxu0 0
        %859 = vmatpush1.bf16.msra.mxu0 0
        %860 = vmatprep.subr.bf16.mxu0 0
        %861 = vmatpush1.bf16.msra.mxu0 0
        %862 = vmatprep.subr.bf16.mxu0 0
        %863 = vmatpush1.bf16.msra.mxu0 0
        %864 = vmatprep.subr.bf16.mxu0 0
        %865 = vmatpush1.bf16.msra.mxu0 0
        %866 = vmatprep.subr.bf16.mxu0 0
        %867 = vmatpush1.bf16.msra.mxu0 0
        %868 = vmatprep.subr.bf16.mxu0 0
        %869 = vmatpush1.bf16.msra.mxu0 0
        %870 = vmatprep.subr.bf16.mxu0 0
        %871 = vmatpush1.bf16.msra.mxu0 0
        %872 = vmatprep.subr.bf16.mxu0 0
        %873 = vmatpush1.bf16.msra.mxu0 0
        %874 = vmatprep.subr.bf16.mxu0 0
        %875 = vmatpush1.bf16.msra.mxu0 0
        %876 = vmatprep.subr.bf16.mxu0 0
        %877 = vmatpush1.bf16.msra.mxu0 0
        %878 = vmatprep.subr.bf16.mxu0 0
        %879 = vmatpush1.bf16.msra.mxu0 0
        %880 = vmatprep.mubr.bf16.mxu0 0
        %881 = vmatmul.mubr.bf16.gmra.mrb[0].mxu0 %v846
        %v882 = vpop.f32.mrb[0].mxu0
        %v883 = vadd.f32 %v832, %v882
        %v884 = vpop.f32.mrb[0].mxu0
        %v885 = vpop.f32.mrb[0].mxu0
        %v886 = vadd.f32 %v832, %v885
        %v887 = vpop.f32.mrb[0].mxu0
        %888 = vdwg.mxu0
        %v889 = vlaneseq
        %v890 = vshrl.u32 %v889, 7
        %v891 = vsub.s32 0, %v890
        %v892 = vrot.slane %v554, %v891
        %v897 = vunpack.c.l.b16 %v531
        %v898 = vunpack.c.l.b16 %v532
        %v899 = vunpack.c.l.b16 %v533
        %v900 = vunpack.c.l.b16 %v534
        %v901 = vpack.c.b16 %v898, %v897
        %v902 = vpack.c.b16 %v900, %v899
        %905 = vmatprep.subr.bf16.mxu0 0
        %906 = vmatpush1.bf16.msra.mxu0 %v901
        %907 = vmatprep.subr.bf16.mxu0 0
        %908 = vmatpush1.bf16.msra.mxu0 %v902
        %909 = vmatprep.subr.bf16.mxu0 0
        %910 = vmatpush1.bf16.msra.mxu0 0
        %911 = vmatprep.subr.bf16.mxu0 0
        %912 = vmatpush1.bf16.msra.mxu0 0
        %913 = vmatprep.subr.bf16.mxu0 0
        %914 = vmatpush1.bf16.msra.mxu0 0
        %915 = vmatprep.subr.bf16.mxu0 0
        %916 = vmatpush1.bf16.msra.mxu0 0
        %917 = vmatprep.subr.bf16.mxu0 0
        %918 = vmatpush1.bf16.msra.mxu0 0
        %919 = vmatprep.subr.bf16.mxu0 0
        %920 = vmatpush1.bf16.msra.mxu0 0
        %921 = vmatprep.subr.bf16.mxu0 0
        %922 = vmatpush1.bf16.msra.mxu0 0
        %923 = vmatprep.subr.bf16.mxu0 0
        %924 = vmatpush1.bf16.msra.mxu0 0
        %925 = vmatprep.subr.bf16.mxu0 0
        %926 = vmatpush1.bf16.msra.mxu0 0
        %927 = vmatprep.subr.bf16.mxu0 0
        %928 = vmatpush1.bf16.msra.mxu0 0
        %929 = vmatprep.subr.bf16.mxu0 0
        %930 = vmatpush1.bf16.msra.mxu0 0
        %931 = vmatprep.subr.bf16.mxu0 0
        %932 = vmatpush1.bf16.msra.mxu0 0
        %933 = vmatprep.subr.bf16.mxu0 0
        %934 = vmatpush1.bf16.msra.mxu0 0
        %935 = vmatprep.subr.bf16.mxu0 0
        %936 = vmatpush1.bf16.msra.mxu0 0
        %937 = vmatprep.mubr.bf16.mxu0 0
        %938 = vmatmul.mubr.bf16.gmra.mrb[0].mxu0 %v786
        %v939 = vpop.f32.mrb[0].mxu0
        %v940 = vadd.f32 %v892, %v939
        %v941 = vpop.f32.mrb[0].mxu0
        %v942 = vpop.f32.mrb[0].mxu0
        %v943 = vadd.f32 %v892, %v942
        %v944 = vpop.f32.mrb[0].mxu0
        %945 = vdwg.mxu0
        %v946 = vpack.c.bf16 %v705, %v705
        %v947 = vpack.c.bf16 %v706, %v706
        %v948 = vpack.c.bf16 %v823, %v823
        %v949 = vpack.c.bf16 %v826, %v826
        %vm950 = vcmask 130048
        %v952 = vsel %vm950, %v946, 0
        %v955 = vsel %vm950, %v948, 0
        %957 = vmatprep.subr.bf16.mxu0 0
        %958 = vmatpush1.bf16.xpose.msra.mxu0 %v955
        %959 = vmatprep.subr.bf16.mxu0 0
        %960 = vmatpush1.bf16.xpose.msra.mxu0 0
        %961 = vmatprep.subr.bf16.mxu0 0
        %962 = vmatpush1.bf16.xpose.msra.mxu0 0
        %963 = vmatprep.subr.bf16.mxu0 0
        %964 = vmatpush1.bf16.xpose.msra.mxu0 0
        %965 = vmatprep.subr.bf16.mxu0 0
        %966 = vmatpush1.bf16.xpose.msra.mxu0 0
        %967 = vmatprep.subr.bf16.mxu0 0
        %968 = vmatpush1.bf16.xpose.msra.mxu0 0
        %969 = vmatprep.subr.bf16.mxu0 0
        %970 = vmatpush1.bf16.xpose.msra.mxu0 0
        %971 = vmatprep.subr.bf16.mxu0 0
        %972 = vmatpush1.bf16.xpose.msra.mxu0 0
        %973 = vmatprep.subr.bf16.mxu0 0
        %974 = vmatpush1.bf16.xpose.msra.mxu0 0
        %975 = vmatprep.subr.bf16.mxu0 0
        %976 = vmatpush1.bf16.xpose.msra.mxu0 0
        %977 = vmatprep.subr.bf16.mxu0 0
        %978 = vmatpush1.bf16.xpose.msra.mxu0 0
        %979 = vmatprep.subr.bf16.mxu0 0
        %980 = vmatpush1.bf16.xpose.msra.mxu0 0
        %981 = vmatprep.subr.bf16.mxu0 0
        %982 = vmatpush1.bf16.xpose.msra.mxu0 0
        %983 = vmatprep.subr.bf16.mxu0 0
        %984 = vmatpush1.bf16.xpose.msra.mxu0 0
        %985 = vmatprep.subr.bf16.mxu0 0
        %986 = vmatpush1.bf16.xpose.msra.mxu0 0
        %987 = vmatprep.subr.bf16.mxu0 0
        %988 = vmatpush1.bf16.xpose.msra.mxu0 0
        %989 = vmatprep.mubr.bf16.mxu0 0
        %990 = vmatmul.mubr.bf16.gmra.mrb[0].mxu0 %v952
        %v991 = vpop.f32.mrb[0].mxu0
        %v992 = vadd.f32 0.0, %v991
        %v993 = vpop.f32.mrb[0].mxu0
        %v994 = vpop.f32.mrb[0].mxu0
        %v995 = vpop.f32.mrb[0].mxu0
        %996 = vdwg.mxu0
        %v998 = vsel %vm950, %v947, 0
        %v1001 = vsel %vm950, %v949, 0
        %1003 = vmatprep.subr.bf16.mxu0 0
        %1004 = vmatpush1.bf16.xpose.msra.mxu0 %v1001
        %1005 = vmatprep.subr.bf16.mxu0 0
        %1006 = vmatpush1.bf16.xpose.msra.mxu0 0
        %1007 = vmatprep.subr.bf16.mxu0 0
        %1008 = vmatpush1.bf16.xpose.msra.mxu0 0
        %1009 = vmatprep.subr.bf16.mxu0 0
        %1010 = vmatpush1.bf16.xpose.msra.mxu0 0
        %1011 = vmatprep.subr.bf16.mxu0 0
        %1012 = vmatpush1.bf16.xpose.msra.mxu0 0
        %1013 = vmatprep.subr.bf16.mxu0 0
        %1014 = vmatpush1.bf16.xpose.msra.mxu0 0
        %1015 = vmatprep.subr.bf16.mxu0 0
        %1016 = vmatpush1.bf16.xpose.msra.mxu0 0
        %1017 = vmatprep.subr.bf16.mxu0 0
        %1018 = vmatpush1.bf16.xpose.msra.mxu0 0
        %1019 = vmatprep.subr.bf16.mxu0 0
        %1020 = vmatpush1.bf16.xpose.msra.mxu0 0
        %1021 = vmatprep.subr.bf16.mxu0 0
        %1022 = vmatpush1.bf16.xpose.msra.mxu0 0
        %1023 = vmatprep.subr.bf16.mxu0 0
        %1024 = vmatpush1.bf16.xpose.msra.mxu0 0
        %1025 = vmatprep.subr.bf16.mxu0 0
        %1026 = vmatpush1.bf16.xpose.msra.mxu0 0
        %1027 = vmatprep.subr.bf16.mxu0 0
        %1028 = vmatpush1.bf16.xpose.msra.mxu0 0
        %1029 = vmatprep.subr.bf16.mxu0 0
        %1030 = vmatpush1.bf16.xpose.msra.mxu0 0
        %1031 = vmatprep.subr.bf16.mxu0 0
        %1032 = vmatpush1.bf16.xpose.msra.mxu0 0
        %1033 = vmatprep.subr.bf16.mxu0 0
        %1034 = vmatpush1.bf16.xpose.msra.mxu0 0
        %1035 = vmatprep.mubr.bf16.mxu0 0
        %1036 = vmatmul.mubr.bf16.gmra.mrb[0].mxu0 %v998
        %v1037 = vpop.f32.mrb[0].mxu0
        %v1038 = vadd.f32 0.0, %v1037
        %v1039 = vpop.f32.mrb[0].mxu0
        %v1040 = vpop.f32.mrb[0].mxu0
        %v1041 = vpop.f32.mrb[0].mxu0
        %1042 = vdwg.mxu0
        %v1043 = vpack.c.bf16 %v767, %v767
        %v1044 = vpack.c.bf16 %v768, %v768
        %v1045 = vpack.c.bf16 %v883, %v883
        %v1046 = vpack.c.bf16 %v886, %v886
        %v1048 = vsel %vm950, %v1043, 0
        %v1051 = vsel %vm950, %v1045, 0
        %1053 = vmatprep.subr.bf16.mxu0 0
        %1054 = vmatpush1.bf16.xpose.msra.mxu0 %v1051
        %1055 = vmatprep.subr.bf16.mxu0 0
        %1056 = vmatpush1.bf16.xpose.msra.mxu0 0
        %1057 = vmatprep.subr.bf16.mxu0 0
        %1058 = vmatpush1.bf16.xpose.msra.mxu0 0
        %1059 = vmatprep.subr.bf16.mxu0 0
        %1060 = vmatpush1.bf16.xpose.msra.mxu0 0
        %1061 = vmatprep.subr.bf16.mxu0 0
        %1062 = vmatpush1.bf16.xpose.msra.mxu0 0
        %1063 = vmatprep.subr.bf16.mxu0 0
        %1064 = vmatpush1.bf16.xpose.msra.mxu0 0
        %1065 = vmatprep.subr.bf16.mxu0 0
        %1066 = vmatpush1.bf16.xpose.msra.mxu0 0
        %1067 = vmatprep.subr.bf16.mxu0 0
        %1068 = vmatpush1.bf16.xpose.msra.mxu0 0
        %1069 = vmatprep.subr.bf16.mxu0 0
        %1070 = vmatpush1.bf16.xpose.msra.mxu0 0
        %1071 = vmatprep.subr.bf16.mxu0 0
        %1072 = vmatpush1.bf16.xpose.msra.mxu0 0
        %1073 = vmatprep.subr.bf16.mxu0 0
        %1074 = vmatpush1.bf16.xpose.msra.mxu0 0
        %1075 = vmatprep.subr.bf16.mxu0 0
        %1076 = vmatpush1.bf16.xpose.msra.mxu0 0
        %1077 = vmatprep.subr.bf16.mxu0 0
        %1078 = vmatpush1.bf16.xpose.msra.mxu0 0
        %1079 = vmatprep.subr.bf16.mxu0 0
        %1080 = vmatpush1.bf16.xpose.msra.mxu0 0
        %1081 = vmatprep.subr.bf16.mxu0 0
        %1082 = vmatpush1.bf16.xpose.msra.mxu0 0
        %1083 = vmatprep.subr.bf16.mxu0 0
        %1084 = vmatpush1.bf16.xpose.msra.mxu0 0
        %1085 = vmatprep.mubr.bf16.mxu0 0
        %1086 = vmatmul.mubr.bf16.gmra.mrb[0].mxu0 %v1048
        %v1087 = vpop.f32.mrb[0].mxu0
        %v1088 = vadd.f32 0.0, %v1087
        %v1089 = vpop.f32.mrb[0].mxu0
        %v1090 = vpop.f32.mrb[0].mxu0
        %v1091 = vpop.f32.mrb[0].mxu0
        %1092 = vdwg.mxu0
        %v1094 = vsel %vm950, %v1044, 0
        %v1097 = vsel %vm950, %v1046, 0
        %1099 = vmatprep.subr.bf16.mxu0 0
        %1100 = vmatpush1.bf16.xpose.msra.mxu0 %v1097
        %1101 = vmatprep.subr.bf16.mxu0 0
        %1102 = vmatpush1.bf16.xpose.msra.mxu0 0
        %1103 = vmatprep.subr.bf16.mxu0 0
        %1104 = vmatpush1.bf16.xpose.msra.mxu0 0
        %1105 = vmatprep.subr.bf16.mxu0 0
        %1106 = vmatpush1.bf16.xpose.msra.mxu0 0
        %1107 = vmatprep.subr.bf16.mxu0 0
        %1108 = vmatpush1.bf16.xpose.msra.mxu0 0
        %1109 = vmatprep.subr.bf16.mxu0 0
        %1110 = vmatpush1.bf16.xpose.msra.mxu0 0
        %1111 = vmatprep.subr.bf16.mxu0 0
        %1112 = vmatpush1.bf16.xpose.msra.mxu0 0
        %1113 = vmatprep.subr.bf16.mxu0 0
        %1114 = vmatpush1.bf16.xpose.msra.mxu0 0
        %1115 = vmatprep.subr.bf16.mxu0 0
        %1116 = vmatpush1.bf16.xpose.msra.mxu0 0
        %1117 = vmatprep.subr.bf16.mxu0 0
        %1118 = vmatpush1.bf16.xpose.msra.mxu0 0
        %1119 = vmatprep.subr.bf16.mxu0 0
        %1120 = vmatpush1.bf16.xpose.msra.mxu0 0
        %1121 = vmatprep.subr.bf16.mxu0 0
        %1122 = vmatpush1.bf16.xpose.msra.mxu0 0
        %1123 = vmatprep.subr.bf16.mxu0 0
        %1124 = vmatpush1.bf16.xpose.msra.mxu0 0
        %1125 = vmatprep.subr.bf16.mxu0 0
        %1126 = vmatpush1.bf16.xpose.msra.mxu0 0
        %1127 = vmatprep.subr.bf16.mxu0 0
        %1128 = vmatpush1.bf16.xpose.msra.mxu0 0
        %1129 = vmatprep.subr.bf16.mxu0 0
        %1130 = vmatpush1.bf16.xpose.msra.mxu0 0
        %1131 = vmatprep.mubr.bf16.mxu0 0
        %1132 = vmatmul.mubr.bf16.gmra.mrb[0].mxu0 %v1094
        %v1133 = vpop.f32.mrb[0].mxu0
        %v1134 = vadd.f32 0.0, %v1133
        %v1135 = vpop.f32.mrb[0].mxu0
        %v1136 = vpop.f32.mrb[0].mxu0
        %v1137 = vpop.f32.mrb[0].mxu0
        %1138 = vdwg.mxu0
        %v1139 = vsel %vm644, 1, 0
        %vm1140 = vcmp.eq.s32.totalorder %v1139, 1
        %v1141 = vsel %vm1140, %v1088, %v992
        %v1142 = vsel %vm1140, %v1134, %v1038
        %vm1143 = vcmask 64512
        %v1144 = vsel %vm1143, %v1141, -inf
        %1145 = vmax.xlane.f32.xlu0 %v1144
        %v1146 = vpop.xlane.xlu0 %1145
        %v1147 = vsel %vm1143, %v1142, -inf
        %1148 = vmax.xlane.f32.xlu0 %v1147
        %v1149 = vpop.xlane.xlu0 %1148
        %v1150 = vsub.f32 %v1141, %v1146
        %v1151 = vsub.f32 %v1142, %v1149
        %v1152 = vmul.f32 %v1150, 1.442695
        %v1153 = vpow.pop %v1152
        %v1154 = vmul.f32 %v1151, 1.442695
        %v1155 = vpow.pop %v1154
        %v1156 = vsel %vm1143, %v1153, 0.0
        %1157 = vadd.xlane.f32.xlu0 %v1156
        %v1158 = vpop.xlane.xlu0 %1157
        %v1159 = vsel %vm1143, %v1155, 0.0
        %1160 = vadd.xlane.f32.xlu0 %v1159
        %v1161 = vpop.xlane.xlu0 %1160
        %v1162 = vrcp.pop %v1158
        %v1163 = vrcp.pop %v1161
        %v1164 = vmul.f32 %v1153, %v1162
        %v1165 = vmul.f32 %v1155, %v1163
        %v1166 = vpack.c.bf16 %v1164, %v1164
        %v1167 = vpack.c.bf16 %v1165, %v1165
        %v1168 = vpack.c.bf16 %v940, %v940
        %v1169 = vpack.c.bf16 %v943, %v943
        %v1171 = vsel %vm1143, %v1166, 0
        %vm1173 = vcmask 1043456
        %v1175 = vsel %vm1173, %v1168, 0
        %1177 = vmatprep.subr.bf16.mxu0 0
        %1178 = vmatpush1.bf16.msra.mxu0 %v1175
        %1179 = vmatprep.subr.bf16.mxu0 0
        %1180 = vmatpush1.bf16.msra.mxu0 0
        %1181 = vmatprep.subr.bf16.mxu0 0
        %1182 = vmatpush1.bf16.msra.mxu0 0
        %1183 = vmatprep.subr.bf16.mxu0 0
        %1184 = vmatpush1.bf16.msra.mxu0 0
        %1185 = vmatprep.subr.bf16.mxu0 0
        %1186 = vmatpush1.bf16.msra.mxu0 0
        %1187 = vmatprep.subr.bf16.mxu0 0
        %1188 = vmatpush1.bf16.msra.mxu0 0
        %1189 = vmatprep.subr.bf16.mxu0 0
        %1190 = vmatpush1.bf16.msra.mxu0 0
        %1191 = vmatprep.subr.bf16.mxu0 0
        %1192 = vmatpush1.bf16.msra.mxu0 0
        %1193 = vmatprep.subr.bf16.mxu0 0
        %1194 = vmatpush1.bf16.msra.mxu0 0
        %1195 = vmatprep.subr.bf16.mxu0 0
        %1196 = vmatpush1.bf16.msra.mxu0 0
        %1197 = vmatprep.subr.bf16.mxu0 0
        %1198 = vmatpush1.bf16.msra.mxu0 0
        %1199 = vmatprep.subr.bf16.mxu0 0
        %1200 = vmatpush1.bf16.msra.mxu0 0
        %1201 = vmatprep.subr.bf16.mxu0 0
        %1202 = vmatpush1.bf16.msra.mxu0 0
        %1203 = vmatprep.subr.bf16.mxu0 0
        %1204 = vmatpush1.bf16.msra.mxu0 0
        %1205 = vmatprep.subr.bf16.mxu0 0
        %1206 = vmatpush1.bf16.msra.mxu0 0
        %1207 = vmatprep.subr.bf16.mxu0 0
        %1208 = vmatpush1.bf16.msra.mxu0 0
        %1209 = vmatprep.mubr.bf16.mxu0 0
        %1210 = vmatmul.mubr.bf16.gmra.mrb[0].mxu0 %v1171
        %v1211 = vpop.f32.mrb[0].mxu0
        %v1212 = vadd.f32 0.0, %v1211
        %v1213 = vpop.f32.mrb[0].mxu0
        %v1214 = vpop.f32.mrb[0].mxu0
        %v1215 = vpop.f32.mrb[0].mxu0
        %1216 = vdwg.mxu0
        %v1218 = vsel %vm1143, %v1167, 0
        %v1221 = vsel %vm1173, %v1169, 0
        %1223 = vmatprep.subr.bf16.mxu0 0
        %1224 = vmatpush1.bf16.msra.mxu0 %v1221
        %1225 = vmatprep.subr.bf16.mxu0 0
        %1226 = vmatpush1.bf16.msra.mxu0 0
        %1227 = vmatprep.subr.bf16.mxu0 0
        %1228 = vmatpush1.bf16.msra.mxu0 0
        %1229 = vmatprep.subr.bf16.mxu0 0
        %1230 = vmatpush1.bf16.msra.mxu0 0
        %1231 = vmatprep.subr.bf16.mxu0 0
        %1232 = vmatpush1.bf16.msra.mxu0 0
        %1233 = vmatprep.subr.bf16.mxu0 0
        %1234 = vmatpush1.bf16.msra.mxu0 0
        %1235 = vmatprep.subr.bf16.mxu0 0
        %1236 = vmatpush1.bf16.msra.mxu0 0
        %1237 = vmatprep.subr.bf16.mxu0 0
        %1238 = vmatpush1.bf16.msra.mxu0 0
        %1239 = vmatprep.subr.bf16.mxu0 0
        %1240 = vmatpush1.bf16.msra.mxu0 0
        %1241 = vmatprep.subr.bf16.mxu0 0
        %1242 = vmatpush1.bf16.msra.mxu0 0
        %1243 = vmatprep.subr.bf16.mxu0 0
        %1244 = vmatpush1.bf16.msra.mxu0 0
        %1245 = vmatprep.subr.bf16.mxu0 0
        %1246 = vmatpush1.bf16.msra.mxu0 0
        %1247 = vmatprep.subr.bf16.mxu0 0
        %1248 = vmatpush1.bf16.msra.mxu0 0
        %1249 = vmatprep.subr.bf16.mxu0 0
        %1250 = vmatpush1.bf16.msra.mxu0 0
        %1251 = vmatprep.subr.bf16.mxu0 0
        %1252 = vmatpush1.bf16.msra.mxu0 0
        %1253 = vmatprep.subr.bf16.mxu0 0
        %1254 = vmatpush1.bf16.msra.mxu0 0
        %1255 = vmatprep.mubr.bf16.mxu0 0
        %1256 = vmatmul.mubr.bf16.gmra.mrb[0].mxu0 %v1218
        %v1257 = vpop.f32.mrb[0].mxu0
        %v1258 = vadd.f32 0.0, %v1257
        %v1259 = vpop.f32.mrb[0].mxu0
        %v1260 = vpop.f32.mrb[0].mxu0
        %v1261 = vpop.f32.mrb[0].mxu0
        %1262 = vdwg.mxu0
        %1263 = vrot.lane.b32.xlu0 %v657, 112
        %v1264 = vpop.permute.xlu0 %1263
        %1265 = vrot.lane.b32.xlu0 %v658, 112
        %v1266 = vpop.permute.xlu0 %1265
        %1270 = vrot.lane.b32.xlu0 %v648, 112
        %v1271 = vpop.permute.xlu0 %1270
        %1273 = vmatprep.subr.bf16.mxu0 0
        %1274 = vmatpush1.bf16.msra.mxu0 %v1264
        %1275 = vmatprep.subr.bf16.mxu0 0
        %1276 = vmatpush1.bf16.msra.mxu0 %v1266
        %1277 = vmatprep.subr.bf16.mxu0 0
        %1278 = vmatpush1.bf16.msra.mxu0 0
        %1279 = vmatprep.subr.bf16.mxu0 0
        %1280 = vmatpush1.bf16.msra.mxu0 0
        %1281 = vmatprep.subr.bf16.mxu0 0
        %1282 = vmatpush1.bf16.msra.mxu0 0
        %1283 = vmatprep.subr.bf16.mxu0 0
        %1284 = vmatpush1.bf16.msra.mxu0 0
        %1285 = vmatprep.subr.bf16.mxu0 0
        %1286 = vmatpush1.bf16.msra.mxu0 0
        %1287 = vmatprep.subr.bf16.mxu0 0
        %1288 = vmatpush1.bf16.msra.mxu0 0
        %1289 = vmatprep.subr.bf16.mxu0 0
        %1290 = vmatpush1.bf16.msra.mxu0 0
        %1291 = vmatprep.subr.bf16.mxu0 0
        %1292 = vmatpush1.bf16.msra.mxu0 0
        %1293 = vmatprep.subr.bf16.mxu0 0
        %1294 = vmatpush1.bf16.msra.mxu0 0
        %1295 = vmatprep.subr.bf16.mxu0 0
        %1296 = vmatpush1.bf16.msra.mxu0 0
        %1297 = vmatprep.subr.bf16.mxu0 0
        %1298 = vmatpush1.bf16.msra.mxu0 0
        %1299 = vmatprep.subr.bf16.mxu0 0
        %1300 = vmatpush1.bf16.msra.mxu0 0
        %1301 = vmatprep.subr.bf16.mxu0 0
        %1302 = vmatpush1.bf16.msra.mxu0 0
        %1303 = vmatprep.subr.bf16.mxu0 0
        %1304 = vmatpush1.bf16.msra.mxu0 0
        %1305 = vmatprep.mubr.bf16.mxu0 0
        %1306 = vmatmul.mubr.bf16.gmra.mrb[0].mxu0 %v662
        %v1307 = vpop.f32.mrb[0].mxu0
        %v1308 = vadd.f32 %v1271, %v1307
        %v1309 = vpop.f32.mrb[0].mxu0
        %v1310 = vpop.f32.mrb[0].mxu0
        %v1311 = vadd.f32 %v1271, %v1310
        %v1312 = vpop.f32.mrb[0].mxu0
        %1313 = vdwg.mxu0
        %v1314 = vmul.f32 %v1308, 0.25
        %v1315 = vmul.f32 %v1311, 0.25
        %1316 = vrot.lane.b32.xlu0 %v719, 112
        %v1317 = vpop.permute.xlu0 %1316
        %1318 = vrot.lane.b32.xlu0 %v720, 112
        %v1319 = vpop.permute.xlu0 %1318
        %1323 = vrot.lane.b32.xlu0 %v710, 112
        %v1324 = vpop.permute.xlu0 %1323
        %1326 = vmatprep.subr.bf16.mxu0 0
        %1327 = vmatpush1.bf16.msra.mxu0 %v1317
        %1328 = vmatprep.subr.bf16.mxu0 0
        %1329 = vmatpush1.bf16.msra.mxu0 %v1319
        %1330 = vmatprep.subr.bf16.mxu0 0
        %1331 = vmatpush1.bf16.msra.mxu0 0
        %1332 = vmatprep.subr.bf16.mxu0 0
        %1333 = vmatpush1.bf16.msra.mxu0 0
        %1334 = vmatprep.subr.bf16.mxu0 0
        %1335 = vmatpush1.bf16.msra.mxu0 0
        %1336 = vmatprep.subr.bf16.mxu0 0
        %1337 = vmatpush1.bf16.msra.mxu0 0
        %1338 = vmatprep.subr.bf16.mxu0 0
        %1339 = vmatpush1.bf16.msra.mxu0 0
        %1340 = vmatprep.subr.bf16.mxu0 0
        %1341 = vmatpush1.bf16.msra.mxu0 0
        %1342 = vmatprep.subr.bf16.mxu0 0
        %1343 = vmatpush1.bf16.msra.mxu0 0
        %1344 = vmatprep.subr.bf16.mxu0 0
        %1345 = vmatpush1.bf16.msra.mxu0 0
        %1346 = vmatprep.subr.bf16.mxu0 0
        %1347 = vmatpush1.bf16.msra.mxu0 0
        %1348 = vmatprep.subr.bf16.mxu0 0
        %1349 = vmatpush1.bf16.msra.mxu0 0
        %1350 = vmatprep.subr.bf16.mxu0 0
        %1351 = vmatpush1.bf16.msra.mxu0 0
        %1352 = vmatprep.subr.bf16.mxu0 0
        %1353 = vmatpush1.bf16.msra.mxu0 0
        %1354 = vmatprep.subr.bf16.mxu0 0
        %1355 = vmatpush1.bf16.msra.mxu0 0
        %1356 = vmatprep.subr.bf16.mxu0 0
        %1357 = vmatpush1.bf16.msra.mxu0 0
        %1358 = vmatprep.mubr.bf16.mxu0 0
        %1359 = vmatmul.mubr.bf16.gmra.mrb[0].mxu0 %v724
        %v1360 = vpop.f32.mrb[0].mxu0
        %v1361 = vadd.f32 %v1324, %v1360
        %v1362 = vpop.f32.mrb[0].mxu0
        %v1363 = vpop.f32.mrb[0].mxu0
        %v1364 = vadd.f32 %v1324, %v1363
        %v1365 = vpop.f32.mrb[0].mxu0
        %1366 = vdwg.mxu0
        %v1367 = vmul.f32 %v1361, 0.25
        %v1368 = vmul.f32 %v1364, 0.25
        %1369 = vrot.lane.b32.xlu0 %v781, 112
        %v1370 = vpop.permute.xlu0 %1369
        %1371 = vrot.lane.b32.xlu0 %v782, 112
        %v1372 = vpop.permute.xlu0 %1371
        %1376 = vrot.lane.b32.xlu0 %v772, 112
        %v1377 = vpop.permute.xlu0 %1376
        %1379 = vmatprep.subr.bf16.mxu0 0
        %1380 = vmatpush1.bf16.msra.mxu0 %v1370
        %1381 = vmatprep.subr.bf16.mxu0 0
        %1382 = vmatpush1.bf16.msra.mxu0 %v1372
        %1383 = vmatprep.subr.bf16.mxu0 0
        %1384 = vmatpush1.bf16.msra.mxu0 0
        %1385 = vmatprep.subr.bf16.mxu0 0
        %1386 = vmatpush1.bf16.msra.mxu0 0
        %1387 = vmatprep.subr.bf16.mxu0 0
        %1388 = vmatpush1.bf16.msra.mxu0 0
        %1389 = vmatprep.subr.bf16.mxu0 0
        %1390 = vmatpush1.bf16.msra.mxu0 0
        %1391 = vmatprep.subr.bf16.mxu0 0
        %1392 = vmatpush1.bf16.msra.mxu0 0
        %1393 = vmatprep.subr.bf16.mxu0 0
        %1394 = vmatpush1.bf16.msra.mxu0 0
        %1395 = vmatprep.subr.bf16.mxu0 0
        %1396 = vmatpush1.bf16.msra.mxu0 0
        %1397 = vmatprep.subr.bf16.mxu0 0
        %1398 = vmatpush1.bf16.msra.mxu0 0
        %1399 = vmatprep.subr.bf16.mxu0 0
        %1400 = vmatpush1.bf16.msra.mxu0 0
        %1401 = vmatprep.subr.bf16.mxu0 0
        %1402 = vmatpush1.bf16.msra.mxu0 0
        %1403 = vmatprep.subr.bf16.mxu0 0
        %1404 = vmatpush1.bf16.msra.mxu0 0
        %1405 = vmatprep.subr.bf16.mxu0 0
        %1406 = vmatpush1.bf16.msra.mxu0 0
        %1407 = vmatprep.subr.bf16.mxu0 0
        %1408 = vmatpush1.bf16.msra.mxu0 0
        %1409 = vmatprep.subr.bf16.mxu0 0
        %1410 = vmatpush1.bf16.msra.mxu0 0
        %1411 = vmatprep.mubr.bf16.mxu0 0
        %1412 = vmatmul.mubr.bf16.gmra.mrb[0].mxu0 %v786
        %v1413 = vpop.f32.mrb[0].mxu0
        %v1414 = vadd.f32 %v1377, %v1413
        %v1415 = vpop.f32.mrb[0].mxu0
        %v1416 = vpop.f32.mrb[0].mxu0
        %v1417 = vadd.f32 %v1377, %v1416
        %v1418 = vpop.f32.mrb[0].mxu0
        %1419 = vdwg.mxu0
        %1420 = vrot.lane.b32.xlu0 %v841, 112
        %v1421 = vpop.permute.xlu0 %1420
        %1422 = vrot.lane.b32.xlu0 %v842, 112
        %v1423 = vpop.permute.xlu0 %1422
        %1427 = vrot.lane.b32.xlu0 %v832, 112
        %v1428 = vpop.permute.xlu0 %1427
        %1430 = vmatprep.subr.bf16.mxu0 0
        %1431 = vmatpush1.bf16.msra.mxu0 %v1421
        %1432 = vmatprep.subr.bf16.mxu0 0
        %1433 = vmatpush1.bf16.msra.mxu0 %v1423
        %1434 = vmatprep.subr.bf16.mxu0 0
        %1435 = vmatpush1.bf16.msra.mxu0 0
        %1436 = vmatprep.subr.bf16.mxu0 0
        %1437 = vmatpush1.bf16.msra.mxu0 0
        %1438 = vmatprep.subr.bf16.mxu0 0
        %1439 = vmatpush1.bf16.msra.mxu0 0
        %1440 = vmatprep.subr.bf16.mxu0 0
        %1441 = vmatpush1.bf16.msra.mxu0 0
        %1442 = vmatprep.subr.bf16.mxu0 0
        %1443 = vmatpush1.bf16.msra.mxu0 0
        %1444 = vmatprep.subr.bf16.mxu0 0
        %1445 = vmatpush1.bf16.msra.mxu0 0
        %1446 = vmatprep.subr.bf16.mxu0 0
        %1447 = vmatpush1.bf16.msra.mxu0 0
        %1448 = vmatprep.subr.bf16.mxu0 0
        %1449 = vmatpush1.bf16.msra.mxu0 0
        %1450 = vmatprep.subr.bf16.mxu0 0
        %1451 = vmatpush1.bf16.msra.mxu0 0
        %1452 = vmatprep.subr.bf16.mxu0 0
        %1453 = vmatpush1.bf16.msra.mxu0 0
        %1454 = vmatprep.subr.bf16.mxu0 0
        %1455 = vmatpush1.bf16.msra.mxu0 0
        %1456 = vmatprep.subr.bf16.mxu0 0
        %1457 = vmatpush1.bf16.msra.mxu0 0
        %1458 = vmatprep.subr.bf16.mxu0 0
        %1459 = vmatpush1.bf16.msra.mxu0 0
        %1460 = vmatprep.subr.bf16.mxu0 0
        %1461 = vmatpush1.bf16.msra.mxu0 0
        %1462 = vmatprep.mubr.bf16.mxu0 0
        %1463 = vmatmul.mubr.bf16.gmra.mrb[0].mxu0 %v846
        %v1464 = vpop.f32.mrb[0].mxu0
        %v1465 = vadd.f32 %v1428, %v1464
        %v1466 = vpop.f32.mrb[0].mxu0
        %v1467 = vpop.f32.mrb[0].mxu0
        %v1468 = vadd.f32 %v1428, %v1467
        %v1469 = vpop.f32.mrb[0].mxu0
        %1470 = vdwg.mxu0
        %1471 = vrot.lane.b32.xlu0 %v901, 112
        %v1472 = vpop.permute.xlu0 %1471
        %1473 = vrot.lane.b32.xlu0 %v902, 112
        %v1474 = vpop.permute.xlu0 %1473
        %1478 = vrot.lane.b32.xlu0 %v892, 112
        %v1479 = vpop.permute.xlu0 %1478
        %1481 = vmatprep.subr.bf16.mxu0 0
        %1482 = vmatpush1.bf16.msra.mxu0 %v1472
        %1483 = vmatprep.subr.bf16.mxu0 0
        %1484 = vmatpush1.bf16.msra.mxu0 %v1474
        %1485 = vmatprep.subr.bf16.mxu0 0
        %1486 = vmatpush1.bf16.msra.mxu0 0
        %1487 = vmatprep.subr.bf16.mxu0 0
        %1488 = vmatpush1.bf16.msra.mxu0 0
        %1489 = vmatprep.subr.bf16.mxu0 0
        %1490 = vmatpush1.bf16.msra.mxu0 0
        %1491 = vmatprep.subr.bf16.mxu0 0
        %1492 = vmatpush1.bf16.msra.mxu0 0
        %1493 = vmatprep.subr.bf16.mxu0 0
        %1494 = vmatpush1.bf16.msra.mxu0 0
        %1495 = vmatprep.subr.bf16.mxu0 0
        %1496 = vmatpush1.bf16.msra.mxu0 0
        %1497 = vmatprep.subr.bf16.mxu0 0
        %1498 = vmatpush1.bf16.msra.mxu0 0
        %1499 = vmatprep.subr.bf16.mxu0 0
        %1500 = vmatpush1.bf16.msra.mxu0 0
        %1501 = vmatprep.subr.bf16.mxu0 0
        %1502 = vmatpush1.bf16.msra.mxu0 0
        %1503 = vmatprep.subr.bf16.mxu0 0
        %1504 = vmatpush1.bf16.msra.mxu0 0
        %1505 = vmatprep.subr.bf16.mxu0 0
        %1506 = vmatpush1.bf16.msra.mxu0 0
        %1507 = vmatprep.subr.bf16.mxu0 0
        %1508 = vmatpush1.bf16.msra.mxu0 0
        %1509 = vmatprep.subr.bf16.mxu0 0
        %1510 = vmatpush1.bf16.msra.mxu0 0
        %1511 = vmatprep.subr.bf16.mxu0 0
        %1512 = vmatpush1.bf16.msra.mxu0 0
        %1513 = vmatprep.mubr.bf16.mxu0 0
        %1514 = vmatmul.mubr.bf16.gmra.mrb[0].mxu0 %v786
        %v1515 = vpop.f32.mrb[0].mxu0
        %v1516 = vadd.f32 %v1479, %v1515
        %v1517 = vpop.f32.mrb[0].mxu0
        %v1518 = vpop.f32.mrb[0].mxu0
        %v1519 = vadd.f32 %v1479, %v1518
        %v1520 = vpop.f32.mrb[0].mxu0
        %1521 = vdwg.mxu0
        %v1522 = vpack.c.bf16 %v1314, %v1314
        %v1523 = vpack.c.bf16 %v1315, %v1315
        %v1524 = vpack.c.bf16 %v1414, %v1414
        %v1525 = vpack.c.bf16 %v1417, %v1417
        %v1527 = vsel %vm950, %v1522, 0
        %v1530 = vsel %vm950, %v1524, 0
        %1532 = vmatprep.subr.bf16.mxu0 0
        %1533 = vmatpush1.bf16.xpose.msra.mxu0 %v1530
        %1534 = vmatprep.subr.bf16.mxu0 0
        %1535 = vmatpush1.bf16.xpose.msra.mxu0 0
        %1536 = vmatprep.subr.bf16.mxu0 0
        %1537 = vmatpush1.bf16.xpose.msra.mxu0 0
        %1538 = vmatprep.subr.bf16.mxu0 0
        %1539 = vmatpush1.bf16.xpose.msra.mxu0 0
        %1540 = vmatprep.subr.bf16.mxu0 0
        %1541 = vmatpush1.bf16.xpose.msra.mxu0 0
        %1542 = vmatprep.subr.bf16.mxu0 0
        %1543 = vmatpush1.bf16.xpose.msra.mxu0 0
        %1544 = vmatprep.subr.bf16.mxu0 0
        %1545 = vmatpush1.bf16.xpose.msra.mxu0 0
        %1546 = vmatprep.subr.bf16.mxu0 0
        %1547 = vmatpush1.bf16.xpose.msra.mxu0 0
        %1548 = vmatprep.subr.bf16.mxu0 0
        %1549 = vmatpush1.bf16.xpose.msra.mxu0 0
        %1550 = vmatprep.subr.bf16.mxu0 0
        %1551 = vmatpush1.bf16.xpose.msra.mxu0 0
        %1552 = vmatprep.subr.bf16.mxu0 0
        %1553 = vmatpush1.bf16.xpose.msra.mxu0 0
        %1554 = vmatprep.subr.bf16.mxu0 0
        %1555 = vmatpush1.bf16.xpose.msra.mxu0 0
        %1556 = vmatprep.subr.bf16.mxu0 0
        %1557 = vmatpush1.bf16.xpose.msra.mxu0 0
        %1558 = vmatprep.subr.bf16.mxu0 0
        %1559 = vmatpush1.bf16.xpose.msra.mxu0 0
        %1560 = vmatprep.subr.bf16.mxu0 0
        %1561 = vmatpush1.bf16.xpose.msra.mxu0 0
        %1562 = vmatprep.subr.bf16.mxu0 0
        %1563 = vmatpush1.bf16.xpose.msra.mxu0 0
        %1564 = vmatprep.mubr.bf16.mxu0 0
        %1565 = vmatmul.mubr.bf16.gmra.mrb[0].mxu0 %v1527
        %v1566 = vpop.f32.mrb[0].mxu0
        %v1567 = vadd.f32 0.0, %v1566
        %v1568 = vpop.f32.mrb[0].mxu0
        %v1569 = vpop.f32.mrb[0].mxu0
        %v1570 = vpop.f32.mrb[0].mxu0
        %1571 = vdwg.mxu0
        %v1573 = vsel %vm950, %v1523, 0
        %v1576 = vsel %vm950, %v1525, 0
        %1578 = vmatprep.subr.bf16.mxu0 0
        %1579 = vmatpush1.bf16.xpose.msra.mxu0 %v1576
        %1580 = vmatprep.subr.bf16.mxu0 0
        %1581 = vmatpush1.bf16.xpose.msra.mxu0 0
        %1582 = vmatprep.subr.bf16.mxu0 0
        %1583 = vmatpush1.bf16.xpose.msra.mxu0 0
        %1584 = vmatprep.subr.bf16.mxu0 0
        %1585 = vmatpush1.bf16.xpose.msra.mxu0 0
        %1586 = vmatprep.subr.bf16.mxu0 0
        %1587 = vmatpush1.bf16.xpose.msra.mxu0 0
        %1588 = vmatprep.subr.bf16.mxu0 0
        %1589 = vmatpush1.bf16.xpose.msra.mxu0 0
        %1590 = vmatprep.subr.bf16.mxu0 0
        %1591 = vmatpush1.bf16.xpose.msra.mxu0 0
        %1592 = vmatprep.subr.bf16.mxu0 0
        %1593 = vmatpush1.bf16.xpose.msra.mxu0 0
        %1594 = vmatprep.subr.bf16.mxu0 0
        %1595 = vmatpush1.bf16.xpose.msra.mxu0 0
        %1596 = vmatprep.subr.bf16.mxu0 0
        %1597 = vmatpush1.bf16.xpose.msra.mxu0 0
        %1598 = vmatprep.subr.bf16.mxu0 0
        %1599 = vmatpush1.bf16.xpose.msra.mxu0 0
        %1600 = vmatprep.subr.bf16.mxu0 0
        %1601 = vmatpush1.bf16.xpose.msra.mxu0 0
        %1602 = vmatprep.subr.bf16.mxu0 0
        %1603 = vmatpush1.bf16.xpose.msra.mxu0 0
        %1604 = vmatprep.subr.bf16.mxu0 0
        %1605 = vmatpush1.bf16.xpose.msra.mxu0 0
        %1606 = vmatprep.subr.bf16.mxu0 0
        %1607 = vmatpush1.bf16.xpose.msra.mxu0 0
        %1608 = vmatprep.subr.bf16.mxu0 0
        %1609 = vmatpush1.bf16.xpose.msra.mxu0 0
        %1610 = vmatprep.mubr.bf16.mxu0 0
        %1611 = vmatmul.mubr.bf16.gmra.mrb[0].mxu0 %v1573
        %v1612 = vpop.f32.mrb[0].mxu0
        %v1613 = vadd.f32 0.0, %v1612
        %v1614 = vpop.f32.mrb[0].mxu0
        %v1615 = vpop.f32.mrb[0].mxu0
        %v1616 = vpop.f32.mrb[0].mxu0
        %1617 = vdwg.mxu0
        %v1618 = vpack.c.bf16 %v1367, %v1367
        %v1619 = vpack.c.bf16 %v1368, %v1368
        %v1620 = vpack.c.bf16 %v1465, %v1465
        %v1621 = vpack.c.bf16 %v1468, %v1468
        %v1623 = vsel %vm950, %v1618, 0
        %v1626 = vsel %vm950, %v1620, 0
        %1628 = vmatprep.subr.bf16.mxu0 0
        %1629 = vmatpush1.bf16.xpose.msra.mxu0 %v1626
        %1630 = vmatprep.subr.bf16.mxu0 0
        %1631 = vmatpush1.bf16.xpose.msra.mxu0 0
        %1632 = vmatprep.subr.bf16.mxu0 0
        %1633 = vmatpush1.bf16.xpose.msra.mxu0 0
        %1634 = vmatprep.subr.bf16.mxu0 0
        %1635 = vmatpush1.bf16.xpose.msra.mxu0 0
        %1636 = vmatprep.subr.bf16.mxu0 0
        %1637 = vmatpush1.bf16.xpose.msra.mxu0 0
        %1638 = vmatprep.subr.bf16.mxu0 0
        %1639 = vmatpush1.bf16.xpose.msra.mxu0 0
        %1640 = vmatprep.subr.bf16.mxu0 0
        %1641 = vmatpush1.bf16.xpose.msra.mxu0 0
        %1642 = vmatprep.subr.bf16.mxu0 0
        %1643 = vmatpush1.bf16.xpose.msra.mxu0 0
        %1644 = vmatprep.subr.bf16.mxu0 0
        %1645 = vmatpush1.bf16.xpose.msra.mxu0 0
        %1646 = vmatprep.subr.bf16.mxu0 0
        %1647 = vmatpush1.bf16.xpose.msra.mxu0 0
        %1648 = vmatprep.subr.bf16.mxu0 0
        %1649 = vmatpush1.bf16.xpose.msra.mxu0 0
        %1650 = vmatprep.subr.bf16.mxu0 0
        %1651 = vmatpush1.bf16.xpose.msra.mxu0 0
        %1652 = vmatprep.subr.bf16.mxu0 0
        %1653 = vmatpush1.bf16.xpose.msra.mxu0 0
        %1654 = vmatprep.subr.bf16.mxu0 0
        %1655 = vmatpush1.bf16.xpose.msra.mxu0 0
        %1656 = vmatprep.subr.bf16.mxu0 0
        %1657 = vmatpush1.bf16.xpose.msra.mxu0 0
        %1658 = vmatprep.subr.bf16.mxu0 0
        %1659 = vmatpush1.bf16.xpose.msra.mxu0 0
        %1660 = vmatprep.mubr.bf16.mxu0 0
        %1661 = vmatmul.mubr.bf16.gmra.mrb[0].mxu0 %v1623
        %v1662 = vpop.f32.mrb[0].mxu0
        %v1663 = vadd.f32 0.0, %v1662
        %v1664 = vpop.f32.mrb[0].mxu0
        %v1665 = vpop.f32.mrb[0].mxu0
        %v1666 = vpop.f32.mrb[0].mxu0
        %1667 = vdwg.mxu0
        %v1669 = vsel %vm950, %v1619, 0
        %v1672 = vsel %vm950, %v1621, 0
        %1674 = vmatprep.subr.bf16.mxu0 0
        %1675 = vmatpush1.bf16.xpose.msra.mxu0 %v1672
        %1676 = vmatprep.subr.bf16.mxu0 0
        %1677 = vmatpush1.bf16.xpose.msra.mxu0 0
        %1678 = vmatprep.subr.bf16.mxu0 0
        %1679 = vmatpush1.bf16.xpose.msra.mxu0 0
        %1680 = vmatprep.subr.bf16.mxu0 0
        %1681 = vmatpush1.bf16.xpose.msra.mxu0 0
        %1682 = vmatprep.subr.bf16.mxu0 0
        %1683 = vmatpush1.bf16.xpose.msra.mxu0 0
        %1684 = vmatprep.subr.bf16.mxu0 0
        %1685 = vmatpush1.bf16.xpose.msra.mxu0 0
        %1686 = vmatprep.subr.bf16.mxu0 0
        %1687 = vmatpush1.bf16.xpose.msra.mxu0 0
        %1688 = vmatprep.subr.bf16.mxu0 0
        %1689 = vmatpush1.bf16.xpose.msra.mxu0 0
        %1690 = vmatprep.subr.bf16.mxu0 0
        %1691 = vmatpush1.bf16.xpose.msra.mxu0 0
        %1692 = vmatprep.subr.bf16.mxu0 0
        %1693 = vmatpush1.bf16.xpose.msra.mxu0 0
        %1694 = vmatprep.subr.bf16.mxu0 0
        %1695 = vmatpush1.bf16.xpose.msra.mxu0 0
        %1696 = vmatprep.subr.bf16.mxu0 0
        %1697 = vmatpush1.bf16.xpose.msra.mxu0 0
        %1698 = vmatprep.subr.bf16.mxu0 0
        %1699 = vmatpush1.bf16.xpose.msra.mxu0 0
        %1700 = vmatprep.subr.bf16.mxu0 0
        %1701 = vmatpush1.bf16.xpose.msra.mxu0 0
        %1702 = vmatprep.subr.bf16.mxu0 0
        %1703 = vmatpush1.bf16.xpose.msra.mxu0 0
        %1704 = vmatprep.subr.bf16.mxu0 0
        %1705 = vmatpush1.bf16.xpose.msra.mxu0 0
        %1706 = vmatprep.mubr.bf16.mxu0 0
        %1707 = vmatmul.mubr.bf16.gmra.mrb[0].mxu0 %v1669
        %v1708 = vpop.f32.mrb[0].mxu0
        %v1709 = vadd.f32 0.0, %v1708
        %v1710 = vpop.f32.mrb[0].mxu0
        %v1711 = vpop.f32.mrb[0].mxu0
        %v1712 = vpop.f32.mrb[0].mxu0
        %1713 = vdwg.mxu0
        %v1714 = vsel %vm1140, %v1663, %v1567
        %v1715 = vsel %vm1140, %v1709, %v1613
        %v1716 = vsel %vm1143, %v1714, -inf
        %1717 = vmax.xlane.f32.xlu0 %v1716
        %v1718 = vpop.xlane.xlu0 %1717
        %v1719 = vsel %vm1143, %v1715, -inf
        %1720 = vmax.xlane.f32.xlu0 %v1719
        %v1721 = vpop.xlane.xlu0 %1720
        %v1722 = vsub.f32 %v1714, %v1718
        %v1723 = vsub.f32 %v1715, %v1721
        %v1724 = vmul.f32 %v1722, 1.442695
        %v1725 = vpow.pop %v1724
        %v1726 = vmul.f32 %v1723, 1.442695
        %v1727 = vpow.pop %v1726
        %v1728 = vsel %vm1143, %v1725, 0.0
        %1729 = vadd.xlane.f32.xlu0 %v1728
        %v1730 = vpop.xlane.xlu0 %1729
        %v1731 = vsel %vm1143, %v1727, 0.0
        %1732 = vadd.xlane.f32.xlu0 %v1731
        %v1733 = vpop.xlane.xlu0 %1732
        %v1734 = vrcp.pop %v1730
        %v1735 = vrcp.pop %v1733
        %v1736 = vmul.f32 %v1725, %v1734
        %v1737 = vmul.f32 %v1727, %v1735
        %v1738 = vpack.c.bf16 %v1736, %v1736
        %v1739 = vpack.c.bf16 %v1737, %v1737
        %v1740 = vpack.c.bf16 %v1516, %v1516
        %v1741 = vpack.c.bf16 %v1519, %v1519
        %v1743 = vsel %vm1143, %v1738, 0
        %v1746 = vsel %vm1173, %v1740, 0
        %1748 = vmatprep.subr.bf16.mxu0 0
        %1749 = vmatpush1.bf16.msra.mxu0 %v1746
        %1750 = vmatprep.subr.bf16.mxu0 0
        %1751 = vmatpush1.bf16.msra.mxu0 0
        %1752 = vmatprep.subr.bf16.mxu0 0
        %1753 = vmatpush1.bf16.msra.mxu0 0
        %1754 = vmatprep.subr.bf16.mxu0 0
        %1755 = vmatpush1.bf16.msra.mxu0 0
        %1756 = vmatprep.subr.bf16.mxu0 0
        %1757 = vmatpush1.bf16.msra.mxu0 0
        %1758 = vmatprep.subr.bf16.mxu0 0
        %1759 = vmatpush1.bf16.msra.mxu0 0
        %1760 = vmatprep.subr.bf16.mxu0 0
        %1761 = vmatpush1.bf16.msra.mxu0 0
        %1762 = vmatprep.subr.bf16.mxu0 0
        %1763 = vmatpush1.bf16.msra.mxu0 0
        %1764 = vmatprep.subr.bf16.mxu0 0
        %1765 = vmatpush1.bf16.msra.mxu0 0
        %1766 = vmatprep.subr.bf16.mxu0 0
        %1767 = vmatpush1.bf16.msra.mxu0 0
        %1768 = vmatprep.subr.bf16.mxu0 0
        %1769 = vmatpush1.bf16.msra.mxu0 0
        %1770 = vmatprep.subr.bf16.mxu0 0
        %1771 = vmatpush1.bf16.msra.mxu0 0
        %1772 = vmatprep.subr.bf16.mxu0 0
        %1773 = vmatpush1.bf16.msra.mxu0 0
        %1774 = vmatprep.subr.bf16.mxu0 0
        %1775 = vmatpush1.bf16.msra.mxu0 0
        %1776 = vmatprep.subr.bf16.mxu0 0
        %1777 = vmatpush1.bf16.msra.mxu0 0
        %1778 = vmatprep.subr.bf16.mxu0 0
        %1779 = vmatpush1.bf16.msra.mxu0 0
        %1780 = vmatprep.mubr.bf16.mxu0 0
        %1781 = vmatmul.mubr.bf16.gmra.mrb[0].mxu0 %v1743
        %v1782 = vpop.f32.mrb[0].mxu0
        %v1783 = vadd.f32 0.0, %v1782
        %v1784 = vpop.f32.mrb[0].mxu0
        %v1785 = vpop.f32.mrb[0].mxu0
        %v1786 = vpop.f32.mrb[0].mxu0
        %1787 = vdwg.mxu0
        %v1789 = vsel %vm1143, %v1739, 0
        %v1792 = vsel %vm1173, %v1741, 0
        %1794 = vmatprep.subr.bf16.mxu0 0
        %1795 = vmatpush1.bf16.msra.mxu0 %v1792
        %1796 = vmatprep.subr.bf16.mxu0 0
        %1797 = vmatpush1.bf16.msra.mxu0 0
        %1798 = vmatprep.subr.bf16.mxu0 0
        %1799 = vmatpush1.bf16.msra.mxu0 0
        %1800 = vmatprep.subr.bf16.mxu0 0
        %1801 = vmatpush1.bf16.msra.mxu0 0
        %1802 = vmatprep.subr.bf16.mxu0 0
        %1803 = vmatpush1.bf16.msra.mxu0 0
        %1804 = vmatprep.subr.bf16.mxu0 0
        %1805 = vmatpush1.bf16.msra.mxu0 0
        %1806 = vmatprep.subr.bf16.mxu0 0
        %1807 = vmatpush1.bf16.msra.mxu0 0
        %1808 = vmatprep.subr.bf16.mxu0 0
        %1809 = vmatpush1.bf16.msra.mxu0 0
        %1810 = vmatprep.subr.bf16.mxu0 0
        %1811 = vmatpush1.bf16.msra.mxu0 0
        %1812 = vmatprep.subr.bf16.mxu0 0
        %1813 = vmatpush1.bf16.msra.mxu0 0
        %1814 = vmatprep.subr.bf16.mxu0 0
        %1815 = vmatpush1.bf16.msra.mxu0 0
        %1816 = vmatprep.subr.bf16.mxu0 0
        %1817 = vmatpush1.bf16.msra.mxu0 0
        %1818 = vmatprep.subr.bf16.mxu0 0
        %1819 = vmatpush1.bf16.msra.mxu0 0
        %1820 = vmatprep.subr.bf16.mxu0 0
        %1821 = vmatpush1.bf16.msra.mxu0 0
        %1822 = vmatprep.subr.bf16.mxu0 0
        %1823 = vmatpush1.bf16.msra.mxu0 0
        %1824 = vmatprep.subr.bf16.mxu0 0
        %1825 = vmatpush1.bf16.msra.mxu0 0
        %1826 = vmatprep.mubr.bf16.mxu0 0
        %1827 = vmatmul.mubr.bf16.gmra.mrb[0].mxu0 %v1789
        %v1828 = vpop.f32.mrb[0].mxu0
        %v1829 = vadd.f32 0.0, %v1828
        %v1830 = vpop.f32.mrb[0].mxu0
        %v1831 = vpop.f32.mrb[0].mxu0
        %v1832 = vpop.f32.mrb[0].mxu0
        %1833 = vdwg.mxu0
        %1836 = vrot.lane.b32.xlu0 %v1783, 16
        %v1837 = vpop.permute.xlu0 %1836
        %1838 = vrot.lane.b32.xlu0 %v1829, 16
        %v1839 = vpop.permute.xlu0 %1838
        %v1842 = vsel %vm950, %v1212, %v1837
        %v1843 = vsel %vm950, %v1258, %v1839
        %v1844 = vpack.c.bf16 %v1843, %v1842
        %v1845 = vlaneseq
        %v1846 = vshrl.u32 %v1845, 7
        %v1847 = vsub.s32 0, %v1846
        %v1848 = vrot.slane %v555, %v1847
        %v1853 = vunpack.c.l.b16 %v536
        %v1854 = vunpack.c.l.b16 %v537
        %v1855 = vunpack.c.l.b16 %v538
        %v1856 = vunpack.c.l.b16 %v539
        %v1857 = vpack.c.b16 %v1854, %v1853
        %v1858 = vpack.c.b16 %v1856, %v1855
        %v1862 = vsel %vm566, %v1844, 0
        %1864 = vmatprep.subr.bf16.mxu0 0
        %1865 = vmatpush1.bf16.msra.mxu0 %v1857
        %1866 = vmatprep.subr.bf16.mxu0 0
        %1867 = vmatpush1.bf16.msra.mxu0 %v1858
        %1868 = vmatprep.subr.bf16.mxu0 0
        %1869 = vmatpush1.bf16.msra.mxu0 0
        %1870 = vmatprep.subr.bf16.mxu0 0
        %1871 = vmatpush1.bf16.msra.mxu0 0
        %1872 = vmatprep.subr.bf16.mxu0 0
        %1873 = vmatpush1.bf16.msra.mxu0 0
        %1874 = vmatprep.subr.bf16.mxu0 0
        %1875 = vmatpush1.bf16.msra.mxu0 0
        %1876 = vmatprep.subr.bf16.mxu0 0
        %1877 = vmatpush1.bf16.msra.mxu0 0
        %1878 = vmatprep.subr.bf16.mxu0 0
        %1879 = vmatpush1.bf16.msra.mxu0 0
        %1880 = vmatprep.subr.bf16.mxu0 0
        %1881 = vmatpush1.bf16.msra.mxu0 0
        %1882 = vmatprep.subr.bf16.mxu0 0
        %1883 = vmatpush1.bf16.msra.mxu0 0
        %1884 = vmatprep.subr.bf16.mxu0 0
        %1885 = vmatpush1.bf16.msra.mxu0 0
        %1886 = vmatprep.subr.bf16.mxu0 0
        %1887 = vmatpush1.bf16.msra.mxu0 0
        %1888 = vmatprep.subr.bf16.mxu0 0
        %1889 = vmatpush1.bf16.msra.mxu0 0
        %1890 = vmatprep.subr.bf16.mxu0 0
        %1891 = vmatpush1.bf16.msra.mxu0 0
        %1892 = vmatprep.subr.bf16.mxu0 0
        %1893 = vmatpush1.bf16.msra.mxu0 0
        %1894 = vmatprep.subr.bf16.mxu0 0
        %1895 = vmatpush1.bf16.msra.mxu0 0
        %1896 = vmatprep.mubr.bf16.mxu0 0
        %1897 = vmatmul.mubr.bf16.gmra.mrb[0].mxu0 %v1862
        %v1898 = vpop.f32.mrb[0].mxu0
        %v1899 = vadd.f32 %v1848, %v1898
        %v1900 = vpop.f32.mrb[0].mxu0
        %v1901 = vpop.f32.mrb[0].mxu0
        %v1902 = vadd.f32 %v1848, %v1901
        %v1903 = vpop.f32.mrb[0].mxu0
        %1904 = vdwg.mxu0
        %v1905 = vadd.f32 %v604, %v1899
        %v1906 = vadd.f32 %v605, %v1902
        %v1907 = vadd.f32 %v634, %v1899
        %v1908 = vadd.f32 %v635, %v1902
        %v1909 = vsel %vm566, %v1905, 0.0
        %1910 = vadd.xlane.f32.xlu0 %v1909
        %v1911 = vpop.xlane.xlu0 %1910
        %v1912 = vsel %vm566, %v1906, 0.0
        %1913 = vadd.xlane.f32.xlu0 %v1912
        %v1914 = vpop.xlane.xlu0 %1913
        %v1915 = vmul.f32 %v1911, %v573
        %v1916 = vmul.f32 %v1914, %v573
        %v1917 = vsub.f32 %v1905, %v1915
        %v1918 = vsub.f32 %v1906, %v1916
        %v1919 = vmul.f32 %v1917, %v1917
        %v1920 = vmul.f32 %v1918, %v1918
        %v1921 = vsel %vm566, %v1919, 0.0
        %1922 = vadd.xlane.f32.xlu0 %v1921
        %v1923 = vpop.xlane.xlu0 %1922
        %v1924 = vsel %vm566, %v1920, 0.0
        %1925 = vadd.xlane.f32.xlu0 %v1924
        %v1926 = vpop.xlane.xlu0 %1925
        %v1927 = vmul.f32 %v1923, %v573
        %v1928 = vmul.f32 %v1926, %v573
        %v1929 = vadd.f32 %v1927, 1e-08
        %v1930 = vadd.f32 %v1928, 1e-08
        %v1931 = vrsqrt.pop %v1929
        %v1932 = vrsqrt.pop %v1930
        %v1933 = vmul.f32 %v1917, %v1931
        %v1934 = vmul.f32 %v1918, %v1932
        %v1935 = vlaneseq
        %v1936 = vshrl.u32 %v1935, 7
        %v1937 = vsub.s32 0, %v1936
        %v1938 = vrot.slane %v558, %v1937
        %v1939 = vmul.f32 %v1933, %v1938
        %v1940 = vmul.f32 %v1934, %v1938
        %v1941 = vlaneseq
        %v1942 = vshrl.u32 %v1941, 7
        %v1943 = vsub.s32 0, %v1942
        %v1944 = vrot.slane %v559, %v1943
        %v1945 = vadd.f32 %v1939, %v1944
        %v1946 = vadd.f32 %v1940, %v1944
        %v1947 = vsel %vm566, %v1907, 0.0
        %1948 = vadd.xlane.f32.xlu0 %v1947
        %v1949 = vpop.xlane.xlu0 %1948
        %v1950 = vsel %vm566, %v1908, 0.0
        %1951 = vadd.xlane.f32.xlu0 %v1950
        %v1952 = vpop.xlane.xlu0 %1951
        %v1953 = vmul.f32 %v1949, %v573
        %v1954 = vmul.f32 %v1952, %v573
        %v1955 = vsub.f32 %v1907, %v1953
        %v1956 = vsub.f32 %v1908, %v1954
        %v1957 = vmul.f32 %v1955, %v1955
        %v1958 = vmul.f32 %v1956, %v1956
        %v1959 = vsel %vm566, %v1957, 0.0
        %1960 = vadd.xlane.f32.xlu0 %v1959
        %v1961 = vpop.xlane.xlu0 %1960
        %v1962 = vsel %vm566, %v1958, 0.0
        %1963 = vadd.xlane.f32.xlu0 %v1962
        %v1964 = vpop.xlane.xlu0 %1963
        %v1965 = vmul.f32 %v1961, %v573
        %v1966 = vmul.f32 %v1964, %v573
        %v1967 = vadd.f32 %v1965, 1e-08
        %v1968 = vadd.f32 %v1966, 1e-08
        %v1969 = vrsqrt.pop %v1967
        %v1970 = vrsqrt.pop %v1968
        %v1971 = vmul.f32 %v1955, %v1969
        %v1972 = vmul.f32 %v1956, %v1970
        %v1973 = vmul.f32 %v1971, %v1938
        %v1974 = vmul.f32 %v1972, %v1938
        %v1975 = vadd.f32 %v1973, %v1944
        %v1976 = vadd.f32 %v1974, %v1944
        %v1977 = vld [vmem:[%s473] sm:$0xff]
        %v1978 = vld [vmem:[%s473 + $0x8] sm:$0xff]
        %v1979 = vpack.c.bf16 %v1946, %v1945
        %v1980 = vlaneseq
        %v1981 = vshrl.u32 %v1980, 7
        %v1982 = vsub.s32 0, %v1981
        %v1983 = vrot.slane %v560, %v1982
        %v1988 = vunpack.c.l.b16 %v541
        %v1989 = vunpack.c.l.b16 %v542
        %v1990 = vunpack.c.l.b16 %v543
        %v1991 = vunpack.c.l.b16 %v544
        %v1992 = vpack.c.b16 %v1989, %v1988
        %v1993 = vpack.c.b16 %v1991, %v1990
        %v1997 = vsel %vm566, %v1979, 0
        %1999 = vmatprep.subr.bf16.mxu0 0
        %2000 = vmatpush1.bf16.msra.mxu0 %v1992
        %2001 = vmatprep.subr.bf16.mxu0 0
        %2002 = vmatpush1.bf16.msra.mxu0 %v1993
        %2003 = vmatprep.subr.bf16.mxu0 0
        %2004 = vmatpush1.bf16.msra.mxu0 0
        %2005 = vmatprep.subr.bf16.mxu0 0
        %2006 = vmatpush1.bf16.msra.mxu0 0
        %2007 = vmatprep.subr.bf16.mxu0 0
        %2008 = vmatpush1.bf16.msra.mxu0 0
        %2009 = vmatprep.subr.bf16.mxu0 0
        %2010 = vmatpush1.bf16.msra.mxu0 0
        %2011 = vmatprep.subr.bf16.mxu0 0
        %2012 = vmatpush1.bf16.msra.mxu0 0
        %2013 = vmatprep.subr.bf16.mxu0 0
        %2014 = vmatpush1.bf16.msra.mxu0 0
        %2015 = vmatprep.subr.bf16.mxu0 0
        %2016 = vmatpush1.bf16.msra.mxu0 0
        %2017 = vmatprep.subr.bf16.mxu0 0
        %2018 = vmatpush1.bf16.msra.mxu0 0
        %2019 = vmatprep.subr.bf16.mxu0 0
        %2020 = vmatpush1.bf16.msra.mxu0 0
        %2021 = vmatprep.subr.bf16.mxu0 0
        %2022 = vmatpush1.bf16.msra.mxu0 0
        %2023 = vmatprep.subr.bf16.mxu0 0
        %2024 = vmatpush1.bf16.msra.mxu0 0
        %2025 = vmatprep.subr.bf16.mxu0 0
        %2026 = vmatpush1.bf16.msra.mxu0 0
        %2027 = vmatprep.subr.bf16.mxu0 0
        %2028 = vmatpush1.bf16.msra.mxu0 0
        %2029 = vmatprep.subr.bf16.mxu0 0
        %2030 = vmatpush1.bf16.msra.mxu0 0
        %2031 = vmatprep.mubr.bf16.mxu0 0
        %2032 = vmatmul.mubr.bf16.gmra.mrb[0].mxu0 %v1997
        %v2033 = vpop.f32.mrb[0].mxu0
        %v2034 = vadd.f32 %v1983, %v2033
        %v2035 = vpop.f32.mrb[0].mxu0
        %v2036 = vpop.f32.mrb[0].mxu0
        %v2037 = vadd.f32 %v1983, %v2036
        %v2038 = vpop.f32.mrb[0].mxu0
        %2039 = vdwg.mxu0
        %v2040 = vmax.f32 %v2034, 0.0
        %v2041 = vmax.f32 %v2037, 0.0
        %v2042 = vpack.c.bf16 %v2041, %v2040
        %v2043 = vlaneseq
        %v2044 = vshrl.u32 %v2043, 7
        %v2045 = vsub.s32 0, %v2044
        %v2046 = vrot.slane %v561, %v2045
        %v2051 = vunpack.c.l.b16 %v546
        %v2052 = vunpack.c.l.b16 %v547
        %v2053 = vunpack.c.l.b16 %v548
        %v2054 = vunpack.c.l.b16 %v549
        %v2055 = vpack.c.b16 %v2052, %v2051
        %v2056 = vpack.c.b16 %v2054, %v2053
        %v2060 = vsel %vm566, %v2042, 0
        %2062 = vmatprep.subr.bf16.mxu0 0
        %2063 = vmatpush1.bf16.msra.mxu0 %v2055
        %2064 = vmatprep.subr.bf16.mxu0 0
        %2065 = vmatpush1.bf16.msra.mxu0 %v2056
        %2066 = vmatprep.subr.bf16.mxu0 0
        %2067 = vmatpush1.bf16.msra.mxu0 0
        %2068 = vmatprep.subr.bf16.mxu0 0
        %2069 = vmatpush1.bf16.msra.mxu0 0
        %2070 = vmatprep.subr.bf16.mxu0 0
        %2071 = vmatpush1.bf16.msra.mxu0 0
        %2072 = vmatprep.subr.bf16.mxu0 0
        %2073 = vmatpush1.bf16.msra.mxu0 0
        %2074 = vmatprep.subr.bf16.mxu0 0
        %2075 = vmatpush1.bf16.msra.mxu0 0
        %2076 = vmatprep.subr.bf16.mxu0 0
        %2077 = vmatpush1.bf16.msra.mxu0 0
        %2078 = vmatprep.subr.bf16.mxu0 0
        %2079 = vmatpush1.bf16.msra.mxu0 0
        %2080 = vmatprep.subr.bf16.mxu0 0
        %2081 = vmatpush1.bf16.msra.mxu0 0
        %2082 = vmatprep.subr.bf16.mxu0 0
        %2083 = vmatpush1.bf16.msra.mxu0 0
        %2084 = vmatprep.subr.bf16.mxu0 0
        %2085 = vmatpush1.bf16.msra.mxu0 0
        %2086 = vmatprep.subr.bf16.mxu0 0
        %2087 = vmatpush1.bf16.msra.mxu0 0
        %2088 = vmatprep.subr.bf16.mxu0 0
        %2089 = vmatpush1.bf16.msra.mxu0 0
        %2090 = vmatprep.subr.bf16.mxu0 0
        %2091 = vmatpush1.bf16.msra.mxu0 0
        %2092 = vmatprep.subr.bf16.mxu0 0
        %2093 = vmatpush1.bf16.msra.mxu0 0
        %2094 = vmatprep.mubr.bf16.mxu0 0
        %2095 = vmatmul.mubr.bf16.gmra.mrb[0].mxu0 %v2060
        %v2096 = vpop.f32.mrb[0].mxu0
        %v2097 = vadd.f32 %v2046, %v2096
        %v2098 = vpop.f32.mrb[0].mxu0
        %v2099 = vpop.f32.mrb[0].mxu0
        %v2100 = vadd.f32 %v2046, %v2099
        %v2101 = vpop.f32.mrb[0].mxu0
        %2102 = vdwg.mxu0
        %v2103 = vadd.f32 %v2097, %v1945
        %v2104 = vadd.f32 %v2100, %v1946
        %2106 = vset.pattern.permute.xlu0 0
        %2107 = vperm.xlu0 %2106, %v1977
        %v2108 = vpop.permute.xlu0 %2107
        %2111 = vset.pattern.permute.xlu0 0
        %2112 = vperm.xlu0 %2111, %v1978
        %v2113 = vpop.permute.xlu0 %2112
        %v2115 = vmul.f32 %v2103, %v2108
        %v2116 = vmul.f32 %v2104, %v2113
        %v2117 = vpack.c.bf16 %v1976, %v1975
        %v2119 = vsel %vm566, %v2117, 0
        %2121 = vmatprep.subr.bf16.mxu0 0
        %2122 = vmatpush1.bf16.msra.mxu0 %v1992
        %2123 = vmatprep.subr.bf16.mxu0 0
        %2124 = vmatpush1.bf16.msra.mxu0 %v1993
        %2125 = vmatprep.subr.bf16.mxu0 0
        %2126 = vmatpush1.bf16.msra.mxu0 0
        %2127 = vmatprep.subr.bf16.mxu0 0
        %2128 = vmatpush1.bf16.msra.mxu0 0
        %2129 = vmatprep.subr.bf16.mxu0 0
        %2130 = vmatpush1.bf16.msra.mxu0 0
        %2131 = vmatprep.subr.bf16.mxu0 0
        %2132 = vmatpush1.bf16.msra.mxu0 0
        %2133 = vmatprep.subr.bf16.mxu0 0
        %2134 = vmatpush1.bf16.msra.mxu0 0
        %2135 = vmatprep.subr.bf16.mxu0 0
        %2136 = vmatpush1.bf16.msra.mxu0 0
        %2137 = vmatprep.subr.bf16.mxu0 0
        %2138 = vmatpush1.bf16.msra.mxu0 0
        %2139 = vmatprep.subr.bf16.mxu0 0
        %2140 = vmatpush1.bf16.msra.mxu0 0
        %2141 = vmatprep.subr.bf16.mxu0 0
        %2142 = vmatpush1.bf16.msra.mxu0 0
        %2143 = vmatprep.subr.bf16.mxu0 0
        %2144 = vmatpush1.bf16.msra.mxu0 0
        %2145 = vmatprep.subr.bf16.mxu0 0
        %2146 = vmatpush1.bf16.msra.mxu0 0
        %2147 = vmatprep.subr.bf16.mxu0 0
        %2148 = vmatpush1.bf16.msra.mxu0 0
        %2149 = vmatprep.subr.bf16.mxu0 0
        %2150 = vmatpush1.bf16.msra.mxu0 0
        %2151 = vmatprep.subr.bf16.mxu0 0
        %2152 = vmatpush1.bf16.msra.mxu0 0
        %2153 = vmatprep.mubr.bf16.mxu0 0
        %2154 = vmatmul.mubr.bf16.gmra.mrb[0].mxu0 %v2119
        %v2155 = vpop.f32.mrb[0].mxu0
        %v2156 = vadd.f32 %v1983, %v2155
        %v2157 = vpop.f32.mrb[0].mxu0
        %v2158 = vpop.f32.mrb[0].mxu0
        %v2159 = vadd.f32 %v1983, %v2158
        %v2160 = vpop.f32.mrb[0].mxu0
        %2161 = vdwg.mxu0
        %v2162 = vmax.f32 %v2156, 0.0
        %v2163 = vmax.f32 %v2159, 0.0
        %v2164 = vpack.c.bf16 %v2163, %v2162
        %v2166 = vsel %vm566, %v2164, 0
        %2168 = vmatprep.subr.bf16.mxu0 0
        %2169 = vmatpush1.bf16.msra.mxu0 %v2055
        %2170 = vmatprep.subr.bf16.mxu0 0
        %2171 = vmatpush1.bf16.msra.mxu0 %v2056
        %2172 = vmatprep.subr.bf16.mxu0 0
        %2173 = vmatpush1.bf16.msra.mxu0 0
        %2174 = vmatprep.subr.bf16.mxu0 0
        %2175 = vmatpush1.bf16.msra.mxu0 0
        %2176 = vmatprep.subr.bf16.mxu0 0
        %2177 = vmatpush1.bf16.msra.mxu0 0
        %2178 = vmatprep.subr.bf16.mxu0 0
        %2179 = vmatpush1.bf16.msra.mxu0 0
        %2180 = vmatprep.subr.bf16.mxu0 0
        %2181 = vmatpush1.bf16.msra.mxu0 0
        %2182 = vmatprep.subr.bf16.mxu0 0
        %2183 = vmatpush1.bf16.msra.mxu0 0
        %2184 = vmatprep.subr.bf16.mxu0 0
        %2185 = vmatpush1.bf16.msra.mxu0 0
        %2186 = vmatprep.subr.bf16.mxu0 0
        %2187 = vmatpush1.bf16.msra.mxu0 0
        %2188 = vmatprep.subr.bf16.mxu0 0
        %2189 = vmatpush1.bf16.msra.mxu0 0
        %2190 = vmatprep.subr.bf16.mxu0 0
        %2191 = vmatpush1.bf16.msra.mxu0 0
        %2192 = vmatprep.subr.bf16.mxu0 0
        %2193 = vmatpush1.bf16.msra.mxu0 0
        %2194 = vmatprep.subr.bf16.mxu0 0
        %2195 = vmatpush1.bf16.msra.mxu0 0
        %2196 = vmatprep.subr.bf16.mxu0 0
        %2197 = vmatpush1.bf16.msra.mxu0 0
        %2198 = vmatprep.subr.bf16.mxu0 0
        %2199 = vmatpush1.bf16.msra.mxu0 0
        %2200 = vmatprep.mubr.bf16.mxu0 0
        %2201 = vmatmul.mubr.bf16.gmra.mrb[0].mxu0 %v2166
        %v2202 = vpop.f32.mrb[0].mxu0
        %v2203 = vadd.f32 %v2046, %v2202
        %v2204 = vpop.f32.mrb[0].mxu0
        %v2205 = vpop.f32.mrb[0].mxu0
        %v2206 = vadd.f32 %v2046, %v2205
        %v2207 = vpop.f32.mrb[0].mxu0
        %2208 = vdwg.mxu0
        %v2209 = vadd.f32 %v2203, %v1975
        %v2210 = vadd.f32 %v2206, %v1976
        %v2211 = vmul.f32 %v2209, %v2108
        %v2212 = vmul.f32 %v2210, %v2113
        %2213 = vst.msk [vmem:[#allocation2] sm:$0xff] %vm566, %v2115
        %2214 = vst.msk [vmem:[#allocation2 + $0x8] sm:$0xff] %vm566, %v2116
        %2215 = vst.msk [vmem:[#allocation3] sm:$0xff] %vm566, %v2211
        %2216 = vst.msk [vmem:[#allocation3 + $0x8] sm:$0xff] %vm566, %v2212
        %p2217 = scmp.eq.s32.totalorder %s29, 1
        // Predicated region
        $region61: #{sasrec_forward.1} parent=55 // pred_check
          %p2218 = pneg %p2217
        $region62: #{sasrec_forward.1} parent=55 // pred_check_branch
          %2220 = sbr.rel (%p2218) target = $region64
        $region63: #{sasrec_forward.1} parent=55 // pred_region
          %v2221 = vld [vmem:[%s7] sm:$0x1]
          %v2222 = vld [vmem:[%s8] sm:$0x1]
          %v2223 = vsel %vm566, %v2115, 0.0
          %2224 = vadd.xlane.f32.xlu0 %v2223
          %v2225 = vpop.xlane.xlu0 %2224
          %v2226 = vsel %vm566, %v2116, 0.0
          %2227 = vadd.xlane.f32.xlu0 %v2226
          %v2228 = vpop.xlane.xlu0 %2227
          %v2229 = vmul.f32 %v2225, %v573
          %v2230 = vmul.f32 %v2228, %v573
          %v2231 = vsub.f32 %v2115, %v2229
          %v2232 = vsub.f32 %v2116, %v2230
          %v2233 = vmul.f32 %v2231, %v2231
          %v2234 = vmul.f32 %v2232, %v2232
          %v2235 = vsel %vm566, %v2233, 0.0
          %2236 = vadd.xlane.f32.xlu0 %v2235
          %v2237 = vpop.xlane.xlu0 %2236
          %v2238 = vsel %vm566, %v2234, 0.0
          %2239 = vadd.xlane.f32.xlu0 %v2238
          %v2240 = vpop.xlane.xlu0 %2239
          %v2241 = vmul.f32 %v2237, %v573
          %v2242 = vmul.f32 %v2240, %v573
          %v2243 = vadd.f32 %v2241, 1e-08
          %v2244 = vadd.f32 %v2242, 1e-08
          %v2245 = vrsqrt.pop %v2243
          %v2246 = vrsqrt.pop %v2244
          %v2247 = vmul.f32 %v2231, %v2245
          %v2248 = vmul.f32 %v2232, %v2246
          %v2250 = vlaneseq
          %v2251 = vshrl.u32 %v2250, 7
          %v2252 = vsub.s32 0, %v2251
          %v2253 = vrot.slane %v2221, %v2252
          %v2255 = vmul.f32 %v2247, %v2253
          %v2256 = vmul.f32 %v2248, %v2253
          %v2258 = vlaneseq
          %v2259 = vshrl.u32 %v2258, 7
          %v2260 = vsub.s32 0, %v2259
          %v2261 = vrot.slane %v2222, %v2260
          %v2263 = vadd.f32 %v2255, %v2261
          %v2264 = vadd.f32 %v2256, %v2261
          %v2265 = vld [vmem:[%s489] sm:$0xff]
          %v2266 = vld [vmem:[%s489 + $0x8] sm:$0xff]
          %v2267 = vmul.f32 %v2263, %v2265
          %v2268 = vmul.f32 %v2264, %v2266
          %v2269 = vsel %vm566, %v2267, 0.0
          %2270 = vadd.xlane.f32.xlu0 %v2269
          %v2271 = vpop.xlane.xlu0 %2270
          %v2272 = vsel %vm566, %v2268, 0.0
          %2273 = vadd.xlane.f32.xlu0 %v2272
          %v2274 = vpop.xlane.xlu0 %2273
          %v2277 = vlaneseq
          %v2278 = vshrl.u32 %v2277, 7
          %v2279 = vsub.s32 %v643, %v2278
          %v2280 = vrot.slane %v2271, %v2279
          %v2281 = vlaneseq
          %v2282 = vshrl.u32 %v2281, 7
          %v2283 = vsub.s32 %v643, %v2282
          %v2284 = vrot.slane %v2274, %v2283
          %vm2285 = vcmask 1041409
          %v2286 = vsel %vm2285, %v2284, %v2280
          %vm2288 = vcmask 58368
          %2289 = vst.msk [vmem:[#allocation4] sm:$0x3] %vm2288, %v2286
          %v2290 = vld [vmem:[%s495] sm:$0xff]
          %v2291 = vld [vmem:[%s495 + $0x8] sm:$0xff]
          %v2292 = vmul.f32 %v2263, %v2290
          %v2293 = vmul.f32 %v2264, %v2291
          %v2294 = vsel %vm566, %v2292, 0.0
          %2295 = vadd.xlane.f32.xlu0 %v2294
          %v2296 = vpop.xlane.xlu0 %2295
          %v2297 = vsel %vm566, %v2293, 0.0
          %2298 = vadd.xlane.f32.xlu0 %v2297
          %v2299 = vpop.xlane.xlu0 %2298
          %v2302 = vlaneseq
          %v2303 = vshrl.u32 %v2302, 7
          %v2304 = vsub.s32 %v643, %v2303
          %v2305 = vrot.slane %v2296, %v2304
          %v2306 = vlaneseq
          %v2307 = vshrl.u32 %v2306, 7
          %v2308 = vsub.s32 %v643, %v2307
          %v2309 = vrot.slane %v2299, %v2308
          %v2310 = vsel %vm2285, %v2309, %v2305
          %2312 = vst.msk [vmem:[#allocation6] sm:$0x3] %vm2288, %v2310
        $region64: #{sasrec_forward.1} parent=55 // pred_fallthru
          _
        // Predicated region
        $region65: #{sasrec_forward.1} parent=55 // pred_check
          %p2313 = pneg %p278
        $region66: #{sasrec_forward.1} parent=55 // pred_check_branch
          %2315 = sbr.rel (%p2313) target = $region68
        $region67: #{sasrec_forward.1} parent=55 // pred_region
          %s2317 = ssub.s32 32, 32
          %2318 = vsyncadd [#allocation5], %s2317
          %s2319 = smul.addr %s28, 32
          %s2320 = scalar_lea.hbm %s9, %s2319
          %s2322 = sshll.u32 [#allocation4], 4
          %s2323 = int_to_ptr.vmem [resolvable:$true] %s2322
          %2325 = dma.vmem_to_hbm [thread:$0]  %s2323, 32, %s2320, [#allocation5]
        $region68: #{sasrec_forward.1} parent=55 // pred_fallthru
          _
        // Predicated region
        $region69: #{sasrec_forward.1} parent=55 // pred_check
          %p2326 = pneg %p304
        $region70: #{sasrec_forward.1} parent=55 // pred_check_branch
          %2328 = sbr.rel (%p2326) target = $region72
        $region71: #{sasrec_forward.1} parent=55 // pred_region
          %s2330 = ssub.s32 32, 32
          %2331 = vsyncadd [#allocation7], %s2330
          %s2332 = smul.addr %s28, 32
          %s2333 = scalar_lea.hbm %s10, %s2332
          %s2335 = sshll.u32 [#allocation6], 4
          %s2336 = int_to_ptr.vmem [resolvable:$true] %s2335
          %2338 = dma.vmem_to_hbm [thread:$0]  %s2336, 32, %s2333, [#allocation7]
        $region72: #{sasrec_forward.1} parent=55 // pred_fallthru
          _
        // Predicated region
        $region73: #{sasrec_forward.1} parent=55 // pred_check
          %p2339 = pneg %p278
        $region74: #{sasrec_forward.1} parent=55 // pred_check_branch
          %2341 = sbr.rel (%p2339) target = $region76
        $region75: #{sasrec_forward.1} parent=55 // pred_region
          %2342 = dma.done [#allocation5], 32
        $region76: #{sasrec_forward.1} parent=55 // pred_fallthru
          _
        // Predicated region
        $region77: #{sasrec_forward.1} parent=55 // pred_check
          %p2343 = pneg %p304
        $region78: #{sasrec_forward.1} parent=55 // pred_check_branch
          %2345 = sbr.rel (%p2343) target = $region80
        $region79: #{sasrec_forward.1} parent=55 // pred_region
          %2346 = dma.done [#allocation7], 32
        $region80: #{sasrec_forward.1} parent=55 // pred_fallthru
          _
      $region56: #{sasrec_forward.1} parent=5 // pred_fallthru
        _
      %p2347 = scmp.le.s32.totalorder 2, %s19
      // Predicated region
      $region81: #{sasrec_forward.1} parent=5 // pred_check
        %p2348 = pneg %p2347
      $region82: #{sasrec_forward.1} parent=5 // pred_check_branch
        %2350 = sbr.rel (%p2348) target = $region84
      $region83: #{sasrec_forward.1} parent=5 // pred_region
        %s2351 = ssub.s32 %s19, 2
      $region84: #{sasrec_forward.1} parent=5 // pred_fallthru
        _
    $region6: #{sasrec_forward.1} parent=1 // loop_footer
      %s23 = sadd.s32 1, %s19
    $region7: #{sasrec_forward.1} parent=1 // loop_footer_branch
      %18 = sbr.rel target = $region3
    $region8: #{sasrec_forward.1} parent=1 // loop_exit
      _
    %2352 = vsyncpa [#allocation5], 1
    %s2353 = scalar_lea.sflag [#allocation5], 1
    %2354 = vsyncpa %s2353, 1
    %2355 = vsyncpa [#allocation7], 1

</llo_original>
